<compile_context>
chip_gen: v5e
topology: v5e:2x2
jax: 0.10.0
libtpu: 0.0.40
codegen_flags: <defaults>
</compile_context>

<pallas_src>
import functools
import math

import jax
import jax.numpy as jnp
from jax import lax
from jax.experimental import pallas as pl
from jax.experimental.pallas import tpu as pltpu

_CompilerParams = getattr(pltpu, "CompilerParams", None) or getattr(
    pltpu, "TPUCompilerParams")


def _make_bigru_kernel(T_pad, Tc, H, fused):
    """Recurrent kernel body; closed over static padded length / chunk size."""
    nc = T_pad // Tc

    def kernel(lens_ref, gx_ref, wh_ref, bhn_ref, out_ref, fin_ref, h_sc):
        d = pl.program_id(0)          # 0 = forward, 1 = backward
        c = pl.program_id(1)          # time chunk (processing order)

        @pl.when(c == 0)
        def _():
            h_sc[...] = jnp.zeros_like(h_sc)

        lens = lens_ref[...]          # [Bp, 1] int32
        b_hn = bhn_ref[0]             # [1, H]  f32 (only bias left in the loop)
        if fused:
            wh = wh_ref[0]            # [H, 3H] bf16, gates r|z|n on lanes
        else:
            wh_r, wh_z, wh_n = wh_ref[0, 0], wh_ref[0, 1], wh_ref[0, 2]

        sign = 1 - 2 * d              # +1 fwd, -1 bwd
        ti0 = d * (Tc - 1)            # backward walks the block back-to-front
        t0 = d * (T_pad - 1)          # original time of processing step 0

        def step(i, h):
            ti = ti0 + sign * i                   # row inside the gx/out block
            orig_t = t0 + sign * (c * Tc + i)     # original time index
            hb = h.astype(jnp.bfloat16)

            if fused:
                gh = jnp.dot(hb, wh, preferred_element_type=jnp.float32)
                gh_r, gh_z, gh_n = gh[:, :H], gh[:, H:2 * H], gh[:, 2 * H:]
                gxi = gx_ref[0, ti]               # [Bp, 3H] bf16
                gx_r, gx_z, gx_n = gxi[:, :H], gxi[:, H:2 * H], gxi[:, 2 * H:]
            else:
                gh_r = jnp.dot(hb, wh_r, preferred_element_type=jnp.float32)
                gh_z = jnp.dot(hb, wh_z, preferred_element_type=jnp.float32)
                gh_n = jnp.dot(hb, wh_n, preferred_element_type=jnp.float32)
                gx_r = gx_ref[0, 0, ti]
                gx_z = gx_ref[0, 1, ti]
                gx_n = gx_ref[0, 2, ti]

            # PyTorch GRU gate order r, z, n.  b_ih_* and b_hh_r/b_hh_z are
            # already folded into gx_*; only b_hn must stay inside r * (.).
            r = jax.nn.sigmoid(gx_r + gh_r)
            z = jax.nn.sigmoid(gx_z + gh_z)
            n = jnp.tanh(gx_n + r * (gh_n + b_hn))
            h_new = (1.0 - z) * n + z * h

            # One compare + one broadcast, reused by both selects.
            valid = jnp.broadcast_to(orig_t < lens, h.shape)     # [Bp, H]
            h = jnp.where(valid, h_new, h)
            out_ref[0, ti] = jnp.where(valid, h_new, 0.0).astype(out_ref.dtype)
            return h

        h_sc[...] = lax.fori_loop(0, Tc, step, h_sc[...], unroll=True)

        @pl.when(c == nc - 1)
        def _():
            fin_ref[0] = h_sc[...].astype(fin_ref.dtype)

    return kernel


def _pick_time_chunk(T, B_pad, H, requested, vmem_budget_bytes):
    """Largest Tc <= requested whose double-buffered gx/out blocks fit VMEM."""
    requested = max(1, min(int(requested), T))
    per_step = 2 * (B_pad * 3 * H * 2 + B_pad * H * 4)   # 2x (gx bf16 + out f32)
    fixed = 2 * (3 * H * H * 2 + H * 4 + B_pad * 4) + B_pad * H * 4
    budget = int(vmem_budget_bytes * 0.75)
    tc_cap = max(1, (budget - fixed) // per_step)
    return int(max(1, min(requested, tc_cap)))


def _run_bigru(len_col, gx, wh, bhn, *, T_pad, Tc, B_pad, H, fused,
               weight_buffers, vmem_limit_bytes):
    nc = T_pad // Tc
    kernel = _make_bigru_kernel(T_pad, Tc, H, fused)

    def tblock(d, c):
        # Original-time chunk index: forward walks 0..nc-1, backward nc-1..0.
        return d * (nc - 1) + (1 - 2 * d) * c

    def const_spec(shape, index_map):
        # Grid-invariant along the time axis -> single buffer when supported.
        if weight_buffers is None:
            return pl.BlockSpec(shape, index_map)
        return pl.BlockSpec(shape, index_map,
                            pipeline_mode=pl.Buffered(weight_buffers))

    if fused:
        gx_spec = pl.BlockSpec((1, Tc, B_pad, 3 * H),
                               lambda d, c: (d, tblock(d, c), 0, 0))
        wh_spec = const_spec((1, H, 3 * H), lambda d, c: (d, 0, 0))
    else:
        gx_spec = pl.BlockSpec((1, 3, Tc, B_pad, H),
                               lambda d, c: (d, 0, tblock(d, c), 0, 0))
        wh_spec = const_spec((1, 3, H, H), lambda d, c: (d, 0, 0, 0))

    return pl.pallas_call(
        kernel,
        grid_spec=pltpu.PrefetchScalarGridSpec(
            num_scalar_prefetch=0,
            grid=(2, nc),
            in_specs=[
                const_spec((B_pad, 1), lambda d, c: (0, 0)),     # lengths
                gx_spec,                                         # gate inputs
                wh_spec,                                         # W_hh
                const_spec((1, 1, H), lambda d, c: (d, 0, 0)),   # b_hn
            ],
            out_specs=(
                pl.BlockSpec((1, Tc, B_pad, H),
                             lambda d, c: (d, tblock(d, c), 0, 0)),
                pl.BlockSpec((1, B_pad, H), lambda d, c: (d, 0, 0)),
            ),
            scratch_shapes=[pltpu.VMEM((B_pad, H), jnp.float32)],
        ),
        out_shape=(
            jax.ShapeDtypeStruct((2, T_pad, B_pad, H), jnp.float32),
            jax.ShapeDtypeStruct((2, B_pad, H), jnp.float32),
        ),
        compiler_params=_CompilerParams(
            dimension_semantics=("parallel", "arbitrary"),
            vmem_limit_bytes=vmem_limit_bytes),
    )(len_col, gx, wh, bhn)


def encoder_forward(x, mask, lengths, params, *, time_chunk=16,
                    vmem_limit_bytes=48 * 1024 * 1024):
    """Equivalent of Encoder.forward (num_layers=1, bidirectional GRU).

    x:       [B, T, D] float32 (batch-first, like the PyTorch module)
    mask:    [B, T]    (unused by the reference forward; kept for parity)
    lengths: [B]       int32, sorted descending, max(lengths) == T
    returns: (output [B, T, 2H], final [1, B, 2H])
    """
    del mask
    B, T, D = x.shape
    H = params["w_hh_f"].shape[1]
    # Fuse the 3 recurrent gate matmuls only when r/z/n slices stay
    # 128-lane aligned (production H); otherwise use whole per-gate tiles.
    fused = (H % 128 == 0)

    # ---- pad batch to a multiple of 8 sublanes (padded rows: length 0) -----
    B_pad = ((B + 7) // 8) * 8
    x_p = jnp.zeros((B_pad, T, D), jnp.float32).at[:B].set(x.astype(jnp.float32))
    lens_p = jnp.zeros((B_pad,), jnp.int32).at[:B].set(lengths.astype(jnp.int32))
    len_col = lens_p.reshape(B_pad, 1)

    # ---- hoisted input projection ------------------------------------------
    # Transpose the SMALL x once to time-major so gx = x @ W_ih^T lands in
    # kernel layout [T, Bp, 3H] straight out of the matmul (no gx transpose,
    # no time reversal).  b_hh_r / b_hh_z are folded in here.
    x_t = jnp.transpose(x_p, (1, 0, 2)).astype(jnp.bfloat16)      # [T, Bp, D]
    x_flat = x_t.reshape(T * B_pad, D)

    def input_proj(w_ih, b_ih, b_hh):
        bias = (b_ih.astype(jnp.float32)
                + jnp.concatenate([b_hh[:2 * H].astype(jnp.float32),
                                   jnp.zeros((H,), jnp.float32)]))
        g = jnp.dot(x_flat, jnp.transpose(w_ih).astype(jnp.bfloat16),
                    preferred_element_type=jnp.float32)           # [T*Bp, 3H]
        g = g.reshape(T, B_pad, 3 * H) + bias
        return g.astype(jnp.bfloat16)          # bf16 gx: halve HBM/VMEM bytes

    gx_f = input_proj(params["w_ih_f"], params["b_ih_f"], params["b_hh_f"])
    gx_b = input_proj(params["w_ih_b"], params["b_ih_b"], params["b_hh_b"])
    gx = jnp.stack([gx_f, gx_b], axis=0)                          # [2,T,Bp,3H]
    if not fused:
        # Per-gate layout [2, 3, T, Bp, H]: whole tiles, no lane slicing.
        gx = jnp.moveaxis(gx.reshape(2, T, B_pad, 3, H), 3, 1)

    # ---- time chunking, budgeted against VMEM ------------------------------
    Tc = _pick_time_chunk(T, B_pad, H, time_chunk,
                          vmem_limit_bytes or (32 * 1024 * 1024))
    T_pad = ((T + Tc - 1) // Tc) * Tc
    if T_pad != T:
        pad = [(0, 0)] * gx.ndim
        pad[1 if fused else 2] = (0, T_pad - T)
        gx = jnp.pad(gx, pad)

    # ---- recurrent weights: pre-transposed for h @ W, bf16 for the MXU -----
    w_hh = jnp.stack([params["w_hh_f"], params["w_hh_b"]])        # [2, 3H, H]
    if fused:
        wh = jnp.transpose(w_hh, (0, 2, 1)).astype(jnp.bfloat16)  # [2, H, 3H]
    else:
        wh = jnp.transpose(w_hh.reshape(2, 3, H, H),
                           (0, 1, 3, 2)).astype(jnp.bfloat16)     # [2,3,H,H]
    bhn = jnp.stack([params["b_hh_f"][2 * H:], params["b_hh_b"][2 * H:]])
    bhn = bhn.reshape(2, 1, H).astype(jnp.float32)

    run = functools.partial(_run_bigru, len_col, gx, wh, bhn, T_pad=T_pad,
                            Tc=Tc, B_pad=B_pad, H=H, fused=fused,
                            vmem_limit_bytes=vmem_limit_bytes)
    try:
        out, fin = run(weight_buffers=1)
    except Exception:
        # pl.Buffered(1) not supported on this JAX build -> default buffering
        # (grid-invariant blocks are only re-DMA'd when their index changes).
        out, fin = run(weight_buffers=None)

    # Outputs are already in original time order for both directions.
    out_f = jnp.transpose(out[0, :T, :B], (1, 0, 2))              # [B, T, H]
    out_b = jnp.transpose(out[1, :T, :B], (1, 0, 2))              # [B, T, H]
    output = jnp.concatenate([out_f, out_b], axis=-1)             # [B, T, 2H]
    final = jnp.concatenate([fin[0, :B], fin[1, :B]], axis=-1)[None]
    return output, final


def encoder_reference(x, lengths, params):
    """Pure-JAX f32 reference with identical packed-GRU semantics."""
    B, T, D = x.shape
    H = params["w_hh_f"].shape[1]

    def run(w_ih, w_hh, b_ih, b_hh, reverse):
        h = jnp.zeros((B, H), jnp.float32)
        outs = [None] * T
        order = range(T - 1, -1, -1) if reverse else range(T)
        for t in order:
            xt = x[:, t, :]
            gx = xt @ w_ih.T + b_ih
            gh = h @ w_hh.T + b_hh
            r = jax.nn.sigmoid(gx[:, :H] + gh[:, :H])
            z = jax.nn.sigmoid(gx[:, H:2 * H] + gh[:, H:2 * H])
            n = jnp.tanh(gx[:, 2 * H:] + r * gh[:, 2 * H:])
            h_new = (1.0 - z) * n + z * h
            valid = (t < lengths)[:, None]
            h = jnp.where(valid, h_new, h)
            outs[t] = jnp.where(valid, h, 0.0)
        return jnp.stack(outs, axis=1), h

    of, hf = run(params["w_ih_f"], params["w_hh_f"],
                 params["b_ih_f"], params["b_hh_f"], reverse=False)
    ob, hb = run(params["w_ih_b"], params["w_hh_b"],
                 params["b_ih_b"], params["b_hh_b"], reverse=True)
    return (jnp.concatenate([of, ob], -1),
            jnp.concatenate([hf, hb], -1)[None])


if __name__ == "__main__":
    def make_params(key, D, H):
        bound = 1.0 / math.sqrt(H)   # PyTorch GRU init U(-1/sqrt(H), 1/sqrt(H))
        ks = jax.random.split(key, 8)

        def u(k, shape):
            return jax.random.uniform(k, shape, jnp.float32, -bound, bound)

        return {
            "w_ih_f": u(ks[0], (3 * H, D)), "w_hh_f": u(ks[1], (3 * H, H)),
            "b_ih_f": u(ks[2], (3 * H,)),   "b_hh_f": u(ks[3], (3 * H,)),
            "w_ih_b": u(ks[4], (3 * H, D)), "w_hh_b": u(ks[5], (3 * H, H)),
            "b_ih_b": u(ks[6], (3 * H,)),   "b_hh_b": u(ks[7], (3 * H,)),
        }

    key = jax.random.PRNGKey(0)

    # ---- test 1: per-gate path (H=32), multi-chunk time with padding -------
    k1, k2, key = jax.random.split(key, 3)
    B, T, D, H = 2, 10, 16, 32
    params = make_params(k1, D, H)
    x = jax.random.normal(k2, (B, T, D), jnp.float32)
    lengths = jnp.array([T, 5], jnp.int32)               # sorted descending
    mask = jnp.arange(T)[None, :] < lengths[:, None]
    output, final = encoder_forward(x, mask, lengths, params, time_chunk=4)
    jax.block_until_ready((output, final))
    ref_out, ref_fin = encoder_reference(x, lengths, params)
    assert output.shape == (B, T, 2 * H) and final.shape == (1, B, 2 * H)
    assert jnp.allclose(output, ref_out, atol=3e-2, rtol=3e-2)
    assert jnp.allclose(final, ref_fin, atol=3e-2, rtol=3e-2)

    # ---- test 2: fused-gate path (H=128, single [Bp,H]x[H,3H] dot) ----------
    k3, k4, key = jax.random.split(key, 3)
    B, T, D, H = 3, 8, 16, 128
    params = make_params(k3, D, H)
    x = jax.random.normal(k4, (B, T, D), jnp.float32)
    lengths = jnp.array([T, 6, 3], jnp.int32)
    mask = jnp.arange(T)[None, :] < lengths[:, None]
    output, final = encoder_forward(x, mask, lengths, params, time_chunk=4)
    jax.block_until_ready((output, final))
    ref_out, ref_fin = encoder_reference(x, lengths, params)
    assert output.shape == (B, T, 2 * H) and final.shape == (1, B, 2 * H)
    assert jnp.allclose(output, ref_out, atol=3e-2, rtol=3e-2)
    assert jnp.allclose(final, ref_fin, atol=3e-2, rtol=3e-2)

    print("KERNEL_OK")
</pallas_src>

<mosaic_0001>
module attributes {stable_mosaic.version = 11 : i64} {
  func.func @kernel(%arg0: i32, %arg1: i32, %arg2: memref<8x1xi32, #tpu.memory_space<vmem>>, %arg3: memref<1x3x4x8x32xbf16, #tpu.memory_space<vmem>>, %arg4: memref<1x3x32x32xbf16, #tpu.memory_space<vmem>>, %arg5: memref<1x1x32xf32, #tpu.memory_space<vmem>>, %arg6: memref<1x4x8x32xf32, #tpu.memory_space<vmem>>, %arg7: memref<1x8x32xf32, #tpu.memory_space<vmem>>, %arg8: memref<8x32xf32, #tpu.memory_space<vmem>>) attributes {dimension_semantics = [#tpu.dimension_semantics<parallel>, #tpu.dimension_semantics<arbitrary>], iteration_bounds = array<i64: 2, 3>, scalar_prefetch = 0 : i64, scratch_operands = 1 : i64, tpu.core_type = #tpu.core_type<tc>, window_params = [{pipeline_mode = #tpu.pipeline_mode<synchronous>, transform_indices = @transform_0, window_bounds = array<i64: 8, 1>}, {transform_indices = @transform_1, window_bounds = array<i64: 1, 3, 4, 8, 32>}, {pipeline_mode = #tpu.pipeline_mode<synchronous>, transform_indices = @transform_2, window_bounds = array<i64: 1, 3, 32, 32>}, {pipeline_mode = #tpu.pipeline_mode<synchronous>, transform_indices = @transform_3, window_bounds = array<i64: 1, 1, 32>}, {transform_indices = @transform_4, window_bounds = array<i64: 1, 4, 8, 32>}, {transform_indices = @transform_5, window_bounds = array<i64: 1, 8, 32>}]} {
    %c0_i32 = arith.constant 0 : i32
    %0 = arith.cmpi eq, %arg1, %c0_i32 : i32
    %1 = arith.extui %0 : i1 to i32
    %c0_i32_0 = arith.constant 0 : i32
    %2 = arith.cmpi ne, %1, %c0_i32_0 : i32
    scf.if %2 {
      %cst_116 = arith.constant 0.000000e+00 : f32
      %241 = vector.broadcast %cst_116 : f32 to vector<8x32xf32>
      %c0_117 = arith.constant 0 : index
      %c0_118 = arith.constant 0 : index
      %242 = vector.load %arg8[%c0_117, %c0_118] : memref<8x32xf32, #tpu.memory_space<vmem>>, vector<8x32xf32>
      tpu.vector_store %arg8[%c0_117, %c0_118], %241 {strides = array<i32>} : memref<8x32xf32, #tpu.memory_space<vmem>>, vector<8x32xf32>,
    } else {
    }
    %c0 = arith.constant 0 : index
    %c0_1 = arith.constant 0 : index
    %3 = vector.load %arg2[%c0, %c0_1] : memref<8x1xi32, #tpu.memory_space<vmem>>, vector<8x1xi32>
    %c0_2 = arith.constant 0 : index
    %c0_3 = arith.constant 0 : index
    %c0_4 = arith.constant 0 : index
    %4 = vector.load %arg5[%c0_2, %c0_3, %c0_4] : memref<1x1x32xf32, #tpu.memory_space<vmem>>, vector<1x1x32xf32>
    %5 = vector.shape_cast %4 : vector<1x1x32xf32> to vector<1x32xf32>
    %c0_5 = arith.constant 0 : index
    %c0_6 = arith.constant 0 : index
    %c0_7 = arith.constant 0 : index
    %c0_8 = arith.constant 0 : index
    %6 = vector.load %arg4[%c0_5, %c0_6, %c0_7, %c0_8] : memref<1x3x32x32xbf16, #tpu.memory_space<vmem>>, vector<1x1x32x32xbf16>
    %7 = vector.shape_cast %6 : vector<1x1x32x32xbf16> to vector<32x32xbf16>
    %c0_9 = arith.constant 0 : index
    %c1 = arith.constant 1 : index
    %c0_10 = arith.constant 0 : index
    %c0_11 = arith.constant 0 : index
    %8 = vector.load %arg4[%c0_9, %c1, %c0_10, %c0_11] : memref<1x3x32x32xbf16, #tpu.memory_space<vmem>>, vector<1x1x32x32xbf16>
    %9 = vector.shape_cast %8 : vector<1x1x32x32xbf16> to vector<32x32xbf16>
    %c0_12 = arith.constant 0 : index
    %c2 = arith.constant 2 : index
    %c0_13 = arith.constant 0 : index
    %c0_14 = arith.constant 0 : index
    %10 = vector.load %arg4[%c0_12, %c2, %c0_13, %c0_14] : memref<1x3x32x32xbf16, #tpu.memory_space<vmem>>, vector<1x1x32x32xbf16>
    %11 = vector.shape_cast %10 : vector<1x1x32x32xbf16> to vector<32x32xbf16>
    %c2_i32 = arith.constant 2 : i32
    %12 = arith.muli %c2_i32, %arg0 : i32
    %c1_i32 = arith.constant 1 : i32
    %13 = arith.subi %c1_i32, %12 : i32
    %c3_i32 = arith.constant 3 : i32
    %14 = arith.muli %arg0, %c3_i32 : i32
    %c11_i32 = arith.constant 11 : i32
    %15 = arith.muli %arg0, %c11_i32 : i32
    %c0_15 = arith.constant 0 : index
    %c0_16 = arith.constant 0 : index
    %16 = vector.load %arg8[%c0_15, %c0_16] : memref<8x32xf32, #tpu.memory_space<vmem>>, vector<8x32xf32>
    %c0_i32_17 = arith.constant 0 : i32
    %17 = arith.muli %13, %c0_i32_17 : i32
    %18 = arith.addi %14, %17 : i32
    %c4_i32 = arith.constant 4 : i32
    %19 = arith.muli %arg1, %c4_i32 : i32
    %20 = arith.addi %19, %c0_i32_17 : i32
    %21 = arith.muli %13, %20 : i32
    %22 = arith.addi %15, %21 : i32
    %23 = arith.truncf %16 : vector<8x32xf32> to vector<8x32xbf16>
    %cst = arith.constant dense<0.000000e+00> : vector<8x32xf32>
    %24 = tpu.matmul %23, %7, %cst {dimension_numbers = #tpu.dot_dimension_numbers<[1], [0], [0], [1], [0, 0, 1, 1], [], []>} : vector<8x32xbf16>, vector<32x32xbf16>, vector<8x32xf32> -> vector<8x32xf32>
    %cst_18 = arith.constant dense<0.000000e+00> : vector<8x32xf32>
    %25 = tpu.matmul %23, %9, %cst_18 {dimension_numbers = #tpu.dot_dimension_numbers<[1], [0], [0], [1], [0, 0, 1, 1], [], []>} : vector<8x32xbf16>, vector<32x32xbf16>, vector<8x32xf32> -> vector<8x32xf32>
    %cst_19 = arith.constant dense<0.000000e+00> : vector<8x32xf32>
    %26 = tpu.matmul %23, %11, %cst_19 {dimension_numbers = #tpu.dot_dimension_numbers<[1], [0], [0], [1], [0, 0, 1, 1], [], []>} : vector<8x32xbf16>, vector<32x32xbf16>, vector<8x32xf32> -> vector<8x32xf32>
    %c0_20 = arith.constant 0 : index
    %c0_21 = arith.constant 0 : index
    %27 = arith.index_cast %18 : i32 to index
    %c0_22 = arith.constant 0 : index
    %c0_23 = arith.constant 0 : index
    %28 = vector.load %arg3[%c0_20, %c0_21, %27, %c0_22, %c0_23] : memref<1x3x4x8x32xbf16, #tpu.memory_space<vmem>>, vector<1x1x1x8x32xbf16>
    %29 = vector.shape_cast %28 : vector<1x1x1x8x32xbf16> to vector<8x32xbf16>
    %c0_24 = arith.constant 0 : index
    %c1_25 = arith.constant 1 : index
    %30 = arith.index_cast %18 : i32 to index
    %c0_26 = arith.constant 0 : index
    %c0_27 = arith.constant 0 : index
    %31 = vector.load %arg3[%c0_24, %c1_25, %30, %c0_26, %c0_27] : memref<1x3x4x8x32xbf16, #tpu.memory_space<vmem>>, vector<1x1x1x8x32xbf16>
    %32 = vector.shape_cast %31 : vector<1x1x1x8x32xbf16> to vector<8x32xbf16>
    %c0_28 = arith.constant 0 : index
    %c2_29 = arith.constant 2 : index
    %33 = arith.index_cast %18 : i32 to index
    %c0_30 = arith.constant 0 : index
    %c0_31 = arith.constant 0 : index
    %34 = vector.load %arg3[%c0_28, %c2_29, %33, %c0_30, %c0_31] : memref<1x3x4x8x32xbf16, #tpu.memory_space<vmem>>, vector<1x1x1x8x32xbf16>
    %35 = vector.shape_cast %34 : vector<1x1x1x8x32xbf16> to vector<8x32xbf16>
    %36 = arith.extf %29 : vector<8x32xbf16> to vector<8x32xf32>
    %37 = arith.addf %36, %24 : vector<8x32xf32>
    %38 = arith.negf %37 : vector<8x32xf32>
    %39 = math.exp %38 : vector<8x32xf32>
    %cst_32 = arith.constant 1.000000e+00 : f32
    %40 = vector.broadcast %cst_32 : f32 to vector<8x32xf32>
    %41 = arith.addf %40, %39 : vector<8x32xf32>
    %42 = arith.divf %40, %41 : vector<8x32xf32>
    %43 = arith.extf %32 : vector<8x32xbf16> to vector<8x32xf32>
    %44 = arith.addf %43, %25 : vector<8x32xf32>
    %45 = arith.negf %44 : vector<8x32xf32>
    %46 = math.exp %45 : vector<8x32xf32>
    %cst_33 = arith.constant 1.000000e+00 : f32
    %47 = vector.broadcast %cst_33 : f32 to vector<8x32xf32>
    %48 = arith.addf %47, %46 : vector<8x32xf32>
    %49 = arith.divf %47, %48 : vector<8x32xf32>
    %50 = vector.broadcast %5 : vector<1x32xf32> to vector<8x32xf32>
    %51 = arith.addf %26, %50 : vector<8x32xf32>
    %52 = arith.mulf %42, %51 : vector<8x32xf32>
    %53 = arith.extf %35 : vector<8x32xbf16> to vector<8x32xf32>
    %54 = arith.addf %53, %52 : vector<8x32xf32>
    %55 = math.tanh %54 : vector<8x32xf32>
    %cst_34 = arith.constant 1.000000e+00 : f32
    %56 = vector.broadcast %cst_34 : f32 to vector<8x32xf32>
    %57 = arith.subf %56, %49 : vector<8x32xf32>
    %58 = arith.mulf %57, %55 : vector<8x32xf32>
    %59 = arith.mulf %49, %16 : vector<8x32xf32>
    %60 = arith.addf %58, %59 : vector<8x32xf32>
    %61 = vector.broadcast %22 : i32 to vector<8x1xi32>
    %62 = arith.cmpi slt, %61, %3 : vector<8x1xi32>
    %63 = vector.shape_cast %62 : vector<8x1xi1> to vector<8x1xi1>
    %64 = vector.broadcast %63 : vector<8x1xi1> to vector<8x32xi1>
    %65 = arith.select %64, %60, %16 : vector<8x32xi1>, vector<8x32xf32>
    %cst_35 = arith.constant 0.000000e+00 : f32
    %66 = vector.broadcast %cst_35 : f32 to vector<8x32xf32>
    %67 = arith.select %64, %60, %66 : vector<8x32xi1>, vector<8x32xf32>
    %c0_36 = arith.constant 0 : index
    %68 = arith.index_cast %18 : i32 to index
    %c0_37 = arith.constant 0 : index
    %c0_38 = arith.constant 0 : index
    %69 = vector.load %arg6[%c0_36, %68, %c0_37, %c0_38] : memref<1x4x8x32xf32, #tpu.memory_space<vmem>>, vector<1x1x8x32xf32>
    %70 = vector.shape_cast %69 : vector<1x1x8x32xf32> to vector<8x32xf32>
    %71 = vector.shape_cast %67 : vector<8x32xf32> to vector<1x1x8x32xf32>
    tpu.vector_store %arg6[%c0_36, %68, %c0_37, %c0_38], %71 {strides = array<i32>} : memref<1x4x8x32xf32, #tpu.memory_space<vmem>>, vector<1x1x8x32xf32>,
    %c1_i32_39 = arith.constant 1 : i32
    %72 = arith.muli %13, %c1_i32_39 : i32
    %73 = arith.addi %14, %72 : i32
    %c4_i32_40 = arith.constant 4 : i32
    %74 = arith.muli %arg1, %c4_i32_40 : i32
    %75 = arith.addi %74, %c1_i32_39 : i32
    %76 = arith.muli %13, %75 : i32
    %77 = arith.addi %15, %76 : i32
    %78 = arith.truncf %65 : vector<8x32xf32> to vector<8x32xbf16>
    %cst_41 = arith.constant dense<0.000000e+00> : vector<8x32xf32>
    %79 = tpu.matmul %78, %7, %cst_41 {dimension_numbers = #tpu.dot_dimension_numbers<[1], [0], [0], [1], [0, 0, 1, 1], [], []>} : vector<8x32xbf16>, vector<32x32xbf16>, vector<8x32xf32> -> vector<8x32xf32>
    %cst_42 = arith.constant dense<0.000000e+00> : vector<8x32xf32>
    %80 = tpu.matmul %78, %9, %cst_42 {dimension_numbers = #tpu.dot_dimension_numbers<[1], [0], [0], [1], [0, 0, 1, 1], [], []>} : vector<8x32xbf16>, vector<32x32xbf16>, vector<8x32xf32> -> vector<8x32xf32>
    %cst_43 = arith.constant dense<0.000000e+00> : vector<8x32xf32>
    %81 = tpu.matmul %78, %11, %cst_43 {dimension_numbers = #tpu.dot_dimension_numbers<[1], [0], [0], [1], [0, 0, 1, 1], [], []>} : vector<8x32xbf16>, vector<32x32xbf16>, vector<8x32xf32> -> vector<8x32xf32>
    %c0_44 = arith.constant 0 : index
    %c0_45 = arith.constant 0 : index
    %82 = arith.index_cast %73 : i32 to index
    %c0_46 = arith.constant 0 : index
    %c0_47 = arith.constant 0 : index
    %83 = vector.load %arg3[%c0_44, %c0_45, %82, %c0_46, %c0_47] : memref<1x3x4x8x32xbf16, #tpu.memory_space<vmem>>, vector<1x1x1x8x32xbf16>
    %84 = vector.shape_cast %83 : vector<1x1x1x8x32xbf16> to vector<8x32xbf16>
    %c0_48 = arith.constant 0 : index
    %c1_49 = arith.constant 1 : index
    %85 = arith.index_cast %73 : i32 to index
    %c0_50 = arith.constant 0 : index
    %c0_51 = arith.constant 0 : index
    %86 = vector.load %arg3[%c0_48, %c1_49, %85, %c0_50, %c0_51] : memref<1x3x4x8x32xbf16, #tpu.memory_space<vmem>>, vector<1x1x1x8x32xbf16>
    %87 = vector.shape_cast %86 : vector<1x1x1x8x32xbf16> to vector<8x32xbf16>
    %c0_52 = arith.constant 0 : index
    %c2_53 = arith.constant 2 : index
    %88 = arith.index_cast %73 : i32 to index
    %c0_54 = arith.constant 0 : index
    %c0_55 = arith.constant 0 : index
    %89 = vector.load %arg3[%c0_52, %c2_53, %88, %c0_54, %c0_55] : memref<1x3x4x8x32xbf16, #tpu.memory_space<vmem>>, vector<1x1x1x8x32xbf16>
    %90 = vector.shape_cast %89 : vector<1x1x1x8x32xbf16> to vector<8x32xbf16>
    %91 = arith.extf %84 : vector<8x32xbf16> to vector<8x32xf32>
    %92 = arith.addf %91, %79 : vector<8x32xf32>
    %93 = arith.negf %92 : vector<8x32xf32>
    %94 = math.exp %93 : vector<8x32xf32>
    %cst_56 = arith.constant 1.000000e+00 : f32
    %95 = vector.broadcast %cst_56 : f32 to vector<8x32xf32>
    %96 = arith.addf %95, %94 : vector<8x32xf32>
    %97 = arith.divf %95, %96 : vector<8x32xf32>
    %98 = arith.extf %87 : vector<8x32xbf16> to vector<8x32xf32>
    %99 = arith.addf %98, %80 : vector<8x32xf32>
    %100 = arith.negf %99 : vector<8x32xf32>
    %101 = math.exp %100 : vector<8x32xf32>
    %cst_57 = arith.constant 1.000000e+00 : f32
    %102 = vector.broadcast %cst_57 : f32 to vector<8x32xf32>
    %103 = arith.addf %102, %101 : vector<8x32xf32>
    %104 = arith.divf %102, %103 : vector<8x32xf32>
    %105 = vector.broadcast %5 : vector<1x32xf32> to vector<8x32xf32>
    %106 = arith.addf %81, %105 : vector<8x32xf32>
    %107 = arith.mulf %97, %106 : vector<8x32xf32>
    %108 = arith.extf %90 : vector<8x32xbf16> to vector<8x32xf32>
    %109 = arith.addf %108, %107 : vector<8x32xf32>
    %110 = math.tanh %109 : vector<8x32xf32>
    %cst_58 = arith.constant 1.000000e+00 : f32
    %111 = vector.broadcast %cst_58 : f32 to vector<8x32xf32>
    %112 = arith.subf %111, %104 : vector<8x32xf32>
    %113 = arith.mulf %112, %110 : vector<8x32xf32>
    %114 = arith.mulf %104, %65 : vector<8x32xf32>
    %115 = arith.addf %113, %114 : vector<8x32xf32>
    %116 = vector.broadcast %77 : i32 to vector<8x1xi32>
    %117 = arith.cmpi slt, %116, %3 : vector<8x1xi32>
    %118 = vector.shape_cast %117 : vector<8x1xi1> to vector<8x1xi1>
    %119 = vector.broadcast %118 : vector<8x1xi1> to vector<8x32xi1>
    %120 = arith.select %119, %115, %65 : vector<8x32xi1>, vector<8x32xf32>
    %cst_59 = arith.constant 0.000000e+00 : f32
    %121 = vector.broadcast %cst_59 : f32 to vector<8x32xf32>
    %122 = arith.select %119, %115, %121 : vector<8x32xi1>, vector<8x32xf32>
    %c0_60 = arith.constant 0 : index
    %123 = arith.index_cast %73 : i32 to index
    %c0_61 = arith.constant 0 : index
    %c0_62 = arith.constant 0 : index
    %124 = vector.load %arg6[%c0_60, %123, %c0_61, %c0_62] : memref<1x4x8x32xf32, #tpu.memory_space<vmem>>, vector<1x1x8x32xf32>
    %125 = vector.shape_cast %124 : vector<1x1x8x32xf32> to vector<8x32xf32>
    %126 = vector.shape_cast %122 : vector<8x32xf32> to vector<1x1x8x32xf32>
    tpu.vector_store %arg6[%c0_60, %123, %c0_61, %c0_62], %126 {strides = array<i32>} : memref<1x4x8x32xf32, #tpu.memory_space<vmem>>, vector<1x1x8x32xf32>,
    %c2_i32_63 = arith.constant 2 : i32
    %127 = arith.muli %13, %c2_i32_63 : i32
    %128 = arith.addi %14, %127 : i32
    %c4_i32_64 = arith.constant 4 : i32
    %129 = arith.muli %arg1, %c4_i32_64 : i32
    %130 = arith.addi %129, %c2_i32_63 : i32
    %131 = arith.muli %13, %130 : i32
    %132 = arith.addi %15, %131 : i32
    %133 = arith.truncf %120 : vector<8x32xf32> to vector<8x32xbf16>
    %cst_65 = arith.constant dense<0.000000e+00> : vector<8x32xf32>
    %134 = tpu.matmul %133, %7, %cst_65 {dimension_numbers = #tpu.dot_dimension_numbers<[1], [0], [0], [1], [0, 0, 1, 1], [], []>} : vector<8x32xbf16>, vector<32x32xbf16>, vector<8x32xf32> -> vector<8x32xf32>
    %cst_66 = arith.constant dense<0.000000e+00> : vector<8x32xf32>
    %135 = tpu.matmul %133, %9, %cst_66 {dimension_numbers = #tpu.dot_dimension_numbers<[1], [0], [0], [1], [0, 0, 1, 1], [], []>} : vector<8x32xbf16>, vector<32x32xbf16>, vector<8x32xf32> -> vector<8x32xf32>
    %cst_67 = arith.constant dense<0.000000e+00> : vector<8x32xf32>
    %136 = tpu.matmul %133, %11, %cst_67 {dimension_numbers = #tpu.dot_dimension_numbers<[1], [0], [0], [1], [0, 0, 1, 1], [], []>} : vector<8x32xbf16>, vector<32x32xbf16>, vector<8x32xf32> -> vector<8x32xf32>
    %c0_68 = arith.constant 0 : index
    %c0_69 = arith.constant 0 : index
    %137 = arith.index_cast %128 : i32 to index
    %c0_70 = arith.constant 0 : index
    %c0_71 = arith.constant 0 : index
    %138 = vector.load %arg3[%c0_68, %c0_69, %137, %c0_70, %c0_71] : memref<1x3x4x8x32xbf16, #tpu.memory_space<vmem>>, vector<1x1x1x8x32xbf16>
    %139 = vector.shape_cast %138 : vector<1x1x1x8x32xbf16> to vector<8x32xbf16>
    %c0_72 = arith.constant 0 : index
    %c1_73 = arith.constant 1 : index
    %140 = arith.index_cast %128 : i32 to index
    %c0_74 = arith.constant 0 : index
    %c0_75 = arith.constant 0 : index
    %141 = vector.load %arg3[%c0_72, %c1_73, %140, %c0_74, %c0_75] : memref<1x3x4x8x32xbf16, #tpu.memory_space<vmem>>, vector<1x1x1x8x32xbf16>
    %142 = vector.shape_cast %141 : vector<1x1x1x8x32xbf16> to vector<8x32xbf16>
    %c0_76 = arith.constant 0 : index
    %c2_77 = arith.constant 2 : index
    %143 = arith.index_cast %128 : i32 to index
    %c0_78 = arith.constant 0 : index
    %c0_79 = arith.constant 0 : index
    %144 = vector.load %arg3[%c0_76, %c2_77, %143, %c0_78, %c0_79] : memref<1x3x4x8x32xbf16, #tpu.memory_space<vmem>>, vector<1x1x1x8x32xbf16>
    %145 = vector.shape_cast %144 : vector<1x1x1x8x32xbf16> to vector<8x32xbf16>
    %146 = arith.extf %139 : vector<8x32xbf16> to vector<8x32xf32>
    %147 = arith.addf %146, %134 : vector<8x32xf32>
    %148 = arith.negf %147 : vector<8x32xf32>
    %149 = math.exp %148 : vector<8x32xf32>
    %cst_80 = arith.constant 1.000000e+00 : f32
    %150 = vector.broadcast %cst_80 : f32 to vector<8x32xf32>
    %151 = arith.addf %150, %149 : vector<8x32xf32>
    %152 = arith.divf %150, %151 : vector<8x32xf32>
    %153 = arith.extf %142 : vector<8x32xbf16> to vector<8x32xf32>
    %154 = arith.addf %153, %135 : vector<8x32xf32>
    %155 = arith.negf %154 : vector<8x32xf32>
    %156 = math.exp %155 : vector<8x32xf32>
    %cst_81 = arith.constant 1.000000e+00 : f32
    %157 = vector.broadcast %cst_81 : f32 to vector<8x32xf32>
    %158 = arith.addf %157, %156 : vector<8x32xf32>
    %159 = arith.divf %157, %158 : vector<8x32xf32>
    %160 = vector.broadcast %5 : vector<1x32xf32> to vector<8x32xf32>
    %161 = arith.addf %136, %160 : vector<8x32xf32>
    %162 = arith.mulf %152, %161 : vector<8x32xf32>
    %163 = arith.extf %145 : vector<8x32xbf16> to vector<8x32xf32>
    %164 = arith.addf %163, %162 : vector<8x32xf32>
    %165 = math.tanh %164 : vector<8x32xf32>
    %cst_82 = arith.constant 1.000000e+00 : f32
    %166 = vector.broadcast %cst_82 : f32 to vector<8x32xf32>
    %167 = arith.subf %166, %159 : vector<8x32xf32>
    %168 = arith.mulf %167, %165 : vector<8x32xf32>
    %169 = arith.mulf %159, %120 : vector<8x32xf32>
    %170 = arith.addf %168, %169 : vector<8x32xf32>
    %171 = vector.broadcast %132 : i32 to vector<8x1xi32>
    %172 = arith.cmpi slt, %171, %3 : vector<8x1xi32>
    %173 = vector.shape_cast %172 : vector<8x1xi1> to vector<8x1xi1>
    %174 = vector.broadcast %173 : vector<8x1xi1> to vector<8x32xi1>
    %175 = arith.select %174, %170, %120 : vector<8x32xi1>, vector<8x32xf32>
    %cst_83 = arith.constant 0.000000e+00 : f32
    %176 = vector.broadcast %cst_83 : f32 to vector<8x32xf32>
    %177 = arith.select %174, %170, %176 : vector<8x32xi1>, vector<8x32xf32>
    %c0_84 = arith.constant 0 : index
    %178 = arith.index_cast %128 : i32 to index
    %c0_85 = arith.constant 0 : index
    %c0_86 = arith.constant 0 : index
    %179 = vector.load %arg6[%c0_84, %178, %c0_85, %c0_86] : memref<1x4x8x32xf32, #tpu.memory_space<vmem>>, vector<1x1x8x32xf32>
    %180 = vector.shape_cast %179 : vector<1x1x8x32xf32> to vector<8x32xf32>
    %181 = vector.shape_cast %177 : vector<8x32xf32> to vector<1x1x8x32xf32>
    tpu.vector_store %arg6[%c0_84, %178, %c0_85, %c0_86], %181 {strides = array<i32>} : memref<1x4x8x32xf32, #tpu.memory_space<vmem>>, vector<1x1x8x32xf32>,
    %c3_i32_87 = arith.constant 3 : i32
    %182 = arith.muli %13, %c3_i32_87 : i32
    %183 = arith.addi %14, %182 : i32
    %c4_i32_88 = arith.constant 4 : i32
    %184 = arith.muli %arg1, %c4_i32_88 : i32
    %185 = arith.addi %184, %c3_i32_87 : i32
    %186 = arith.muli %13, %185 : i32
    %187 = arith.addi %15, %186 : i32
    %188 = arith.truncf %175 : vector<8x32xf32> to vector<8x32xbf16>
    %cst_89 = arith.constant dense<0.000000e+00> : vector<8x32xf32>
    %189 = tpu.matmul %188, %7, %cst_89 {dimension_numbers = #tpu.dot_dimension_numbers<[1], [0], [0], [1], [0, 0, 1, 1], [], []>} : vector<8x32xbf16>, vector<32x32xbf16>, vector<8x32xf32> -> vector<8x32xf32>
    %cst_90 = arith.constant dense<0.000000e+00> : vector<8x32xf32>
    %190 = tpu.matmul %188, %9, %cst_90 {dimension_numbers = #tpu.dot_dimension_numbers<[1], [0], [0], [1], [0, 0, 1, 1], [], []>} : vector<8x32xbf16>, vector<32x32xbf16>, vector<8x32xf32> -> vector<8x32xf32>
    %cst_91 = arith.constant dense<0.000000e+00> : vector<8x32xf32>
    %191 = tpu.matmul %188, %11, %cst_91 {dimension_numbers = #tpu.dot_dimension_numbers<[1], [0], [0], [1], [0, 0, 1, 1], [], []>} : vector<8x32xbf16>, vector<32x32xbf16>, vector<8x32xf32> -> vector<8x32xf32>
    %c0_92 = arith.constant 0 : index
    %c0_93 = arith.constant 0 : index
    %192 = arith.index_cast %183 : i32 to index
    %c0_94 = arith.constant 0 : index
    %c0_95 = arith.constant 0 : index
    %193 = vector.load %arg3[%c0_92, %c0_93, %192, %c0_94, %c0_95] : memref<1x3x4x8x32xbf16, #tpu.memory_space<vmem>>, vector<1x1x1x8x32xbf16>
    %194 = vector.shape_cast %193 : vector<1x1x1x8x32xbf16> to vector<8x32xbf16>
    %c0_96 = arith.constant 0 : index
    %c1_97 = arith.constant 1 : index
    %195 = arith.index_cast %183 : i32 to index
    %c0_98 = arith.constant 0 : index
    %c0_99 = arith.constant 0 : index
    %196 = vector.load %arg3[%c0_96, %c1_97, %195, %c0_98, %c0_99] : memref<1x3x4x8x32xbf16, #tpu.memory_space<vmem>>, vector<1x1x1x8x32xbf16>
    %197 = vector.shape_cast %196 : vector<1x1x1x8x32xbf16> to vector<8x32xbf16>
    %c0_100 = arith.constant 0 : index
    %c2_101 = arith.constant 2 : index
    %198 = arith.index_cast %183 : i32 to index
    %c0_102 = arith.constant 0 : index
    %c0_103 = arith.constant 0 : index
    %199 = vector.load %arg3[%c0_100, %c2_101, %198, %c0_102, %c0_103] : memref<1x3x4x8x32xbf16, #tpu.memory_space<vmem>>, vector<1x1x1x8x32xbf16>
    %200 = vector.shape_cast %199 : vector<1x1x1x8x32xbf16> to vector<8x32xbf16>
    %201 = arith.extf %194 : vector<8x32xbf16> to vector<8x32xf32>
    %202 = arith.addf %201, %189 : vector<8x32xf32>
    %203 = arith.negf %202 : vector<8x32xf32>
    %204 = math.exp %203 : vector<8x32xf32>
    %cst_104 = arith.constant 1.000000e+00 : f32
    %205 = vector.broadcast %cst_104 : f32 to vector<8x32xf32>
    %206 = arith.addf %205, %204 : vector<8x32xf32>
    %207 = arith.divf %205, %206 : vector<8x32xf32>
    %208 = arith.extf %197 : vector<8x32xbf16> to vector<8x32xf32>
    %209 = arith.addf %208, %190 : vector<8x32xf32>
    %210 = arith.negf %209 : vector<8x32xf32>
    %211 = math.exp %210 : vector<8x32xf32>
    %cst_105 = arith.constant 1.000000e+00 : f32
    %212 = vector.broadcast %cst_105 : f32 to vector<8x32xf32>
    %213 = arith.addf %212, %211 : vector<8x32xf32>
    %214 = arith.divf %212, %213 : vector<8x32xf32>
    %215 = vector.broadcast %5 : vector<1x32xf32> to vector<8x32xf32>
    %216 = arith.addf %191, %215 : vector<8x32xf32>
    %217 = arith.mulf %207, %216 : vector<8x32xf32>
    %218 = arith.extf %200 : vector<8x32xbf16> to vector<8x32xf32>
    %219 = arith.addf %218, %217 : vector<8x32xf32>
    %220 = math.tanh %219 : vector<8x32xf32>
    %cst_106 = arith.constant 1.000000e+00 : f32
    %221 = vector.broadcast %cst_106 : f32 to vector<8x32xf32>
    %222 = arith.subf %221, %214 : vector<8x32xf32>
    %223 = arith.mulf %222, %220 : vector<8x32xf32>
    %224 = arith.mulf %214, %175 : vector<8x32xf32>
    %225 = arith.addf %223, %224 : vector<8x32xf32>
    %226 = vector.broadcast %187 : i32 to vector<8x1xi32>
    %227 = arith.cmpi slt, %226, %3 : vector<8x1xi32>
    %228 = vector.shape_cast %227 : vector<8x1xi1> to vector<8x1xi1>
    %229 = vector.broadcast %228 : vector<8x1xi1> to vector<8x32xi1>
    %230 = arith.select %229, %225, %175 : vector<8x32xi1>, vector<8x32xf32>
    %cst_107 = arith.constant 0.000000e+00 : f32
    %231 = vector.broadcast %cst_107 : f32 to vector<8x32xf32>
    %232 = arith.select %229, %225, %231 : vector<8x32xi1>, vector<8x32xf32>
    %c0_108 = arith.constant 0 : index
    %233 = arith.index_cast %183 : i32 to index
    %c0_109 = arith.constant 0 : index
    %c0_110 = arith.constant 0 : index
    %234 = vector.load %arg6[%c0_108, %233, %c0_109, %c0_110] : memref<1x4x8x32xf32, #tpu.memory_space<vmem>>, vector<1x1x8x32xf32>
    %235 = vector.shape_cast %234 : vector<1x1x8x32xf32> to vector<8x32xf32>
    %236 = vector.shape_cast %232 : vector<8x32xf32> to vector<1x1x8x32xf32>
    tpu.vector_store %arg6[%c0_108, %233, %c0_109, %c0_110], %236 {strides = array<i32>} : memref<1x4x8x32xf32, #tpu.memory_space<vmem>>, vector<1x1x8x32xf32>,
    %c4_i32_111 = arith.constant 4 : i32
    %c0_112 = arith.constant 0 : index
    %c0_113 = arith.constant 0 : index
    %237 = vector.load %arg8[%c0_112, %c0_113] : memref<8x32xf32, #tpu.memory_space<vmem>>, vector<8x32xf32>
    tpu.vector_store %arg8[%c0_112, %c0_113], %230 {strides = array<i32>} : memref<8x32xf32, #tpu.memory_space<vmem>>, vector<8x32xf32>,
    %c2_i32_114 = arith.constant 2 : i32
    %238 = arith.cmpi eq, %arg1, %c2_i32_114 : i32
    %239 = arith.extui %238 : i1 to i32
    %c0_i32_115 = arith.constant 0 : i32
    %240 = arith.cmpi ne, %239, %c0_i32_115 : i32
    scf.if %240 {
      %c0_116 = arith.constant 0 : index
      %c0_117 = arith.constant 0 : index
      %241 = vector.load %arg8[%c0_116, %c0_117] : memref<8x32xf32, #tpu.memory_space<vmem>>, vector<8x32xf32>
      %c0_118 = arith.constant 0 : index
      %c0_119 = arith.constant 0 : index
      %c0_120 = arith.constant 0 : index
      %242 = vector.load %arg7[%c0_118, %c0_119, %c0_120] : memref<1x8x32xf32, #tpu.memory_space<vmem>>, vector<1x8x32xf32>
      %243 = vector.shape_cast %242 : vector<1x8x32xf32> to vector<8x32xf32>
      %244 = vector.shape_cast %241 : vector<8x32xf32> to vector<1x8x32xf32>
      tpu.vector_store %arg7[%c0_118, %c0_119, %c0_120], %244 {strides = array<i32>} : memref<1x8x32xf32, #tpu.memory_space<vmem>>, vector<1x8x32xf32>,
    } else {
    }
    return
  }
  func.func @transform_0(%arg0: i32, %arg1: i32) -> (i32, i32) {
    %c0_i32 = arith.constant 0 : i32
    %c0_i32_0 = arith.constant 0 : i32
    %c0_i32_1 = arith.constant 0 : i32
    return %c0_i32, %c0_i32_0 : i32, i32
  }
  func.func @transform_1(%arg0: i32, %arg1: i32) -> (i32, i32, i32, i32, i32) {
    %c2_i32 = arith.constant 2 : i32
    %0 = arith.muli %arg0, %c2_i32 : i32
    %c2_i32_0 = arith.constant 2 : i32
    %1 = arith.muli %c2_i32_0, %arg0 : i32
    %c1_i32 = arith.constant 1 : i32
    %2 = arith.subi %c1_i32, %1 : i32
    %3 = arith.muli %2, %arg1 : i32
    %4 = arith.addi %0, %3 : i32
    %c0_i32 = arith.constant 0 : i32
    %c0_i32_1 = arith.constant 0 : i32
    %c0_i32_2 = arith.constant 0 : i32
    %c0_i32_3 = arith.constant 0 : i32
    return %arg0, %c0_i32, %4, %c0_i32_1, %c0_i32_2 : i32, i32, i32, i32, i32
  }
  func.func @transform_2(%arg0: i32, %arg1: i32) -> (i32, i32, i32, i32) {
    %c0_i32 = arith.constant 0 : i32
    %c0_i32_0 = arith.constant 0 : i32
    %c0_i32_1 = arith.constant 0 : i32
    %c0_i32_2 = arith.constant 0 : i32
    return %arg0, %c0_i32, %c0_i32_0, %c0_i32_1 : i32, i32, i32, i32
  }
  func.func @transform_3(%arg0: i32, %arg1: i32) -> (i32, i32, i32) {
    %c0_i32 = arith.constant 0 : i32
    %c0_i32_0 = arith.constant 0 : i32
    %c0_i32_1 = arith.constant 0 : i32
    return %arg0, %c0_i32, %c0_i32_0 : i32, i32, i32
  }
  func.func @transform_4(%arg0: i32, %arg1: i32) -> (i32, i32, i32, i32) {
    %c2_i32 = arith.constant 2 : i32
    %0 = arith.muli %arg0, %c2_i32 : i32
    %c2_i32_0 = arith.constant 2 : i32
    %1 = arith.muli %c2_i32_0, %arg0 : i32
    %c1_i32 = arith.constant 1 : i32
    %2 = arith.subi %c1_i32, %1 : i32
    %3 = arith.muli %2, %arg1 : i32
    %4 = arith.addi %0, %3 : i32
    %c0_i32 = arith.constant 0 : i32
    %c0_i32_1 = arith.constant 0 : i32
    %c0_i32_2 = arith.constant 0 : i32
    return %arg0, %4, %c0_i32, %c0_i32_1 : i32, i32, i32, i32
  }
  func.func @transform_5(%arg0: i32, %arg1: i32) -> (i32, i32, i32) {
    %c0_i32 = arith.constant 0 : i32
    %c0_i32_0 = arith.constant 0 : i32
    %c0_i32_1 = arith.constant 0 : i32
    return %arg0, %c0_i32, %c0_i32_0 : i32, i32, i32
  }
}

module attributes {stable_mosaic.version = 11 : i64} {
  func.func @kernel(%arg0: i32, %arg1: i32, %arg2: memref<8x1xi32, #tpu.memory_space<vmem>>, %arg3: memref<1x3x4x8x32xbf16, #tpu.memory_space<vmem>>, %arg4: memref<1x3x32x32xbf16, #tpu.memory_space<vmem>>, %arg5: memref<1x1x32xf32, #tpu.memory_space<vmem>>, %arg6: memref<1x4x8x32xf32, #tpu.memory_space<vmem>>, %arg7: memref<1x8x32xf32, #tpu.memory_space<vmem>>, %arg8: memref<8x32xf32, #tpu.memory_space<vmem>>) attributes {dimension_semantics = [#tpu.dimension_semantics<parallel>, #tpu.dimension_semantics<arbitrary>], iteration_bounds = array<i64: 2, 3>, scalar_prefetch = 0 : i64, scratch_operands = 1 : i64, tpu.core_type = #tpu.core_type<tc>, window_params = [{pipeline_mode = #tpu.pipeline_mode<synchronous>, transform_indices = @transform_0, window_bounds = array<i64: 8, 1>}, {transform_indices = @transform_1, window_bounds = array<i64: 1, 3, 4, 8, 32>}, {transform_indices = @transform_2, window_bounds = array<i64: 1, 3, 32, 32>}, {transform_indices = @transform_3, window_bounds = array<i64: 1, 1, 32>}, {transform_indices = @transform_4, window_bounds = array<i64: 1, 4, 8, 32>}, {transform_indices = @transform_5, window_bounds = array<i64: 1, 8, 32>}]} {
    %c0_i32 = arith.constant 0 : i32
    %0 = arith.cmpi eq, %arg1, %c0_i32 : i32
    %1 = arith.extui %0 : i1 to i32
    %c0_i32_0 = arith.constant 0 : i32
    %2 = arith.cmpi ne, %1, %c0_i32_0 : i32
    scf.if %2 {
      %cst_116 = arith.constant 0.000000e+00 : f32
      %241 = vector.broadcast %cst_116 : f32 to vector<8x32xf32>
      %c0_117 = arith.constant 0 : index
      %c0_118 = arith.constant 0 : index
      %242 = vector.load %arg8[%c0_117, %c0_118] : memref<8x32xf32, #tpu.memory_space<vmem>>, vector<8x32xf32>
      tpu.vector_store %arg8[%c0_117, %c0_118], %241 {strides = array<i32>} : memref<8x32xf32, #tpu.memory_space<vmem>>, vector<8x32xf32>,
    } else {
    }
    %c0 = arith.constant 0 : index
    %c0_1 = arith.constant 0 : index
    %3 = vector.load %arg2[%c0, %c0_1] : memref<8x1xi32, #tpu.memory_space<vmem>>, vector<8x1xi32>
    %c0_2 = arith.constant 0 : index
    %c0_3 = arith.constant 0 : index
    %c0_4 = arith.constant 0 : index
    %4 = vector.load %arg5[%c0_2, %c0_3, %c0_4] : memref<1x1x32xf32, #tpu.memory_space<vmem>>, vector<1x1x32xf32>
    %5 = vector.shape_cast %4 : vector<1x1x32xf32> to vector<1x32xf32>
    %c0_5 = arith.constant 0 : index
    %c0_6 = arith.constant 0 : index
    %c0_7 = arith.constant 0 : index
    %c0_8 = arith.constant 0 : index
    %6 = vector.load %arg4[%c0_5, %c0_6, %c0_7, %c0_8] : memref<1x3x32x32xbf16, #tpu.memory_space<vmem>>, vector<1x1x32x32xbf16>
    %7 = vector.shape_cast %6 : vector<1x1x32x32xbf16> to vector<32x32xbf16>
    %c0_9 = arith.constant 0 : index
    %c1 = arith.constant 1 : index
    %c0_10 = arith.constant 0 : index
    %c0_11 = arith.constant 0 : index
    %8 = vector.load %arg4[%c0_9, %c1, %c0_10, %c0_11] : memref<1x3x32x32xbf16, #tpu.memory_space<vmem>>, vector<1x1x32x32xbf16>
    %9 = vector.shape_cast %8 : vector<1x1x32x32xbf16> to vector<32x32xbf16>
    %c0_12 = arith.constant 0 : index
    %c2 = arith.constant 2 : index
    %c0_13 = arith.constant 0 : index
    %c0_14 = arith.constant 0 : index
    %10 = vector.load %arg4[%c0_12, %c2, %c0_13, %c0_14] : memref<1x3x32x32xbf16, #tpu.memory_space<vmem>>, vector<1x1x32x32xbf16>
    %11 = vector.shape_cast %10 : vector<1x1x32x32xbf16> to vector<32x32xbf16>
    %c2_i32 = arith.constant 2 : i32
    %12 = arith.muli %c2_i32, %arg0 : i32
    %c1_i32 = arith.constant 1 : i32
    %13 = arith.subi %c1_i32, %12 : i32
    %c3_i32 = arith.constant 3 : i32
    %14 = arith.muli %arg0, %c3_i32 : i32
    %c11_i32 = arith.constant 11 : i32
    %15 = arith.muli %arg0, %c11_i32 : i32
    %c0_15 = arith.constant 0 : index
    %c0_16 = arith.constant 0 : index
    %16 = vector.load %arg8[%c0_15, %c0_16] : memref<8x32xf32, #tpu.memory_space<vmem>>, vector<8x32xf32>
    %c0_i32_17 = arith.constant 0 : i32
    %17 = arith.muli %13, %c0_i32_17 : i32
    %18 = arith.addi %14, %17 : i32
    %c4_i32 = arith.constant 4 : i32
    %19 = arith.muli %arg1, %c4_i32 : i32
    %20 = arith.addi %19, %c0_i32_17 : i32
    %21 = arith.muli %13, %20 : i32
    %22 = arith.addi %15, %21 : i32
    %23 = arith.truncf %16 : vector<8x32xf32> to vector<8x32xbf16>
    %cst = arith.constant dense<0.000000e+00> : vector<8x32xf32>
    %24 = tpu.matmul %23, %7, %cst {dimension_numbers = #tpu.dot_dimension_numbers<[1], [0], [0], [1], [0, 0, 1, 1], [], []>} : vector<8x32xbf16>, vector<32x32xbf16>, vector<8x32xf32> -> vector<8x32xf32>
    %cst_18 = arith.constant dense<0.000000e+00> : vector<8x32xf32>
    %25 = tpu.matmul %23, %9, %cst_18 {dimension_numbers = #tpu.dot_dimension_numbers<[1], [0], [0], [1], [0, 0, 1, 1], [], []>} : vector<8x32xbf16>, vector<32x32xbf16>, vector<8x32xf32> -> vector<8x32xf32>
    %cst_19 = arith.constant dense<0.000000e+00> : vector<8x32xf32>
    %26 = tpu.matmul %23, %11, %cst_19 {dimension_numbers = #tpu.dot_dimension_numbers<[1], [0], [0], [1], [0, 0, 1, 1], [], []>} : vector<8x32xbf16>, vector<32x32xbf16>, vector<8x32xf32> -> vector<8x32xf32>
    %c0_20 = arith.constant 0 : index
    %c0_21 = arith.constant 0 : index
    %27 = arith.index_cast %18 : i32 to index
    %c0_22 = arith.constant 0 : index
    %c0_23 = arith.constant 0 : index
    %28 = vector.load %arg3[%c0_20, %c0_21, %27, %c0_22, %c0_23] : memref<1x3x4x8x32xbf16, #tpu.memory_space<vmem>>, vector<1x1x1x8x32xbf16>
    %29 = vector.shape_cast %28 : vector<1x1x1x8x32xbf16> to vector<8x32xbf16>
    %c0_24 = arith.constant 0 : index
    %c1_25 = arith.constant 1 : index
    %30 = arith.index_cast %18 : i32 to index
    %c0_26 = arith.constant 0 : index
    %c0_27 = arith.constant 0 : index
    %31 = vector.load %arg3[%c0_24, %c1_25, %30, %c0_26, %c0_27] : memref<1x3x4x8x32xbf16, #tpu.memory_space<vmem>>, vector<1x1x1x8x32xbf16>
    %32 = vector.shape_cast %31 : vector<1x1x1x8x32xbf16> to vector<8x32xbf16>
    %c0_28 = arith.constant 0 : index
    %c2_29 = arith.constant 2 : index
    %33 = arith.index_cast %18 : i32 to index
    %c0_30 = arith.constant 0 : index
    %c0_31 = arith.constant 0 : index
    %34 = vector.load %arg3[%c0_28, %c2_29, %33, %c0_30, %c0_31] : memref<1x3x4x8x32xbf16, #tpu.memory_space<vmem>>, vector<1x1x1x8x32xbf16>
    %35 = vector.shape_cast %34 : vector<1x1x1x8x32xbf16> to vector<8x32xbf16>
    %36 = arith.extf %29 : vector<8x32xbf16> to vector<8x32xf32>
    %37 = arith.addf %36, %24 : vector<8x32xf32>
    %38 = arith.negf %37 : vector<8x32xf32>
    %39 = math.exp %38 : vector<8x32xf32>
    %cst_32 = arith.constant 1.000000e+00 : f32
    %40 = vector.broadcast %cst_32 : f32 to vector<8x32xf32>
    %41 = arith.addf %40, %39 : vector<8x32xf32>
    %42 = arith.divf %40, %41 : vector<8x32xf32>
    %43 = arith.extf %32 : vector<8x32xbf16> to vector<8x32xf32>
    %44 = arith.addf %43, %25 : vector<8x32xf32>
    %45 = arith.negf %44 : vector<8x32xf32>
    %46 = math.exp %45 : vector<8x32xf32>
    %cst_33 = arith.constant 1.000000e+00 : f32
    %47 = vector.broadcast %cst_33 : f32 to vector<8x32xf32>
    %48 = arith.addf %47, %46 : vector<8x32xf32>
    %49 = arith.divf %47, %48 : vector<8x32xf32>
    %50 = vector.broadcast %5 : vector<1x32xf32> to vector<8x32xf32>
    %51 = arith.addf %26, %50 : vector<8x32xf32>
    %52 = arith.mulf %42, %51 : vector<8x32xf32>
    %53 = arith.extf %35 : vector<8x32xbf16> to vector<8x32xf32>
    %54 = arith.addf %53, %52 : vector<8x32xf32>
    %55 = math.tanh %54 : vector<8x32xf32>
    %cst_34 = arith.constant 1.000000e+00 : f32
    %56 = vector.broadcast %cst_34 : f32 to vector<8x32xf32>
    %57 = arith.subf %56, %49 : vector<8x32xf32>
    %58 = arith.mulf %57, %55 : vector<8x32xf32>
    %59 = arith.mulf %49, %16 : vector<8x32xf32>
    %60 = arith.addf %58, %59 : vector<8x32xf32>
    %61 = vector.broadcast %22 : i32 to vector<8x1xi32>
    %62 = arith.cmpi slt, %61, %3 : vector<8x1xi32>
    %63 = vector.shape_cast %62 : vector<8x1xi1> to vector<8x1xi1>
    %64 = vector.broadcast %63 : vector<8x1xi1> to vector<8x32xi1>
    %65 = arith.select %64, %60, %16 : vector<8x32xi1>, vector<8x32xf32>
    %cst_35 = arith.constant 0.000000e+00 : f32
    %66 = vector.broadcast %cst_35 : f32 to vector<8x32xf32>
    %67 = arith.select %64, %60, %66 : vector<8x32xi1>, vector<8x32xf32>
    %c0_36 = arith.constant 0 : index
    %68 = arith.index_cast %18 : i32 to index
    %c0_37 = arith.constant 0 : index
    %c0_38 = arith.constant 0 : index
    %69 = vector.load %arg6[%c0_36, %68, %c0_37, %c0_38] : memref<1x4x8x32xf32, #tpu.memory_space<vmem>>, vector<1x1x8x32xf32>
    %70 = vector.shape_cast %69 : vector<1x1x8x32xf32> to vector<8x32xf32>
    %71 = vector.shape_cast %67 : vector<8x32xf32> to vector<1x1x8x32xf32>
    tpu.vector_store %arg6[%c0_36, %68, %c0_37, %c0_38], %71 {strides = array<i32>} : memref<1x4x8x32xf32, #tpu.memory_space<vmem>>, vector<1x1x8x32xf32>,
    %c1_i32_39 = arith.constant 1 : i32
    %72 = arith.muli %13, %c1_i32_39 : i32
    %73 = arith.addi %14, %72 : i32
    %c4_i32_40 = arith.constant 4 : i32
    %74 = arith.muli %arg1, %c4_i32_40 : i32
    %75 = arith.addi %74, %c1_i32_39 : i32
    %76 = arith.muli %13, %75 : i32
    %77 = arith.addi %15, %76 : i32
    %78 = arith.truncf %65 : vector<8x32xf32> to vector<8x32xbf16>
    %cst_41 = arith.constant dense<0.000000e+00> : vector<8x32xf32>
    %79 = tpu.matmul %78, %7, %cst_41 {dimension_numbers = #tpu.dot_dimension_numbers<[1], [0], [0], [1], [0, 0, 1, 1], [], []>} : vector<8x32xbf16>, vector<32x32xbf16>, vector<8x32xf32> -> vector<8x32xf32>
    %cst_42 = arith.constant dense<0.000000e+00> : vector<8x32xf32>
    %80 = tpu.matmul %78, %9, %cst_42 {dimension_numbers = #tpu.dot_dimension_numbers<[1], [0], [0], [1], [0, 0, 1, 1], [], []>} : vector<8x32xbf16>, vector<32x32xbf16>, vector<8x32xf32> -> vector<8x32xf32>
    %cst_43 = arith.constant dense<0.000000e+00> : vector<8x32xf32>
    %81 = tpu.matmul %78, %11, %cst_43 {dimension_numbers = #tpu.dot_dimension_numbers<[1], [0], [0], [1], [0, 0, 1, 1], [], []>} : vector<8x32xbf16>, vector<32x32xbf16>, vector<8x32xf32> -> vector<8x32xf32>
    %c0_44 = arith.constant 0 : index
    %c0_45 = arith.constant 0 : index
    %82 = arith.index_cast %73 : i32 to index
    %c0_46 = arith.constant 0 : index
    %c0_47 = arith.constant 0 : index
    %83 = vector.load %arg3[%c0_44, %c0_45, %82, %c0_46, %c0_47] : memref<1x3x4x8x32xbf16, #tpu.memory_space<vmem>>, vector<1x1x1x8x32xbf16>
    %84 = vector.shape_cast %83 : vector<1x1x1x8x32xbf16> to vector<8x32xbf16>
    %c0_48 = arith.constant 0 : index
    %c1_49 = arith.constant 1 : index
    %85 = arith.index_cast %73 : i32 to index
    %c0_50 = arith.constant 0 : index
    %c0_51 = arith.constant 0 : index
    %86 = vector.load %arg3[%c0_48, %c1_49, %85, %c0_50, %c0_51] : memref<1x3x4x8x32xbf16, #tpu.memory_space<vmem>>, vector<1x1x1x8x32xbf16>
    %87 = vector.shape_cast %86 : vector<1x1x1x8x32xbf16> to vector<8x32xbf16>
    %c0_52 = arith.constant 0 : index
    %c2_53 = arith.constant 2 : index
    %88 = arith.index_cast %73 : i32 to index
    %c0_54 = arith.constant 0 : index
    %c0_55 = arith.constant 0 : index
    %89 = vector.load %arg3[%c0_52, %c2_53, %88, %c0_54, %c0_55] : memref<1x3x4x8x32xbf16, #tpu.memory_space<vmem>>, vector<1x1x1x8x32xbf16>
    %90 = vector.shape_cast %89 : vector<1x1x1x8x32xbf16> to vector<8x32xbf16>
    %91 = arith.extf %84 : vector<8x32xbf16> to vector<8x32xf32>
    %92 = arith.addf %91, %79 : vector<8x32xf32>
    %93 = arith.negf %92 : vector<8x32xf32>
    %94 = math.exp %93 : vector<8x32xf32>
    %cst_56 = arith.constant 1.000000e+00 : f32
    %95 = vector.broadcast %cst_56 : f32 to vector<8x32xf32>
    %96 = arith.addf %95, %94 : vector<8x32xf32>
    %97 = arith.divf %95, %96 : vector<8x32xf32>
    %98 = arith.extf %87 : vector<8x32xbf16> to vector<8x32xf32>
    %99 = arith.addf %98, %80 : vector<8x32xf32>
    %100 = arith.negf %99 : vector<8x32xf32>
    %101 = math.exp %100 : vector<8x32xf32>
    %cst_57 = arith.constant 1.000000e+00 : f32
    %102 = vector.broadcast %cst_57 : f32 to vector<8x32xf32>
    %103 = arith.addf %102, %101 : vector<8x32xf32>
    %104 = arith.divf %102, %103 : vector<8x32xf32>
    %105 = vector.broadcast %5 : vector<1x32xf32> to vector<8x32xf32>
    %106 = arith.addf %81, %105 : vector<8x32xf32>
    %107 = arith.mulf %97, %106 : vector<8x32xf32>
    %108 = arith.extf %90 : vector<8x32xbf16> to vector<8x32xf32>
    %109 = arith.addf %108, %107 : vector<8x32xf32>
    %110 = math.tanh %109 : vector<8x32xf32>
    %cst_58 = arith.constant 1.000000e+00 : f32
    %111 = vector.broadcast %cst_58 : f32 to vector<8x32xf32>
    %112 = arith.subf %111, %104 : vector<8x32xf32>
    %113 = arith.mulf %112, %110 : vector<8x32xf32>
    %114 = arith.mulf %104, %65 : vector<8x32xf32>
    %115 = arith.addf %113, %114 : vector<8x32xf32>
    %116 = vector.broadcast %77 : i32 to vector<8x1xi32>
    %117 = arith.cmpi slt, %116, %3 : vector<8x1xi32>
    %118 = vector.shape_cast %117 : vector<8x1xi1> to vector<8x1xi1>
    %119 = vector.broadcast %118 : vector<8x1xi1> to vector<8x32xi1>
    %120 = arith.select %119, %115, %65 : vector<8x32xi1>, vector<8x32xf32>
    %cst_59 = arith.constant 0.000000e+00 : f32
    %121 = vector.broadcast %cst_59 : f32 to vector<8x32xf32>
    %122 = arith.select %119, %115, %121 : vector<8x32xi1>, vector<8x32xf32>
    %c0_60 = arith.constant 0 : index
    %123 = arith.index_cast %73 : i32 to index
    %c0_61 = arith.constant 0 : index
    %c0_62 = arith.constant 0 : index
    %124 = vector.load %arg6[%c0_60, %123, %c0_61, %c0_62] : memref<1x4x8x32xf32, #tpu.memory_space<vmem>>, vector<1x1x8x32xf32>
    %125 = vector.shape_cast %124 : vector<1x1x8x32xf32> to vector<8x32xf32>
    %126 = vector.shape_cast %122 : vector<8x32xf32> to vector<1x1x8x32xf32>
    tpu.vector_store %arg6[%c0_60, %123, %c0_61, %c0_62], %126 {strides = array<i32>} : memref<1x4x8x32xf32, #tpu.memory_space<vmem>>, vector<1x1x8x32xf32>,
    %c2_i32_63 = arith.constant 2 : i32
    %127 = arith.muli %13, %c2_i32_63 : i32
    %128 = arith.addi %14, %127 : i32
    %c4_i32_64 = arith.constant 4 : i32
    %129 = arith.muli %arg1, %c4_i32_64 : i32
    %130 = arith.addi %129, %c2_i32_63 : i32
    %131 = arith.muli %13, %130 : i32
    %132 = arith.addi %15, %131 : i32
    %133 = arith.truncf %120 : vector<8x32xf32> to vector<8x32xbf16>
    %cst_65 = arith.constant dense<0.000000e+00> : vector<8x32xf32>
    %134 = tpu.matmul %133, %7, %cst_65 {dimension_numbers = #tpu.dot_dimension_numbers<[1], [0], [0], [1], [0, 0, 1, 1], [], []>} : vector<8x32xbf16>, vector<32x32xbf16>, vector<8x32xf32> -> vector<8x32xf32>
    %cst_66 = arith.constant dense<0.000000e+00> : vector<8x32xf32>
    %135 = tpu.matmul %133, %9, %cst_66 {dimension_numbers = #tpu.dot_dimension_numbers<[1], [0], [0], [1], [0, 0, 1, 1], [], []>} : vector<8x32xbf16>, vector<32x32xbf16>, vector<8x32xf32> -> vector<8x32xf32>
    %cst_67 = arith.constant dense<0.000000e+00> : vector<8x32xf32>
    %136 = tpu.matmul %133, %11, %cst_67 {dimension_numbers = #tpu.dot_dimension_numbers<[1], [0], [0], [1], [0, 0, 1, 1], [], []>} : vector<8x32xbf16>, vector<32x32xbf16>, vector<8x32xf32> -> vector<8x32xf32>
    %c0_68 = arith.constant 0 : index
    %c0_69 = arith.constant 0 : index
    %137 = arith.index_cast %128 : i32 to index
    %c0_70 = arith.constant 0 : index
    %c0_71 = arith.constant 0 : index
    %138 = vector.load %arg3[%c0_68, %c0_69, %137, %c0_70, %c0_71] : memref<1x3x4x8x32xbf16, #tpu.memory_space<vmem>>, vector<1x1x1x8x32xbf16>
    %139 = vector.shape_cast %138 : vector<1x1x1x8x32xbf16> to vector<8x32xbf16>
    %c0_72 = arith.constant 0 : index
    %c1_73 = arith.constant 1 : index
    %140 = arith.index_cast %128 : i32 to index
    %c0_74 = arith.constant 0 : index
    %c0_75 = arith.constant 0 : index
    %141 = vector.load %arg3[%c0_72, %c1_73, %140, %c0_74, %c0_75] : memref<1x3x4x8x32xbf16, #tpu.memory_space<vmem>>, vector<1x1x1x8x32xbf16>
    %142 = vector.shape_cast %141 : vector<1x1x1x8x32xbf16> to vector<8x32xbf16>
    %c0_76 = arith.constant 0 : index
    %c2_77 = arith.constant 2 : index
    %143 = arith.index_cast %128 : i32 to index
    %c0_78 = arith.constant 0 : index
    %c0_79 = arith.constant 0 : index
    %144 = vector.load %arg3[%c0_76, %c2_77, %143, %c0_78, %c0_79] : memref<1x3x4x8x32xbf16, #tpu.memory_space<vmem>>, vector<1x1x1x8x32xbf16>
    %145 = vector.shape_cast %144 : vector<1x1x1x8x32xbf16> to vector<8x32xbf16>
    %146 = arith.extf %139 : vector<8x32xbf16> to vector<8x32xf32>
    %147 = arith.addf %146, %134 : vector<8x32xf32>
    %148 = arith.negf %147 : vector<8x32xf32>
    %149 = math.exp %148 : vector<8x32xf32>
    %cst_80 = arith.constant 1.000000e+00 : f32
    %150 = vector.broadcast %cst_80 : f32 to vector<8x32xf32>
    %151 = arith.addf %150, %149 : vector<8x32xf32>
    %152 = arith.divf %150, %151 : vector<8x32xf32>
    %153 = arith.extf %142 : vector<8x32xbf16> to vector<8x32xf32>
    %154 = arith.addf %153, %135 : vector<8x32xf32>
    %155 = arith.negf %154 : vector<8x32xf32>
    %156 = math.exp %155 : vector<8x32xf32>
    %cst_81 = arith.constant 1.000000e+00 : f32
    %157 = vector.broadcast %cst_81 : f32 to vector<8x32xf32>
    %158 = arith.addf %157, %156 : vector<8x32xf32>
    %159 = arith.divf %157, %158 : vector<8x32xf32>
    %160 = vector.broadcast %5 : vector<1x32xf32> to vector<8x32xf32>
    %161 = arith.addf %136, %160 : vector<8x32xf32>
    %162 = arith.mulf %152, %161 : vector<8x32xf32>
    %163 = arith.extf %145 : vector<8x32xbf16> to vector<8x32xf32>
    %164 = arith.addf %163, %162 : vector<8x32xf32>
    %165 = math.tanh %164 : vector<8x32xf32>
    %cst_82 = arith.constant 1.000000e+00 : f32
    %166 = vector.broadcast %cst_82 : f32 to vector<8x32xf32>
    %167 = arith.subf %166, %159 : vector<8x32xf32>
    %168 = arith.mulf %167, %165 : vector<8x32xf32>
    %169 = arith.mulf %159, %120 : vector<8x32xf32>
    %170 = arith.addf %168, %169 : vector<8x32xf32>
    %171 = vector.broadcast %132 : i32 to vector<8x1xi32>
    %172 = arith.cmpi slt, %171, %3 : vector<8x1xi32>
    %173 = vector.shape_cast %172 : vector<8x1xi1> to vector<8x1xi1>
    %174 = vector.broadcast %173 : vector<8x1xi1> to vector<8x32xi1>
    %175 = arith.select %174, %170, %120 : vector<8x32xi1>, vector<8x32xf32>
    %cst_83 = arith.constant 0.000000e+00 : f32
    %176 = vector.broadcast %cst_83 : f32 to vector<8x32xf32>
    %177 = arith.select %174, %170, %176 : vector<8x32xi1>, vector<8x32xf32>
    %c0_84 = arith.constant 0 : index
    %178 = arith.index_cast %128 : i32 to index
    %c0_85 = arith.constant 0 : index
    %c0_86 = arith.constant 0 : index
    %179 = vector.load %arg6[%c0_84, %178, %c0_85, %c0_86] : memref<1x4x8x32xf32, #tpu.memory_space<vmem>>, vector<1x1x8x32xf32>
    %180 = vector.shape_cast %179 : vector<1x1x8x32xf32> to vector<8x32xf32>
    %181 = vector.shape_cast %177 : vector<8x32xf32> to vector<1x1x8x32xf32>
    tpu.vector_store %arg6[%c0_84, %178, %c0_85, %c0_86], %181 {strides = array<i32>} : memref<1x4x8x32xf32, #tpu.memory_space<vmem>>, vector<1x1x8x32xf32>,
    %c3_i32_87 = arith.constant 3 : i32
    %182 = arith.muli %13, %c3_i32_87 : i32
    %183 = arith.addi %14, %182 : i32
    %c4_i32_88 = arith.constant 4 : i32
    %184 = arith.muli %arg1, %c4_i32_88 : i32
    %185 = arith.addi %184, %c3_i32_87 : i32
    %186 = arith.muli %13, %185 : i32
    %187 = arith.addi %15, %186 : i32
    %188 = arith.truncf %175 : vector<8x32xf32> to vector<8x32xbf16>
    %cst_89 = arith.constant dense<0.000000e+00> : vector<8x32xf32>
    %189 = tpu.matmul %188, %7, %cst_89 {dimension_numbers = #tpu.dot_dimension_numbers<[1], [0], [0], [1], [0, 0, 1, 1], [], []>} : vector<8x32xbf16>, vector<32x32xbf16>, vector<8x32xf32> -> vector<8x32xf32>
    %cst_90 = arith.constant dense<0.000000e+00> : vector<8x32xf32>
    %190 = tpu.matmul %188, %9, %cst_90 {dimension_numbers = #tpu.dot_dimension_numbers<[1], [0], [0], [1], [0, 0, 1, 1], [], []>} : vector<8x32xbf16>, vector<32x32xbf16>, vector<8x32xf32> -> vector<8x32xf32>
    %cst_91 = arith.constant dense<0.000000e+00> : vector<8x32xf32>
    %191 = tpu.matmul %188, %11, %cst_91 {dimension_numbers = #tpu.dot_dimension_numbers<[1], [0], [0], [1], [0, 0, 1, 1], [], []>} : vector<8x32xbf16>, vector<32x32xbf16>, vector<8x32xf32> -> vector<8x32xf32>
    %c0_92 = arith.constant 0 : index
    %c0_93 = arith.constant 0 : index
    %192 = arith.index_cast %183 : i32 to index
    %c0_94 = arith.constant 0 : index
    %c0_95 = arith.constant 0 : index
    %193 = vector.load %arg3[%c0_92, %c0_93, %192, %c0_94, %c0_95] : memref<1x3x4x8x32xbf16, #tpu.memory_space<vmem>>, vector<1x1x1x8x32xbf16>
    %194 = vector.shape_cast %193 : vector<1x1x1x8x32xbf16> to vector<8x32xbf16>
    %c0_96 = arith.constant 0 : index
    %c1_97 = arith.constant 1 : index
    %195 = arith.index_cast %183 : i32 to index
    %c0_98 = arith.constant 0 : index
    %c0_99 = arith.constant 0 : index
    %196 = vector.load %arg3[%c0_96, %c1_97, %195, %c0_98, %c0_99] : memref<1x3x4x8x32xbf16, #tpu.memory_space<vmem>>, vector<1x1x1x8x32xbf16>
    %197 = vector.shape_cast %196 : vector<1x1x1x8x32xbf16> to vector<8x32xbf16>
    %c0_100 = arith.constant 0 : index
    %c2_101 = arith.constant 2 : index
    %198 = arith.index_cast %183 : i32 to index
    %c0_102 = arith.constant 0 : index
    %c0_103 = arith.constant 0 : index
    %199 = vector.load %arg3[%c0_100, %c2_101, %198, %c0_102, %c0_103] : memref<1x3x4x8x32xbf16, #tpu.memory_space<vmem>>, vector<1x1x1x8x32xbf16>
    %200 = vector.shape_cast %199 : vector<1x1x1x8x32xbf16> to vector<8x32xbf16>
    %201 = arith.extf %194 : vector<8x32xbf16> to vector<8x32xf32>
    %202 = arith.addf %201, %189 : vector<8x32xf32>
    %203 = arith.negf %202 : vector<8x32xf32>
    %204 = math.exp %203 : vector<8x32xf32>
    %cst_104 = arith.constant 1.000000e+00 : f32
    %205 = vector.broadcast %cst_104 : f32 to vector<8x32xf32>
    %206 = arith.addf %205, %204 : vector<8x32xf32>
    %207 = arith.divf %205, %206 : vector<8x32xf32>
    %208 = arith.extf %197 : vector<8x32xbf16> to vector<8x32xf32>
    %209 = arith.addf %208, %190 : vector<8x32xf32>
    %210 = arith.negf %209 : vector<8x32xf32>
    %211 = math.exp %210 : vector<8x32xf32>
    %cst_105 = arith.constant 1.000000e+00 : f32
    %212 = vector.broadcast %cst_105 : f32 to vector<8x32xf32>
    %213 = arith.addf %212, %211 : vector<8x32xf32>
    %214 = arith.divf %212, %213 : vector<8x32xf32>
    %215 = vector.broadcast %5 : vector<1x32xf32> to vector<8x32xf32>
    %216 = arith.addf %191, %215 : vector<8x32xf32>
    %217 = arith.mulf %207, %216 : vector<8x32xf32>
    %218 = arith.extf %200 : vector<8x32xbf16> to vector<8x32xf32>
    %219 = arith.addf %218, %217 : vector<8x32xf32>
    %220 = math.tanh %219 : vector<8x32xf32>
    %cst_106 = arith.constant 1.000000e+00 : f32
    %221 = vector.broadcast %cst_106 : f32 to vector<8x32xf32>
    %222 = arith.subf %221, %214 : vector<8x32xf32>
    %223 = arith.mulf %222, %220 : vector<8x32xf32>
    %224 = arith.mulf %214, %175 : vector<8x32xf32>
    %225 = arith.addf %223, %224 : vector<8x32xf32>
    %226 = vector.broadcast %187 : i32 to vector<8x1xi32>
    %227 = arith.cmpi slt, %226, %3 : vector<8x1xi32>
    %228 = vector.shape_cast %227 : vector<8x1xi1> to vector<8x1xi1>
    %229 = vector.broadcast %228 : vector<8x1xi1> to vector<8x32xi1>
    %230 = arith.select %229, %225, %175 : vector<8x32xi1>, vector<8x32xf32>
    %cst_107 = arith.constant 0.000000e+00 : f32
    %231 = vector.broadcast %cst_107 : f32 to vector<8x32xf32>
    %232 = arith.select %229, %225, %231 : vector<8x32xi1>, vector<8x32xf32>
    %c0_108 = arith.constant 0 : index
    %233 = arith.index_cast %183 : i32 to index
    %c0_109 = arith.constant 0 : index
    %c0_110 = arith.constant 0 : index
    %234 = vector.load %arg6[%c0_108, %233, %c0_109, %c0_110] : memref<1x4x8x32xf32, #tpu.memory_space<vmem>>, vector<1x1x8x32xf32>
    %235 = vector.shape_cast %234 : vector<1x1x8x32xf32> to vector<8x32xf32>
    %236 = vector.shape_cast %232 : vector<8x32xf32> to vector<1x1x8x32xf32>
    tpu.vector_store %arg6[%c0_108, %233, %c0_109, %c0_110], %236 {strides = array<i32>} : memref<1x4x8x32xf32, #tpu.memory_space<vmem>>, vector<1x1x8x32xf32>,
    %c4_i32_111 = arith.constant 4 : i32
    %c0_112 = arith.constant 0 : index
    %c0_113 = arith.constant 0 : index
    %237 = vector.load %arg8[%c0_112, %c0_113] : memref<8x32xf32, #tpu.memory_space<vmem>>, vector<8x32xf32>
    tpu.vector_store %arg8[%c0_112, %c0_113], %230 {strides = array<i32>} : memref<8x32xf32, #tpu.memory_space<vmem>>, vector<8x32xf32>,
    %c2_i32_114 = arith.constant 2 : i32
    %238 = arith.cmpi eq, %arg1, %c2_i32_114 : i32
    %239 = arith.extui %238 : i1 to i32
    %c0_i32_115 = arith.constant 0 : i32
    %240 = arith.cmpi ne, %239, %c0_i32_115 : i32
    scf.if %240 {
      %c0_116 = arith.constant 0 : index
      %c0_117 = arith.constant 0 : index
      %241 = vector.load %arg8[%c0_116, %c0_117] : memref<8x32xf32, #tpu.memory_space<vmem>>, vector<8x32xf32>
      %c0_118 = arith.constant 0 : index
      %c0_119 = arith.constant 0 : index
      %c0_120 = arith.constant 0 : index
      %242 = vector.load %arg7[%c0_118, %c0_119, %c0_120] : memref<1x8x32xf32, #tpu.memory_space<vmem>>, vector<1x8x32xf32>
      %243 = vector.shape_cast %242 : vector<1x8x32xf32> to vector<8x32xf32>
      %244 = vector.shape_cast %241 : vector<8x32xf32> to vector<1x8x32xf32>
      tpu.vector_store %arg7[%c0_118, %c0_119, %c0_120], %244 {strides = array<i32>} : memref<1x8x32xf32, #tpu.memory_space<vmem>>, vector<1x8x32xf32>,
    } else {
    }
    return
  }
  func.func @transform_0(%arg0: i32, %arg1: i32) -> (i32, i32) {
    %c0_i32 = arith.constant 0 : i32
    %c0_i32_0 = arith.constant 0 : i32
    %c0_i32_1 = arith.constant 0 : i32
    return %c0_i32, %c0_i32_0 : i32, i32
  }
  func.func @transform_1(%arg0: i32, %arg1: i32) -> (i32, i32, i32, i32, i32) {
    %c2_i32 = arith.constant 2 : i32
    %0 = arith.muli %arg0, %c2_i32 : i32
    %c2_i32_0 = arith.constant 2 : i32
    %1 = arith.muli %c2_i32_0, %arg0 : i32
    %c1_i32 = arith.constant 1 : i32
    %2 = arith.subi %c1_i32, %1 : i32
    %3 = arith.muli %2, %arg1 : i32
    %4 = arith.addi %0, %3 : i32
    %c0_i32 = arith.constant 0 : i32
    %c0_i32_1 = arith.constant 0 : i32
    %c0_i32_2 = arith.constant 0 : i32
    %c0_i32_3 = arith.constant 0 : i32
    return %arg0, %c0_i32, %4, %c0_i32_1, %c0_i32_2 : i32, i32, i32, i32, i32
  }
  func.func @transform_2(%arg0: i32, %arg1: i32) -> (i32, i32, i32, i32) {
    %c0_i32 = arith.constant 0 : i32
    %c0_i32_0 = arith.constant 0 : i32
    %c0_i32_1 = arith.constant 0 : i32
    %c0_i32_2 = arith.constant 0 : i32
    return %arg0, %c0_i32, %c0_i32_0, %c0_i32_1 : i32, i32, i32, i32
  }
  func.func @transform_3(%arg0: i32, %arg1: i32) -> (i32, i32, i32) {
    %c0_i32 = arith.constant 0 : i32
    %c0_i32_0 = arith.constant 0 : i32
    %c0_i32_1 = arith.constant 0 : i32
    return %arg0, %c0_i32, %c0_i32_0 : i32, i32, i32
  }
  func.func @transform_4(%arg0: i32, %arg1: i32) -> (i32, i32, i32, i32) {
    %c2_i32 = arith.constant 2 : i32
    %0 = arith.muli %arg0, %c2_i32 : i32
    %c2_i32_0 = arith.constant 2 : i32
    %1 = arith.muli %c2_i32_0, %arg0 : i32
    %c1_i32 = arith.constant 1 : i32
    %2 = arith.subi %c1_i32, %1 : i32
    %3 = arith.muli %2, %arg1 : i32
    %4 = arith.addi %0, %3 : i32
    %c0_i32 = arith.constant 0 : i32
    %c0_i32_1 = arith.constant 0 : i32
    %c0_i32_2 = arith.constant 0 : i32
    return %arg0, %4, %c0_i32, %c0_i32_1 : i32, i32, i32, i32
  }
  func.func @transform_5(%arg0: i32, %arg1: i32) -> (i32, i32, i32) {
    %c0_i32 = arith.constant 0 : i32
    %c0_i32_0 = arith.constant 0 : i32
    %c0_i32_1 = arith.constant 0 : i32
    return %arg0, %c0_i32, %c0_i32_0 : i32, i32, i32
  }
}

</mosaic_0001>

<llo_original>
// kernel: tpu_custom_call.1
$region0: #{tpu_custom_call.1}
  #allocation0 [shape = 'u32[]', space=smem, size = 0x4, offset = 0x4, fixed_abs, tag = 'smem constant byte address 0x4 - core index']
  #allocation1 [shape = 'u32[72,128]{1,0:T(1,128)}', space=vmem, size = 0x9000, scoped, tag = 'internal scratch']
  #allocation2 [shape = 'f32[8,32]{1,0:T(8,128)}', space=vmem, size = 0x1000, scoped, tag = 'scratch operand']
  #allocation11 [shape = 's32[]', space=sflag, size = 0x4, offset = 0, fixed_abs, tag = 'sflag constant byte address 0x0 - dummy sync flag']
  %s0 = inlined_call_operand.vmem [shape: s32[8,1], index: 0, kind: input, shape index: {}]
  %s1 = inlined_call_operand.hbm [shape: bf16[2,3,12,8,32], index: 1, kind: input, shape index: {}]
  %s2 = inlined_call_operand.hbm [shape: bf16[2,3,32,32], index: 2, kind: input, shape index: {}]
  %s3 = inlined_call_operand.vmem [shape: f32[2,1,32], index: 3, kind: input, shape index: {}]
  %s4 = inlined_call_operand.hbm [shape: f32[2,12,8,32], index: 4, kind: output, shape index: {0}]
  %s5 = inlined_call_operand.hbm [shape: f32[2,8,32], index: 5, kind: output, shape index: {1}]
  %6 = xla_tuple %s4, %s5
  %s7 = sld [smem:[#allocation0]]
  $region73: #{tpu_custom_call.1} parent=0
    _
  %s9 = ssub.s32 1, %s7
  %s10 = scalar_select 0, %s9, %s7
  $region1: #{tpu_custom_call.1} parent=0
    #allocation3 [shape = 'u8[49152]{0}', space=vmem, size = 0xc000, scoped, tag = 'input window, operand 1']
    #allocation4 [shape = 's32[2]{0}', space=sflag, size = 0x8, scoped, tag = 'scoped memory for tpu_custom_call.1']
    #allocation5 [shape = 's32[2]{0}', space=sflag, size = 0x8, scoped, tag = 'scoped memory for tpu_custom_call.1']
    #allocation6 [shape = 'u8[24576]{0}', space=vmem, size = 0x6000, scoped, tag = 'input window, operand 2, single buffered']
    #allocation7 [shape = 's32[1]{0}', space=sflag, size = 0x4, scoped, tag = 'scoped memory for tpu_custom_call.1']
    #allocation8 [shape = 'u8[32768]{0}', space=vmem, size = 0x8000, scoped, tag = 'output window, operand 0']
    #allocation9 [shape = 'u8[8192]{0}', space=vmem, size = 0x2000, scoped, tag = 'output window, operand 1']
    #allocation10 [shape = 's32[2]{0}', space=sflag, size = 0x8, scoped, tag = 'scoped memory for tpu_custom_call.1']
    %11 = vsyncpa [#allocation4], 0
    %s12 = scalar_lea.sflag [#allocation4], 1
    %13 = vsyncpa %s12, 0
    %14 = vsyncpa [#allocation7], 0
    %15 = vsyncpa [#allocation5], 0
    %s16 = scalar_lea.sflag [#allocation5], 1
    %17 = vsyncpa %s16, 0
    %18 = vsyncpa [#allocation10], 0
    %s19 = scalar_lea.sflag [#allocation10], 1
    %20 = vsyncpa %s19, 0
    loop: start=0, step=1, limit=8
    $region2: #{tpu_custom_call.1} parent=1 // loop_pre_header
      _
    $region3: #{tpu_custom_call.1} parent=1 // loop_header
      %s22 = sphi 0, %s26
      %p23 = scmp.ge.s32.totalorder %s22, 8
      %s29 = sphi 0, %s41
      %s30 = sphi 0, %s37
      %s31 = sphi 0, %s29
      %s32 = sphi 0, %s30
      %s33 = sphi 0, %s31
      %s34 = sphi 0, %s32
      %s42 = sphi 0, %s42
      %s44 = sphi 0, %s42
      %s45 = sphi 0, %s44
      %s59 = sphi 0, %s45
      %s75 = sphi 0, %s77
      %s78 = sphi 0, %s75
      %s79 = sphi 0, %s78
      %s95 = sphi 0, %s79
      %s101 = sphi 0, %s103
      %s104 = sphi 0, %s101
      %s105 = sphi 0, %s104
      %s121 = sphi 0, %s105
      %s127 = sphi 0, %s129
      %s130 = sphi 0, %s127
      %s131 = sphi 0, %s130
      %s147 = sphi 0, %s131
      %s163 = sphi 0, %s165
      %s166 = sphi 0, %s163
      %s167 = sphi 0, %s166
      %s183 = sphi 0, %s167
      %s189 = sphi 0, %s191
      %s192 = sphi 0, %s189
      %s193 = sphi 0, %s192
      %s209 = sphi 0, %s193
    $region4: #{tpu_custom_call.1} parent=1 // loop_header_branch
      %25 = sbr.rel (%p23) target = $region8
    $region5: #{tpu_custom_call.1} parent=1 // loop_body
      %s27 = ssub.s32 %s22, 1
      %s28 = ssub.s32 %s22, 2
      %s35 = sadd.s32 1, %s30
      %p36 = scmp.ge.s32.totalorder %s35, 3
      %s37 = scalar_select %p36, 0, %s35
      %s38 = sadd.s32 1, %s29
      %s39 = scalar_select %p36, %s38, %s29
      %p40 = scmp.ge.s32.totalorder %s39, 2
      %s41 = scalar_select %p40, 0, %s39
      %s43 = sadd.s32 %s42, 1
      %p46 = scmp.eq.s32.totalorder %s22, 5
      %p47 = scmp.ne.s32.totalorder %s42, %s44
      %p48 = scmp.eq.s32.totalorder %s22, 0
      %p49 = por %p47, %p48
      %p50 = scmp.ne.s32.totalorder %s42, %s44
      %p51 = scmp.eq.s32.totalorder %s27, 5
      %p52 = por %p50, %p51
      %p53 = scmp.ne.s32.totalorder %s44, %s45
      %p54 = scmp.eq.s32.totalorder %s27, 0
      %p55 = por %p53, %p54
      %p56 = scmp.ne.s32.totalorder %s44, %s45
      %p57 = scmp.eq.s32.totalorder %s28, 5
      %p58 = por %p56, %p57
      %p60 = scmp.ne.s32.totalorder %s45, %s59
      %p61 = scmp.eq.s32.totalorder %s28, 0
      %p62 = por %p60, %p61
      %s63 = smul.u32 %s29, 2
      %s64 = ssub.s32 1, %s63
      %s65 = smul.u32 %s64, %s30
      %s66 = sadd.s32 %s63, %s65
      %s67 = smul.u32 %s41, 2
      %s68 = ssub.s32 1, %s67
      %s69 = smul.u32 %s68, %s37
      %s70 = sadd.s32 %s67, %s69
      %s71 = ssub.s32 %s29, %s41
      %s72 = ssub.s32 %s66, %s70
      %s73 = sor.u32 %s71, %s72
      %p74 = scmp.eq.s32.totalorder %s73, 0
      %s76 = sadd.s32 %s75, 1
      %s77 = scalar_select %p74, %s75, %s76
      %p80 = pneg %p74
      %p81 = scmp.eq.s32.totalorder %s22, 5
      %p82 = por %p80, %p81
      %p83 = scmp.ne.s32.totalorder %s75, %s78
      %p84 = scmp.eq.s32.totalorder %s22, 0
      %p85 = por %p83, %p84
      %p86 = scmp.ne.s32.totalorder %s75, %s78
      %p87 = scmp.eq.s32.totalorder %s27, 5
      %p88 = por %p86, %p87
      %p89 = scmp.ne.s32.totalorder %s78, %s79
      %p90 = scmp.eq.s32.totalorder %s27, 0
      %p91 = por %p89, %p90
      %p92 = scmp.ne.s32.totalorder %s78, %s79
      %p93 = scmp.eq.s32.totalorder %s28, 5
      %p94 = por %p92, %p93
      %p96 = scmp.ne.s32.totalorder %s79, %s95
      %p97 = scmp.eq.s32.totalorder %s28, 0
      %p98 = por %p96, %p97
      %s99 = ssub.s32 %s29, %s41
      %p100 = scmp.eq.s32.totalorder %s99, 0
      %s102 = sadd.s32 %s101, 1
      %s103 = scalar_select %p100, %s101, %s102
      %p106 = pneg %p100
      %p107 = scmp.eq.s32.totalorder %s22, 5
      %p108 = por %p106, %p107
      %p109 = scmp.ne.s32.totalorder %s101, %s104
      %p110 = scmp.eq.s32.totalorder %s22, 0
      %p111 = por %p109, %p110
      %p112 = scmp.ne.s32.totalorder %s101, %s104
      %p113 = scmp.eq.s32.totalorder %s27, 5
      %p114 = por %p112, %p113
      %p115 = scmp.ne.s32.totalorder %s104, %s105
      %p116 = scmp.eq.s32.totalorder %s27, 0
      %p117 = por %p115, %p116
      %p118 = scmp.ne.s32.totalorder %s104, %s105
      %p119 = scmp.eq.s32.totalorder %s28, 5
      %p120 = por %p118, %p119
      %p122 = scmp.ne.s32.totalorder %s105, %s121
      %p123 = scmp.eq.s32.totalorder %s28, 0
      %p124 = por %p122, %p123
      %s125 = ssub.s32 %s29, %s41
      %p126 = scmp.eq.s32.totalorder %s125, 0
      %s128 = sadd.s32 %s127, 1
      %s129 = scalar_select %p126, %s127, %s128
      %p132 = pneg %p126
      %p133 = scmp.eq.s32.totalorder %s22, 5
      %p134 = por %p132, %p133
      %p135 = scmp.ne.s32.totalorder %s127, %s130
      %p136 = scmp.eq.s32.totalorder %s22, 0
      %p137 = por %p135, %p136
      %p138 = scmp.ne.s32.totalorder %s127, %s130
      %p139 = scmp.eq.s32.totalorder %s27, 5
      %p140 = por %p138, %p139
      %p141 = scmp.ne.s32.totalorder %s130, %s131
      %p142 = scmp.eq.s32.totalorder %s27, 0
      %p143 = por %p141, %p142
      %p144 = scmp.ne.s32.totalorder %s130, %s131
      %p145 = scmp.eq.s32.totalorder %s28, 5
      %p146 = por %p144, %p145
      %p148 = scmp.ne.s32.totalorder %s131, %s147
      %p149 = scmp.eq.s32.totalorder %s28, 0
      %p150 = por %p148, %p149
      %s151 = smul.u32 %s29, 2
      %s152 = ssub.s32 1, %s151
      %s153 = smul.u32 %s152, %s30
      %s154 = sadd.s32 %s151, %s153
      %s155 = smul.u32 %s41, 2
      %s156 = ssub.s32 1, %s155
      %s157 = smul.u32 %s156, %s37
      %s158 = sadd.s32 %s155, %s157
      %s159 = ssub.s32 %s29, %s41
      %s160 = ssub.s32 %s154, %s158
      %s161 = sor.u32 %s159, %s160
      %p162 = scmp.eq.s32.totalorder %s161, 0
      %s164 = sadd.s32 %s163, 1
      %s165 = scalar_select %p162, %s163, %s164
      %p168 = pneg %p162
      %p169 = scmp.eq.s32.totalorder %s22, 5
      %p170 = por %p168, %p169
      %p171 = scmp.ne.s32.totalorder %s163, %s166
      %p172 = scmp.eq.s32.totalorder %s22, 0
      %p173 = por %p171, %p172
      %p174 = scmp.ne.s32.totalorder %s163, %s166
      %p175 = scmp.eq.s32.totalorder %s27, 5
      %p176 = por %p174, %p175
      %p177 = scmp.ne.s32.totalorder %s166, %s167
      %p178 = scmp.eq.s32.totalorder %s27, 0
      %p179 = por %p177, %p178
      %p180 = scmp.ne.s32.totalorder %s166, %s167
      %p181 = scmp.eq.s32.totalorder %s28, 5
      %p182 = por %p180, %p181
      %p184 = scmp.ne.s32.totalorder %s167, %s183
      %p185 = scmp.eq.s32.totalorder %s28, 0
      %p186 = por %p184, %p185
      %s187 = ssub.s32 %s29, %s41
      %p188 = scmp.eq.s32.totalorder %s187, 0
      %s190 = sadd.s32 %s189, 1
      %s191 = scalar_select %p188, %s189, %s190
      %p194 = pneg %p188
      %p195 = scmp.eq.s32.totalorder %s22, 5
      %p196 = por %p194, %p195
      %p197 = scmp.ne.s32.totalorder %s189, %s192
      %p198 = scmp.eq.s32.totalorder %s22, 0
      %p199 = por %p197, %p198
      %p200 = scmp.ne.s32.totalorder %s189, %s192
      %p201 = scmp.eq.s32.totalorder %s27, 5
      %p202 = por %p200, %p201
      %p203 = scmp.ne.s32.totalorder %s192, %s193
      %p204 = scmp.eq.s32.totalorder %s27, 0
      %p205 = por %p203, %p204
      %p206 = scmp.ne.s32.totalorder %s192, %s193
      %p207 = scmp.eq.s32.totalorder %s28, 5
      %p208 = por %p206, %p207
      %p210 = scmp.ne.s32.totalorder %s193, %s209
      %p211 = scmp.eq.s32.totalorder %s28, 0
      %p212 = por %p210, %p211
      %p213 = scmp.le.s32.totalorder 1, %s22
      %p214 = scmp.lt.s32.totalorder %s22, 7
      %p215 = pnand %p213, %p214
      %p216 = pneg %p215
      // Predicated region
      $region9: #{tpu_custom_call.1} parent=5 // pred_check
        _
      $region10: #{tpu_custom_call.1} parent=5 // pred_check_branch
        %218 = sbr.rel (%p215) target = $region12
      $region11: #{tpu_custom_call.1} parent=5 // pred_region
        %s219 = ssub.s32 %s22, 1
        // Predicated region
        $region13: #{tpu_custom_call.1} parent=11 // pred_check
          %p220 = pneg %p55
        $region14: #{tpu_custom_call.1} parent=11 // pred_check_branch
          %222 = sbr.rel (%p220) target = $region16
        $region15: #{tpu_custom_call.1} parent=11 // pred_region
          _
        $region16: #{tpu_custom_call.1} parent=11 // pred_fallthru
          _
        // Predicated region
        $region17: #{tpu_custom_call.1} parent=11 // pred_check
          %p223 = pneg %p117
        $region18: #{tpu_custom_call.1} parent=11 // pred_check_branch
          %225 = sbr.rel (%p223) target = $region20
        $region19: #{tpu_custom_call.1} parent=11 // pred_region
          %227 = vsyncadd [#allocation7], 0
          %s228 = smul.addr %s31, 12
          %s229 = smul.addr %s228, 4
          %s230 = scalar_lea.hbm %s2, %s229
          %s231 = sshll.u32 %s230, 4
          %s232 = int_to_ptr.hbm [resolvable:$true] %s231
          %s233 = sshll.u32 [#allocation6], 4
          %s234 = int_to_ptr.vmem [resolvable:$true] %s233
          %239 = dma.hbm_to_vmem [thread:$0]  %s232, 768, %s234, [#allocation7], 64, 64, 4
        $region20: #{tpu_custom_call.1} parent=11 // pred_fallthru
          _
        // Predicated region
        $region21: #{tpu_custom_call.1} parent=11 // pred_check
          %p240 = pneg %p143
        $region22: #{tpu_custom_call.1} parent=11 // pred_check_branch
          %242 = sbr.rel (%p240) target = $region24
        $region23: #{tpu_custom_call.1} parent=11 // pred_region
          %p243 = scmp.lt.s32.totalorder %s31, 1
          %s244 = scalar_select %p243, %s31, 1
          %s245 = scalar_lea.vmem %s3, %s244
        $region24: #{tpu_custom_call.1} parent=11 // pred_fallthru
          _
      $region12: #{tpu_custom_call.1} parent=5 // pred_fallthru
        _
      %p246 = scmp.lt.s32.totalorder %s22, 6
      // Predicated region
      $region25: #{tpu_custom_call.1} parent=5 // pred_check
        %p247 = pneg %p246
      $region26: #{tpu_custom_call.1} parent=5 // pred_check_branch
        %249 = sbr.rel (%p247) target = $region28
      $region27: #{tpu_custom_call.1} parent=5 // pred_region
        // Predicated region
        $region29: #{tpu_custom_call.1} parent=27 // pred_check
          %p250 = pneg %p85
        $region30: #{tpu_custom_call.1} parent=27 // pred_check_branch
          %252 = sbr.rel (%p250) target = $region32
        $region31: #{tpu_custom_call.1} parent=27 // pred_region
          #allocation12 [shape = 'u32[6]{0}', space=smem, size = 0x18, scoped, tag = 'DMA stride descriptor']
          %s253 = sand.u32 %s75, 1
          %s254 = scalar_lea.sflag [#allocation4], %s253
          %s255 = sand.u32 %s75, 1
          %s256 = smul.addr %s255, 48
          %s257 = scalar_lea.vmem [#allocation3], %s256
          %s258 = smul.u32 %s29, 2
          %s259 = ssub.s32 1, %s258
          %s260 = smul.u32 %s259, %s30
          %s261 = sadd.s32 %s258, %s260
          %s262 = smul.u32 4, %s261
          %264 = vsyncadd %s254, 0
          %s265 = smul.addr %s29, 36
          %s266 = sadd.s32 %s262, %s265
          %s267 = smul.addr %s266, 4
          %s268 = scalar_lea.hbm %s1, %s267
          %s270 = sshll.u32 1, 14
          %s271 = sxor.u32 4294967295, %s270
          %s273 = sld [smem:[#allocation0]]
          %s274 = sadd.s32 2, %s273
          %s276 = sshll.u32 7, 26
          %s277 = sxor.u32 4294967295, %s276
          %s278 = sand.u32 0, %s277
          %s279 = sshll.u32 %s274, 26
          %s280 = sor.u32 %s278, %s279
          %s281 = sshll.u32 %s268, 4
          %s282 = int_to_ptr.hbm [resolvable:$true] %s281
          %s283 = sshll.u32 %s257, 4
          %s284 = int_to_ptr.vmem [resolvable:$true] %s283
          %290 = sst [smem:[#allocation12]] 768
          %s291 = scalar_lea.smem [#allocation12], 1
          %292 = sst [smem:[%s291]] 256
          %s293 = scalar_lea.smem [#allocation12], 2
          %294 = sst [smem:[%s293]] 4
          %s295 = scalar_lea.smem [#allocation12], 3
          %296 = sst [smem:[%s295]] 64
          %s297 = scalar_lea.smem [#allocation12], 4
          %298 = sst [smem:[%s297]] 64
          %s299 = scalar_lea.smem [#allocation12], 5
          %300 = sst [smem:[%s299]] 4
          %302 = dma.general %s282, 768, %s284, %s254, [#allocation11], [#allocation12], %s280, 0
        $region32: #{tpu_custom_call.1} parent=27 // pred_fallthru
          _
      $region28: #{tpu_custom_call.1} parent=5 // pred_fallthru
        _
      %p303 = scmp.le.s32.totalorder 1, %s22
      %p304 = scmp.lt.s32.totalorder %s22, 7
      %p305 = pnand %p303, %p304
      %p306 = pneg %p305
      // Predicated region
      $region33: #{tpu_custom_call.1} parent=5 // pred_check
        _
      $region34: #{tpu_custom_call.1} parent=5 // pred_check_branch
        %308 = sbr.rel (%p305) target = $region36
      $region35: #{tpu_custom_call.1} parent=5 // pred_region
        %s309 = ssub.s32 %s22, 1
        %s310 = sand.u32 %s78, 1
        %s311 = scalar_lea.sflag [#allocation4], %s310
        %s312 = sand.u32 %s78, 1
        %s313 = smul.addr %s312, 48
        %s314 = scalar_lea.vmem [#allocation3], %s313
        // Predicated region
        $region37: #{tpu_custom_call.1} parent=35 // pred_check
          %p315 = pneg %p91
        $region38: #{tpu_custom_call.1} parent=35 // pred_check_branch
          %317 = sbr.rel (%p315) target = $region40
        $region39: #{tpu_custom_call.1} parent=35 // pred_region
          %319 = dma.done %s311, 768
        $region40: #{tpu_custom_call.1} parent=35 // pred_fallthru
          _
        // Predicated region
        $region41: #{tpu_custom_call.1} parent=35 // pred_check
          %p320 = pneg %p117
        $region42: #{tpu_custom_call.1} parent=35 // pred_check_branch
          %322 = sbr.rel (%p320) target = $region44
        $region43: #{tpu_custom_call.1} parent=35 // pred_region
          %324 = dma.done [#allocation7], 768
        $region44: #{tpu_custom_call.1} parent=35 // pred_fallthru
          _
        %p325 = pneg %p55
        %p326 = pneg %p52
        %s327 = sand.u32 %s78, 1
        %s328 = scalar_lea.sflag [#allocation4], %s327
        %s329 = sand.u32 %s78, 1
        %s330 = smul.addr %s329, 48
        %s331 = scalar_lea.vmem [#allocation3], %s330
        %p332 = pneg %p91
        %p333 = pneg %p88
        %p334 = pneg %p117
        %p335 = pneg %p114
        %p336 = scmp.lt.s32.totalorder %s31, 1
        %s337 = scalar_select %p336, %s31, 1
        %s338 = scalar_lea.vmem %s3, %s337
        %p339 = pneg %p143
        %p340 = pneg %p140
        %p341 = pneg %p179
        %p342 = pneg %p176
        %s343 = sand.u32 %s166, 1
        %s344 = scalar_lea.sflag [#allocation5], %s343
        %s345 = sand.u32 %s166, 1
        %s346 = smul.addr %s345, 32
        %s347 = scalar_lea.vmem [#allocation8], %s346
        %p348 = pneg %p205
        %p349 = pneg %p202
        %s350 = sand.u32 %s192, 1
        %s351 = scalar_lea.sflag [#allocation10], %s350
        %s352 = sand.u32 %s192, 1
        %s353 = smul.addr %s352, 8
        %s354 = scalar_lea.vmem [#allocation9], %s353
        %s355 = smul.u32 %s31, 2
        %s356 = ssub.s32 1, %s355
        %s357 = smul.u32 %s356, %s32
        %s358 = sadd.s32 %s355, %s357
        %s359 = smul.u32 4, %s358
        %p360 = scmp.lt.s32.totalorder %s31, 1
        %s361 = scalar_select %p360, %s31, 1
        %s362 = scalar_lea.vmem %s3, %s361
        %s363 = smul.u32 %s31, 2
        %s364 = ssub.s32 1, %s363
        %s365 = smul.u32 %s364, %s32
        %s366 = sadd.s32 %s363, %s365
        %s367 = smul.u32 4, %s366
        %p369 = scmp.eq.s32.totalorder %s32, 0
        // Predicated region
        $region45: #{tpu_custom_call.1} parent=35 // pred_check
          %p370 = pneg %p369
        $region46: #{tpu_custom_call.1} parent=35 // pred_check_branch
          %372 = sbr.rel (%p370) target = $region48
        $region47: #{tpu_custom_call.1} parent=35 // pred_region
          %vm373 = vcmask 261120
          %374 = vst.msk [vmem:[#allocation2] sm:$0xff] %vm373, 0.0
        $region48: #{tpu_custom_call.1} parent=35 // pred_fallthru
          _
        %v375 = vld [vmem:[%s0] sm:$0xff]
        %v376 = vld [vmem:[%s362] sm:$0x1]
        %v377 = vld [vmem:[#allocation6] sm:$0xf]
        %v378 = vld [vmem:[#allocation6 + $0x4] sm:$0xf]
        %v379 = vld [vmem:[#allocation6 + $0x8] sm:$0xf]
        %v380 = vld [vmem:[#allocation6 + $0xc] sm:$0xf]
        %s381 = scalar_lea.vmem [#allocation6], 16
        %v382 = vld [vmem:[%s381] sm:$0xf]
        %v383 = vld [vmem:[%s381 + $0x4] sm:$0xf]
        %v384 = vld [vmem:[%s381 + $0x8] sm:$0xf]
        %v385 = vld [vmem:[%s381 + $0xc] sm:$0xf]
        %s386 = scalar_lea.vmem [#allocation6], 32
        %v387 = vld [vmem:[%s386] sm:$0xf]
        %v388 = vld [vmem:[%s386 + $0x4] sm:$0xf]
        %v389 = vld [vmem:[%s386 + $0x8] sm:$0xf]
        %v390 = vld [vmem:[%s386 + $0xc] sm:$0xf]
        %s391 = smul.u32 %s31, 2
        %s392 = ssub.s32 1, %s391
        %s393 = smul.u32 %s31, 3
        %s394 = smul.u32 %s31, 11
        %v395 = vld [vmem:[#allocation2] sm:$0xff]
        %s396 = smul.u32 %s32, 4
        %s397 = smul.u32 %s392, %s396
        %s398 = sadd.s32 %s394, %s397
        %v399 = vpack.c.bf16 %v395, %v395
        %v404 = vunpack.c.l.b16 %v377
        %v405 = vunpack.c.l.b16 %v378
        %v406 = vunpack.c.l.b16 %v379
        %v407 = vunpack.c.l.b16 %v380
        %v408 = vpack.c.b16 %v405, %v404
        %v409 = vpack.c.b16 %v407, %v406
        %vm412 = vcmask 261120
        %v414 = vsel %vm412, %v399, 0
        %416 = vmatpush.bf16.msra.mxu0 0
        %417 = vmatpush.bf16.msra.mxu0 0
        %418 = vmatpush.bf16.msra.mxu0 0
        %419 = vmatpush.bf16.msra.mxu0 0
        %420 = vmatpush.bf16.msra.mxu0 0
        %421 = vmatpush.bf16.msra.mxu0 0
        %422 = vmatpush.bf16.msra.mxu0 %v409
        %423 = vmatpush.bf16.msra.mxu0 %v408
        %424 = vmatmul.bf16.gmra.mxu0 %v414
        %v425 = vpop.f32.mrf.mxu0
        %v426 = vadd.f32 0.0, %v425
        %v427 = vpop.f32.mrf.mxu0
        %428 = vdwg.mxu0
        %v433 = vunpack.c.l.b16 %v382
        %v434 = vunpack.c.l.b16 %v383
        %v435 = vunpack.c.l.b16 %v384
        %v436 = vunpack.c.l.b16 %v385
        %v437 = vpack.c.b16 %v434, %v433
        %v438 = vpack.c.b16 %v436, %v435
        %441 = vmatpush.bf16.msra.mxu0 0
        %442 = vmatpush.bf16.msra.mxu0 0
        %443 = vmatpush.bf16.msra.mxu0 0
        %444 = vmatpush.bf16.msra.mxu0 0
        %445 = vmatpush.bf16.msra.mxu0 0
        %446 = vmatpush.bf16.msra.mxu0 0
        %447 = vmatpush.bf16.msra.mxu0 %v438
        %448 = vmatpush.bf16.msra.mxu0 %v437
        %449 = vmatmul.bf16.gmra.mxu0 %v414
        %v450 = vpop.f32.mrf.mxu0
        %v451 = vadd.f32 0.0, %v450
        %v452 = vpop.f32.mrf.mxu0
        %453 = vdwg.mxu0
        %s454 = smul.addr %s393, 4
        %s455 = scalar_lea.vmem %s314, %s454 [#allocation3]
        %v456 = vld [vmem:[%s455] sm:$0xf]
        %s457 = sadd.s32 %s393, 4
        %s458 = smul.addr %s457, 4
        %s459 = scalar_lea.vmem %s314, %s458 [#allocation3]
        %v460 = vld [vmem:[%s459] sm:$0xf]
        %s461 = sadd.s32 %s393, 8
        %s462 = smul.addr %s461, 4
        %s463 = scalar_lea.vmem %s314, %s462 [#allocation3]
        %v464 = vld [vmem:[%s463] sm:$0xf]
        %v465 = vunpack.c.l.bf16 %v456
        %v466 = vadd.f32 %v465, %v426
        %v467 = vxor.u32 %v466, 2147483648
        %v468 = vmul.f32 %v467, 1.442695
        %v469 = vpow.pop %v468
        %v470 = vadd.f32 %v469, 1.0
        %v471 = vrcp.pop %v470
        %v472 = vmul.f32 %v470, %v471
        %v473 = vsub.f32 1.0, %v472
        %v474 = vmul.f32 %v471, %v473
        %v475 = vadd.f32 %v471, %v474
        %vm476 = vweird.f32 %v470
        %vm477 = vweird.f32 %v471
        %vm478 = vmor %vm476, %vm477
        %v479 = vsel %vm478, %v471, %v475
        %v480 = vand.u32 2147483647, %v470
        %vm481 = vcmp.eq.f32.partialorder %v480, 8.507059e+37
        %v482 = vand.u32 %v470, 2147483648
        %v483 = vor.u32 1.1754944e-38, %v482
        %v484 = vsel %vm481, %v483, %v479
        %v485 = vmul.f32 1.0, %v484
        %v486 = vunpack.c.l.bf16 %v460
        %v487 = vadd.f32 %v486, %v451
        %v488 = vxor.u32 %v487, 2147483648
        %v489 = vmul.f32 %v488, 1.442695
        %v490 = vpow.pop %v489
        %v491 = vadd.f32 %v490, 1.0
        %v492 = vrcp.pop %v491
        %v493 = vmul.f32 %v491, %v492
        %v494 = vsub.f32 1.0, %v493
        %v495 = vmul.f32 %v492, %v494
        %v496 = vadd.f32 %v492, %v495
        %vm497 = vweird.f32 %v491
        %vm498 = vweird.f32 %v492
        %vm499 = vmor %vm497, %vm498
        %v500 = vsel %vm499, %v492, %v496
        %v501 = vand.u32 2147483647, %v491
        %vm502 = vcmp.eq.f32.partialorder %v501, 8.507059e+37
        %v503 = vand.u32 %v491, 2147483648
        %v504 = vor.u32 1.1754944e-38, %v503
        %v505 = vsel %vm502, %v504, %v500
        %v506 = vmul.f32 1.0, %v505
        %v508 = vperm.slane %v376, 0
        %v514 = vunpack.c.l.b16 %v387
        %v515 = vunpack.c.l.b16 %v388
        %v516 = vunpack.c.l.b16 %v389
        %v517 = vunpack.c.l.b16 %v390
        %v518 = vpack.c.b16 %v515, %v514
        %v519 = vpack.c.b16 %v517, %v516
        %522 = vmatpush.bf16.msra.mxu0 0
        %523 = vmatpush.bf16.msra.mxu0 0
        %524 = vmatpush.bf16.msra.mxu0 0
        %525 = vmatpush.bf16.msra.mxu0 0
        %526 = vmatpush.bf16.msra.mxu0 0
        %527 = vmatpush.bf16.msra.mxu0 0
        %528 = vmatpush.bf16.msra.mxu0 %v519
        %529 = vmatpush.bf16.msra.mxu0 %v518
        %530 = vmatmul.bf16.gmra.mxu0 %v414
        %v531 = vpop.f32.mrf.mxu0
        %v532 = vadd.f32 %v508, %v531
        %v533 = vpop.f32.mrf.mxu0
        %534 = vdwg.mxu0
        %v535 = vmul.f32 %v485, %v532
        %v536 = vunpack.c.l.bf16 %v464
        %v537 = vadd.f32 %v536, %v535
        %v538 = vtanh.pop %v537
        %v539 = vsub.f32 1.0, %v506
        %v540 = vmul.f32 %v539, %v538
        %v541 = vmul.f32 %v506, %v395
        %v542 = vadd.f32 %v540, %v541
        %v543 = vstv %s398
        %vm544 = vcmp.lt.s32.totalorder %v543, %v375
        %v545 = vsel %vm544, 1, 0
        %546 = vset.pattern.permute.xlu0 0
        %547 = vperm.xlu0 %546, %v545
        %v548 = vpop.permute.xlu0 %547
        %vm549 = vcmp.eq.s32.totalorder %v548, 1
        %v550 = vsel %vm549, %v542, %v395
        %v551 = vsel %vm549, %v542, 0.0
        %s552 = smul.u32 %s393, 8
        %s553 = scalar_lea.vmem %s347, %s552 [#allocation8]
        %554 = vst.msk [vmem:[%s553] sm:$0xff] %vm412, %v551
        %s555 = sadd.s32 %s393, %s392
        %s556 = sadd.s32 %s396, 1
        %s557 = smul.u32 %s392, %s556
        %s558 = sadd.s32 %s394, %s557
        %v559 = vpack.c.bf16 %v550, %v550
        %v561 = vsel %vm412, %v559, 0
        %563 = vmatpush.bf16.msra.mxu0 0
        %564 = vmatpush.bf16.msra.mxu0 0
        %565 = vmatpush.bf16.msra.mxu0 0
        %566 = vmatpush.bf16.msra.mxu0 0
        %567 = vmatpush.bf16.msra.mxu0 0
        %568 = vmatpush.bf16.msra.mxu0 0
        %569 = vmatpush.bf16.msra.mxu0 %v409
        %570 = vmatpush.bf16.msra.mxu0 %v408
        %571 = vmatmul.bf16.gmra.mxu0 %v561
        %v572 = vpop.f32.mrf.mxu0
        %v573 = vadd.f32 0.0, %v572
        %v574 = vpop.f32.mrf.mxu0
        %575 = vdwg.mxu0
        %576 = vmatpush.bf16.msra.mxu0 0
        %577 = vmatpush.bf16.msra.mxu0 0
        %578 = vmatpush.bf16.msra.mxu0 0
        %579 = vmatpush.bf16.msra.mxu0 0
        %580 = vmatpush.bf16.msra.mxu0 0
        %581 = vmatpush.bf16.msra.mxu0 0
        %582 = vmatpush.bf16.msra.mxu0 %v438
        %583 = vmatpush.bf16.msra.mxu0 %v437
        %584 = vmatmul.bf16.gmra.mxu0 %v561
        %v585 = vpop.f32.mrf.mxu0
        %v586 = vadd.f32 0.0, %v585
        %v587 = vpop.f32.mrf.mxu0
        %588 = vdwg.mxu0
        %s589 = smul.addr %s555, 4
        %s590 = scalar_lea.vmem %s314, %s589 [#allocation3]
        %v591 = vld [vmem:[%s590] sm:$0xf]
        %s592 = sadd.s32 %s555, 4
        %s593 = smul.addr %s592, 4
        %s594 = scalar_lea.vmem %s314, %s593 [#allocation3]
        %v595 = vld [vmem:[%s594] sm:$0xf]
        %s596 = sadd.s32 %s555, 8
        %s597 = smul.addr %s596, 4
        %s598 = scalar_lea.vmem %s314, %s597 [#allocation3]
        %v599 = vld [vmem:[%s598] sm:$0xf]
        %v600 = vunpack.c.l.bf16 %v591
        %v601 = vadd.f32 %v600, %v573
        %v602 = vxor.u32 %v601, 2147483648
        %v603 = vmul.f32 %v602, 1.442695
        %v604 = vpow.pop %v603
        %v605 = vadd.f32 %v604, 1.0
        %v606 = vrcp.pop %v605
        %v607 = vmul.f32 %v605, %v606
        %v608 = vsub.f32 1.0, %v607
        %v609 = vmul.f32 %v606, %v608
        %v610 = vadd.f32 %v606, %v609
        %vm611 = vweird.f32 %v605
        %vm612 = vweird.f32 %v606
        %vm613 = vmor %vm611, %vm612
        %v614 = vsel %vm613, %v606, %v610
        %v615 = vand.u32 2147483647, %v605
        %vm616 = vcmp.eq.f32.partialorder %v615, 8.507059e+37
        %v617 = vand.u32 %v605, 2147483648
        %v618 = vor.u32 1.1754944e-38, %v617
        %v619 = vsel %vm616, %v618, %v614
        %v620 = vmul.f32 1.0, %v619
        %v621 = vunpack.c.l.bf16 %v595
        %v622 = vadd.f32 %v621, %v586
        %v623 = vxor.u32 %v622, 2147483648
        %v624 = vmul.f32 %v623, 1.442695
        %v625 = vpow.pop %v624
        %v626 = vadd.f32 %v625, 1.0
        %v627 = vrcp.pop %v626
        %v628 = vmul.f32 %v626, %v627
        %v629 = vsub.f32 1.0, %v628
        %v630 = vmul.f32 %v627, %v629
        %v631 = vadd.f32 %v627, %v630
        %vm632 = vweird.f32 %v626
        %vm633 = vweird.f32 %v627
        %vm634 = vmor %vm632, %vm633
        %v635 = vsel %vm634, %v627, %v631
        %v636 = vand.u32 2147483647, %v626
        %vm637 = vcmp.eq.f32.partialorder %v636, 8.507059e+37
        %v638 = vand.u32 %v626, 2147483648
        %v639 = vor.u32 1.1754944e-38, %v638
        %v640 = vsel %vm637, %v639, %v635
        %v641 = vmul.f32 1.0, %v640
        %642 = vmatpush.bf16.msra.mxu0 0
        %643 = vmatpush.bf16.msra.mxu0 0
        %644 = vmatpush.bf16.msra.mxu0 0
        %645 = vmatpush.bf16.msra.mxu0 0
        %646 = vmatpush.bf16.msra.mxu0 0
        %647 = vmatpush.bf16.msra.mxu0 0
        %648 = vmatpush.bf16.msra.mxu0 %v519
        %649 = vmatpush.bf16.msra.mxu0 %v518
        %650 = vmatmul.bf16.gmra.mxu0 %v561
        %v651 = vpop.f32.mrf.mxu0
        %v652 = vadd.f32 %v508, %v651
        %v653 = vpop.f32.mrf.mxu0
        %654 = vdwg.mxu0
        %v655 = vmul.f32 %v620, %v652
        %v656 = vunpack.c.l.bf16 %v599
        %v657 = vadd.f32 %v656, %v655
        %v658 = vtanh.pop %v657
        %v659 = vsub.f32 1.0, %v641
        %v660 = vmul.f32 %v659, %v658
        %v661 = vmul.f32 %v641, %v550
        %v662 = vadd.f32 %v660, %v661
        %v663 = vstv %s558
        %vm664 = vcmp.lt.s32.totalorder %v663, %v375
        %v665 = vsel %vm664, 1, 0
        %666 = vset.pattern.permute.xlu0 0
        %667 = vperm.xlu0 %666, %v665
        %v668 = vpop.permute.xlu0 %667
        %vm669 = vcmp.eq.s32.totalorder %v668, 1
        %v670 = vsel %vm669, %v662, %v550
        %v671 = vsel %vm669, %v662, 0.0
        %s672 = smul.u32 %s555, 8
        %s673 = scalar_lea.vmem %s347, %s672 [#allocation8]
        %674 = vst.msk [vmem:[%s673] sm:$0xff] %vm412, %v671
        %s675 = smul.u32 %s392, 2
        %s676 = sadd.s32 %s393, %s675
        %s677 = sadd.s32 %s396, 2
        %s678 = smul.u32 %s392, %s677
        %s679 = sadd.s32 %s394, %s678
        %v680 = vpack.c.bf16 %v670, %v670
        %v682 = vsel %vm412, %v680, 0
        %684 = vmatpush.bf16.msra.mxu0 0
        %685 = vmatpush.bf16.msra.mxu0 0
        %686 = vmatpush.bf16.msra.mxu0 0
        %687 = vmatpush.bf16.msra.mxu0 0
        %688 = vmatpush.bf16.msra.mxu0 0
        %689 = vmatpush.bf16.msra.mxu0 0
        %690 = vmatpush.bf16.msra.mxu0 %v409
        %691 = vmatpush.bf16.msra.mxu0 %v408
        %692 = vmatmul.bf16.gmra.mxu0 %v682
        %v693 = vpop.f32.mrf.mxu0
        %v694 = vadd.f32 0.0, %v693
        %v695 = vpop.f32.mrf.mxu0
        %696 = vdwg.mxu0
        %697 = vmatpush.bf16.msra.mxu0 0
        %698 = vmatpush.bf16.msra.mxu0 0
        %699 = vmatpush.bf16.msra.mxu0 0
        %700 = vmatpush.bf16.msra.mxu0 0
        %701 = vmatpush.bf16.msra.mxu0 0
        %702 = vmatpush.bf16.msra.mxu0 0
        %703 = vmatpush.bf16.msra.mxu0 %v438
        %704 = vmatpush.bf16.msra.mxu0 %v437
        %705 = vmatmul.bf16.gmra.mxu0 %v682
        %v706 = vpop.f32.mrf.mxu0
        %v707 = vadd.f32 0.0, %v706
        %v708 = vpop.f32.mrf.mxu0
        %709 = vdwg.mxu0
        %s710 = smul.addr %s676, 4
        %s711 = scalar_lea.vmem %s314, %s710 [#allocation3]
        %v712 = vld [vmem:[%s711] sm:$0xf]
        %s713 = sadd.s32 %s676, 4
        %s714 = smul.addr %s713, 4
        %s715 = scalar_lea.vmem %s314, %s714 [#allocation3]
        %v716 = vld [vmem:[%s715] sm:$0xf]
        %s717 = sadd.s32 %s676, 8
        %s718 = smul.addr %s717, 4
        %s719 = scalar_lea.vmem %s314, %s718 [#allocation3]
        %v720 = vld [vmem:[%s719] sm:$0xf]
        %v721 = vunpack.c.l.bf16 %v712
        %v722 = vadd.f32 %v721, %v694
        %v723 = vxor.u32 %v722, 2147483648
        %v724 = vmul.f32 %v723, 1.442695
        %v725 = vpow.pop %v724
        %v726 = vadd.f32 %v725, 1.0
        %v727 = vrcp.pop %v726
        %v728 = vmul.f32 %v726, %v727
        %v729 = vsub.f32 1.0, %v728
        %v730 = vmul.f32 %v727, %v729
        %v731 = vadd.f32 %v727, %v730
        %vm732 = vweird.f32 %v726
        %vm733 = vweird.f32 %v727
        %vm734 = vmor %vm732, %vm733
        %v735 = vsel %vm734, %v727, %v731
        %v736 = vand.u32 2147483647, %v726
        %vm737 = vcmp.eq.f32.partialorder %v736, 8.507059e+37
        %v738 = vand.u32 %v726, 2147483648
        %v739 = vor.u32 1.1754944e-38, %v738
        %v740 = vsel %vm737, %v739, %v735
        %v741 = vmul.f32 1.0, %v740
        %v742 = vunpack.c.l.bf16 %v716
        %v743 = vadd.f32 %v742, %v707
        %v744 = vxor.u32 %v743, 2147483648
        %v745 = vmul.f32 %v744, 1.442695
        %v746 = vpow.pop %v745
        %v747 = vadd.f32 %v746, 1.0
        %v748 = vrcp.pop %v747
        %v749 = vmul.f32 %v747, %v748
        %v750 = vsub.f32 1.0, %v749
        %v751 = vmul.f32 %v748, %v750
        %v752 = vadd.f32 %v748, %v751
        %vm753 = vweird.f32 %v747
        %vm754 = vweird.f32 %v748
        %vm755 = vmor %vm753, %vm754
        %v756 = vsel %vm755, %v748, %v752
        %v757 = vand.u32 2147483647, %v747
        %vm758 = vcmp.eq.f32.partialorder %v757, 8.507059e+37
        %v759 = vand.u32 %v747, 2147483648
        %v760 = vor.u32 1.1754944e-38, %v759
        %v761 = vsel %vm758, %v760, %v756
        %v762 = vmul.f32 1.0, %v761
        %763 = vmatpush.bf16.msra.mxu0 0
        %764 = vmatpush.bf16.msra.mxu0 0
        %765 = vmatpush.bf16.msra.mxu0 0
        %766 = vmatpush.bf16.msra.mxu0 0
        %767 = vmatpush.bf16.msra.mxu0 0
        %768 = vmatpush.bf16.msra.mxu0 0
        %769 = vmatpush.bf16.msra.mxu0 %v519
        %770 = vmatpush.bf16.msra.mxu0 %v518
        %771 = vmatmul.bf16.gmra.mxu0 %v682
        %v772 = vpop.f32.mrf.mxu0
        %v773 = vadd.f32 %v508, %v772
        %v774 = vpop.f32.mrf.mxu0
        %775 = vdwg.mxu0
        %v776 = vmul.f32 %v741, %v773
        %v777 = vunpack.c.l.bf16 %v720
        %v778 = vadd.f32 %v777, %v776
        %v779 = vtanh.pop %v778
        %v780 = vsub.f32 1.0, %v762
        %v781 = vmul.f32 %v780, %v779
        %v782 = vmul.f32 %v762, %v670
        %v783 = vadd.f32 %v781, %v782
        %v784 = vstv %s679
        %vm785 = vcmp.lt.s32.totalorder %v784, %v375
        %v786 = vsel %vm785, 1, 0
        %787 = vset.pattern.permute.xlu0 0
        %788 = vperm.xlu0 %787, %v786
        %v789 = vpop.permute.xlu0 %788
        %vm790 = vcmp.eq.s32.totalorder %v789, 1
        %v791 = vsel %vm790, %v783, %v670
        %v792 = vsel %vm790, %v783, 0.0
        %s793 = smul.u32 %s676, 8
        %s794 = scalar_lea.vmem %s347, %s793 [#allocation8]
        %795 = vst.msk [vmem:[%s794] sm:$0xff] %vm412, %v792
        %s796 = smul.u32 %s392, 3
        %s797 = sadd.s32 %s393, %s796
        %s798 = sadd.s32 %s396, 3
        %s799 = smul.u32 %s392, %s798
        %s800 = sadd.s32 %s394, %s799
        %v801 = vpack.c.bf16 %v791, %v791
        %v803 = vsel %vm412, %v801, 0
        %805 = vmatpush.bf16.msra.mxu0 0
        %806 = vmatpush.bf16.msra.mxu0 0
        %807 = vmatpush.bf16.msra.mxu0 0
        %808 = vmatpush.bf16.msra.mxu0 0
        %809 = vmatpush.bf16.msra.mxu0 0
        %810 = vmatpush.bf16.msra.mxu0 0
        %811 = vmatpush.bf16.msra.mxu0 %v409
        %812 = vmatpush.bf16.msra.mxu0 %v408
        %813 = vmatmul.bf16.gmra.mxu0 %v803
        %v814 = vpop.f32.mrf.mxu0
        %v815 = vadd.f32 0.0, %v814
        %v816 = vpop.f32.mrf.mxu0
        %817 = vdwg.mxu0
        %818 = vmatpush.bf16.msra.mxu0 0
        %819 = vmatpush.bf16.msra.mxu0 0
        %820 = vmatpush.bf16.msra.mxu0 0
        %821 = vmatpush.bf16.msra.mxu0 0
        %822 = vmatpush.bf16.msra.mxu0 0
        %823 = vmatpush.bf16.msra.mxu0 0
        %824 = vmatpush.bf16.msra.mxu0 %v438
        %825 = vmatpush.bf16.msra.mxu0 %v437
        %826 = vmatmul.bf16.gmra.mxu0 %v803
        %v827 = vpop.f32.mrf.mxu0
        %v828 = vadd.f32 0.0, %v827
        %v829 = vpop.f32.mrf.mxu0
        %830 = vdwg.mxu0
        %s831 = smul.addr %s797, 4
        %s832 = scalar_lea.vmem %s314, %s831 [#allocation3]
        %v833 = vld [vmem:[%s832] sm:$0xf]
        %s834 = sadd.s32 %s797, 4
        %s835 = smul.addr %s834, 4
        %s836 = scalar_lea.vmem %s314, %s835 [#allocation3]
        %v837 = vld [vmem:[%s836] sm:$0xf]
        %s838 = sadd.s32 %s797, 8
        %s839 = smul.addr %s838, 4
        %s840 = scalar_lea.vmem %s314, %s839 [#allocation3]
        %v841 = vld [vmem:[%s840] sm:$0xf]
        %v842 = vunpack.c.l.bf16 %v833
        %v843 = vadd.f32 %v842, %v815
        %v844 = vxor.u32 %v843, 2147483648
        %v845 = vmul.f32 %v844, 1.442695
        %v846 = vpow.pop %v845
        %v847 = vadd.f32 %v846, 1.0
        %v848 = vrcp.pop %v847
        %v849 = vmul.f32 %v847, %v848
        %v850 = vsub.f32 1.0, %v849
        %v851 = vmul.f32 %v848, %v850
        %v852 = vadd.f32 %v848, %v851
        %vm853 = vweird.f32 %v847
        %vm854 = vweird.f32 %v848
        %vm855 = vmor %vm853, %vm854
        %v856 = vsel %vm855, %v848, %v852
        %v857 = vand.u32 2147483647, %v847
        %vm858 = vcmp.eq.f32.partialorder %v857, 8.507059e+37
        %v859 = vand.u32 %v847, 2147483648
        %v860 = vor.u32 1.1754944e-38, %v859
        %v861 = vsel %vm858, %v860, %v856
        %v862 = vmul.f32 1.0, %v861
        %v863 = vunpack.c.l.bf16 %v837
        %v864 = vadd.f32 %v863, %v828
        %v865 = vxor.u32 %v864, 2147483648
        %v866 = vmul.f32 %v865, 1.442695
        %v867 = vpow.pop %v866
        %v868 = vadd.f32 %v867, 1.0
        %v869 = vrcp.pop %v868
        %v870 = vmul.f32 %v868, %v869
        %v871 = vsub.f32 1.0, %v870
        %v872 = vmul.f32 %v869, %v871
        %v873 = vadd.f32 %v869, %v872
        %vm874 = vweird.f32 %v868
        %vm875 = vweird.f32 %v869
        %vm876 = vmor %vm874, %vm875
        %v877 = vsel %vm876, %v869, %v873
        %v878 = vand.u32 2147483647, %v868
        %vm879 = vcmp.eq.f32.partialorder %v878, 8.507059e+37
        %v880 = vand.u32 %v868, 2147483648
        %v881 = vor.u32 1.1754944e-38, %v880
        %v882 = vsel %vm879, %v881, %v877
        %v883 = vmul.f32 1.0, %v882
        %884 = vmatpush.bf16.msra.mxu0 0
        %885 = vmatpush.bf16.msra.mxu0 0
        %886 = vmatpush.bf16.msra.mxu0 0
        %887 = vmatpush.bf16.msra.mxu0 0
        %888 = vmatpush.bf16.msra.mxu0 0
        %889 = vmatpush.bf16.msra.mxu0 0
        %890 = vmatpush.bf16.msra.mxu0 %v519
        %891 = vmatpush.bf16.msra.mxu0 %v518
        %892 = vmatmul.bf16.gmra.mxu0 %v803
        %v893 = vpop.f32.mrf.mxu0
        %v894 = vadd.f32 %v508, %v893
        %v895 = vpop.f32.mrf.mxu0
        %896 = vdwg.mxu0
        %v897 = vmul.f32 %v862, %v894
        %v898 = vunpack.c.l.bf16 %v841
        %v899 = vadd.f32 %v898, %v897
        %v900 = vtanh.pop %v899
        %v901 = vsub.f32 1.0, %v883
        %v902 = vmul.f32 %v901, %v900
        %v903 = vmul.f32 %v883, %v791
        %v904 = vadd.f32 %v902, %v903
        %v905 = vstv %s800
        %vm906 = vcmp.lt.s32.totalorder %v905, %v375
        %v907 = vsel %vm906, 1, 0
        %908 = vset.pattern.permute.xlu0 0
        %909 = vperm.xlu0 %908, %v907
        %v910 = vpop.permute.xlu0 %909
        %vm911 = vcmp.eq.s32.totalorder %v910, 1
        %v912 = vsel %vm911, %v904, %v791
        %v913 = vsel %vm911, %v904, 0.0
        %s914 = smul.u32 %s797, 8
        %s915 = scalar_lea.vmem %s347, %s914 [#allocation8]
        %916 = vst.msk [vmem:[%s915] sm:$0xff] %vm412, %v913
        %917 = vst.msk [vmem:[#allocation2] sm:$0xff] %vm412, %v912
        %p918 = scmp.eq.s32.totalorder %s32, 2
        // Predicated region
        $region49: #{tpu_custom_call.1} parent=35 // pred_check
          %p919 = pneg %p918
        $region50: #{tpu_custom_call.1} parent=35 // pred_check_branch
          %921 = sbr.rel (%p919) target = $region52
        $region51: #{tpu_custom_call.1} parent=35 // pred_region
          %v922 = vld [vmem:[#allocation2] sm:$0xff]
          %923 = vst.msk [vmem:[%s354] sm:$0xff] %vm412, %v922
        $region52: #{tpu_custom_call.1} parent=35 // pred_fallthru
          _
        %s924 = sand.u32 %s166, 1
        %s925 = scalar_lea.sflag [#allocation5], %s924
        %s926 = sand.u32 %s166, 1
        %s927 = smul.addr %s926, 32
        %s928 = scalar_lea.vmem [#allocation8], %s927
        %s929 = sand.u32 %s192, 1
        %s930 = scalar_lea.sflag [#allocation10], %s929
        %s931 = sand.u32 %s192, 1
        %s932 = smul.addr %s931, 8
        %s933 = scalar_lea.vmem [#allocation9], %s932
        // Predicated region
        $region53: #{tpu_custom_call.1} parent=35 // pred_check
          %p934 = pneg %p176
        $region54: #{tpu_custom_call.1} parent=35 // pred_check_branch
          %936 = sbr.rel (%p934) target = $region56
        $region55: #{tpu_custom_call.1} parent=35 // pred_region
          %s937 = smul.u32 %s31, 2
          %s938 = ssub.s32 1, %s937
          %s939 = smul.u32 %s938, %s32
          %s940 = sadd.s32 %s937, %s939
          %s941 = smul.u32 4, %s940
          %943 = vsyncadd %s925, 0
          %s944 = smul.addr %s31, 12
          %s945 = sadd.s32 %s941, %s944
          %s946 = smul.addr %s945, 8
          %s947 = scalar_lea.hbm %s4, %s946
          %s948 = sshll.u32 %s928, 4
          %s949 = int_to_ptr.vmem [resolvable:$true] %s948
          %s950 = sshll.u32 %s947, 4
          %s951 = int_to_ptr.hbm [resolvable:$true] %s950
          %956 = dma.vmem_to_hbm [thread:$0]  %s949, 512, %s951, %s925, 128, 128, 8
        $region56: #{tpu_custom_call.1} parent=35 // pred_fallthru
          _
        // Predicated region
        $region57: #{tpu_custom_call.1} parent=35 // pred_check
          %p957 = pneg %p202
        $region58: #{tpu_custom_call.1} parent=35 // pred_check_branch
          %959 = sbr.rel (%p957) target = $region60
        $region59: #{tpu_custom_call.1} parent=35 // pred_region
          %961 = vsyncadd %s930, 0
          %s962 = smul.addr %s31, 8
          %s963 = scalar_lea.hbm %s5, %s962
          %s965 = sshll.u32 %s933, 4
          %s966 = int_to_ptr.vmem [resolvable:$true] %s965
          %s967 = sshll.u32 %s963, 4
          %s968 = int_to_ptr.hbm [resolvable:$true] %s967
          %970 = dma.vmem_to_hbm [thread:$0]  %s966, 128, %s968, %s930
        $region60: #{tpu_custom_call.1} parent=35 // pred_fallthru
          _
      $region36: #{tpu_custom_call.1} parent=5 // pred_fallthru
        _
      %p971 = scmp.le.s32.totalorder 2, %s22
      // Predicated region
      $region61: #{tpu_custom_call.1} parent=5 // pred_check
        %p972 = pneg %p971
      $region62: #{tpu_custom_call.1} parent=5 // pred_check_branch
        %974 = sbr.rel (%p972) target = $region64
      $region63: #{tpu_custom_call.1} parent=5 // pred_region
        %s975 = ssub.s32 %s22, 2
        // Predicated region
        $region65: #{tpu_custom_call.1} parent=63 // pred_check
          %p976 = pneg %p182
        $region66: #{tpu_custom_call.1} parent=63 // pred_check_branch
          %978 = sbr.rel (%p976) target = $region68
        $region67: #{tpu_custom_call.1} parent=63 // pred_region
          %s979 = sand.u32 %s167, 1
          %s980 = scalar_lea.sflag [#allocation5], %s979
          %s981 = sand.u32 %s167, 1
          %s982 = smul.addr %s981, 32
          %s983 = scalar_lea.vmem [#allocation8], %s982
          %985 = dma.done %s980, 512
        $region68: #{tpu_custom_call.1} parent=63 // pred_fallthru
          _
        // Predicated region
        $region69: #{tpu_custom_call.1} parent=63 // pred_check
          %p986 = pneg %p208
        $region70: #{tpu_custom_call.1} parent=63 // pred_check_branch
          %988 = sbr.rel (%p986) target = $region72
        $region71: #{tpu_custom_call.1} parent=63 // pred_region
          %s989 = sand.u32 %s193, 1
          %s990 = scalar_lea.sflag [#allocation10], %s989
          %s991 = sand.u32 %s193, 1
          %s992 = smul.addr %s991, 8
          %s993 = scalar_lea.vmem [#allocation9], %s992
          %995 = dma.done %s990, 128
        $region72: #{tpu_custom_call.1} parent=63 // pred_fallthru
          _
      $region64: #{tpu_custom_call.1} parent=5 // pred_fallthru
        _
    $region6: #{tpu_custom_call.1} parent=1 // loop_footer
      %s26 = sadd.s32 1, %s22
    $region7: #{tpu_custom_call.1} parent=1 // loop_footer_branch
      %21 = sbr.rel target = $region3
    $region8: #{tpu_custom_call.1} parent=1 // loop_exit
      _
    %996 = vsyncpa [#allocation4], 1
    %s997 = scalar_lea.sflag [#allocation4], 1
    %998 = vsyncpa %s997, 1
    %999 = vsyncpa [#allocation7], 1
    %1000 = vsyncpa [#allocation5], 1
    %s1001 = scalar_lea.sflag [#allocation5], 1
    %1002 = vsyncpa %s1001, 1
    %1003 = vsyncpa [#allocation10], 1
    %s1004 = scalar_lea.sflag [#allocation10], 1
    %1005 = vsyncpa %s1004, 1

// kernel: tpu_custom_call.1
$region0: #{tpu_custom_call.1}
  #allocation0 [shape = 'u32[]', space=smem, size = 0x4, offset = 0x4, fixed_abs, tag = 'smem constant byte address 0x4 - core index']
  #allocation1 [shape = 'u32[72,128]{1,0:T(1,128)}', space=vmem, size = 0x9000, scoped, tag = 'internal scratch']
  #allocation2 [shape = 'f32[8,32]{1,0:T(8,128)}', space=vmem, size = 0x1000, scoped, tag = 'scratch operand']
  #allocation11 [shape = 's32[]', space=sflag, size = 0x4, offset = 0, fixed_abs, tag = 'sflag constant byte address 0x0 - dummy sync flag']
  %s0 = inlined_call_operand.vmem [shape: s32[8,1], index: 0, kind: input, shape index: {}]
  %s1 = inlined_call_operand.hbm [shape: bf16[2,3,12,8,32], index: 1, kind: input, shape index: {}]
  %s2 = inlined_call_operand.hbm [shape: bf16[2,3,32,32], index: 2, kind: input, shape index: {}]
  %s3 = inlined_call_operand.vmem [shape: f32[2,1,32], index: 3, kind: input, shape index: {}]
  %s4 = inlined_call_operand.hbm [shape: f32[2,12,8,32], index: 4, kind: output, shape index: {0}]
  %s5 = inlined_call_operand.hbm [shape: f32[2,8,32], index: 5, kind: output, shape index: {1}]
  %6 = xla_tuple %s4, %s5
  %s7 = sld [smem:[#allocation0]]
  $region73: #{tpu_custom_call.1} parent=0
    _
  %s9 = ssub.s32 1, %s7
  %s10 = scalar_select 0, %s9, %s7
  $region1: #{tpu_custom_call.1} parent=0
    #allocation3 [shape = 'u8[49152]{0}', space=vmem, size = 0xc000, scoped, tag = 'input window, operand 1']
    #allocation4 [shape = 's32[2]{0}', space=sflag, size = 0x8, scoped, tag = 'scoped memory for tpu_custom_call.1']
    #allocation5 [shape = 's32[2]{0}', space=sflag, size = 0x8, scoped, tag = 'scoped memory for tpu_custom_call.1']
    #allocation6 [shape = 'u8[49152]{0}', space=vmem, size = 0xc000, scoped, tag = 'input window, operand 2']
    #allocation7 [shape = 's32[2]{0}', space=sflag, size = 0x8, scoped, tag = 'scoped memory for tpu_custom_call.1']
    #allocation8 [shape = 'u8[32768]{0}', space=vmem, size = 0x8000, scoped, tag = 'output window, operand 0']
    #allocation9 [shape = 'u8[8192]{0}', space=vmem, size = 0x2000, scoped, tag = 'output window, operand 1']
    #allocation10 [shape = 's32[2]{0}', space=sflag, size = 0x8, scoped, tag = 'scoped memory for tpu_custom_call.1']
    %11 = vsyncpa [#allocation4], 0
    %s12 = scalar_lea.sflag [#allocation4], 1
    %13 = vsyncpa %s12, 0
    %14 = vsyncpa [#allocation7], 0
    %s15 = scalar_lea.sflag [#allocation7], 1
    %16 = vsyncpa %s15, 0
    %17 = vsyncpa [#allocation5], 0
    %s18 = scalar_lea.sflag [#allocation5], 1
    %19 = vsyncpa %s18, 0
    %20 = vsyncpa [#allocation10], 0
    %s21 = scalar_lea.sflag [#allocation10], 1
    %22 = vsyncpa %s21, 0
    loop: start=0, step=1, limit=8
    $region2: #{tpu_custom_call.1} parent=1 // loop_pre_header
      _
    $region3: #{tpu_custom_call.1} parent=1 // loop_header
      %s24 = sphi 0, %s28
      %p25 = scmp.ge.s32.totalorder %s24, 8
      %s31 = sphi 0, %s43
      %s32 = sphi 0, %s39
      %s33 = sphi 0, %s31
      %s34 = sphi 0, %s32
      %s35 = sphi 0, %s33
      %s36 = sphi 0, %s34
      %s44 = sphi 0, %s44
      %s46 = sphi 0, %s44
      %s47 = sphi 0, %s46
      %s61 = sphi 0, %s47
      %s77 = sphi 0, %s79
      %s80 = sphi 0, %s77
      %s81 = sphi 0, %s80
      %s97 = sphi 0, %s81
      %s103 = sphi 0, %s105
      %s106 = sphi 0, %s103
      %s107 = sphi 0, %s106
      %s123 = sphi 0, %s107
      %s129 = sphi 0, %s131
      %s132 = sphi 0, %s129
      %s133 = sphi 0, %s132
      %s149 = sphi 0, %s133
      %s165 = sphi 0, %s167
      %s168 = sphi 0, %s165
      %s169 = sphi 0, %s168
      %s185 = sphi 0, %s169
      %s191 = sphi 0, %s193
      %s194 = sphi 0, %s191
      %s195 = sphi 0, %s194
      %s211 = sphi 0, %s195
    $region4: #{tpu_custom_call.1} parent=1 // loop_header_branch
      %27 = sbr.rel (%p25) target = $region8
    $region5: #{tpu_custom_call.1} parent=1 // loop_body
      %s29 = ssub.s32 %s24, 1
      %s30 = ssub.s32 %s24, 2
      %s37 = sadd.s32 1, %s32
      %p38 = scmp.ge.s32.totalorder %s37, 3
      %s39 = scalar_select %p38, 0, %s37
      %s40 = sadd.s32 1, %s31
      %s41 = scalar_select %p38, %s40, %s31
      %p42 = scmp.ge.s32.totalorder %s41, 2
      %s43 = scalar_select %p42, 0, %s41
      %s45 = sadd.s32 %s44, 1
      %p48 = scmp.eq.s32.totalorder %s24, 5
      %p49 = scmp.ne.s32.totalorder %s44, %s46
      %p50 = scmp.eq.s32.totalorder %s24, 0
      %p51 = por %p49, %p50
      %p52 = scmp.ne.s32.totalorder %s44, %s46
      %p53 = scmp.eq.s32.totalorder %s29, 5
      %p54 = por %p52, %p53
      %p55 = scmp.ne.s32.totalorder %s46, %s47
      %p56 = scmp.eq.s32.totalorder %s29, 0
      %p57 = por %p55, %p56
      %p58 = scmp.ne.s32.totalorder %s46, %s47
      %p59 = scmp.eq.s32.totalorder %s30, 5
      %p60 = por %p58, %p59
      %p62 = scmp.ne.s32.totalorder %s47, %s61
      %p63 = scmp.eq.s32.totalorder %s30, 0
      %p64 = por %p62, %p63
      %s65 = smul.u32 %s31, 2
      %s66 = ssub.s32 1, %s65
      %s67 = smul.u32 %s66, %s32
      %s68 = sadd.s32 %s65, %s67
      %s69 = smul.u32 %s43, 2
      %s70 = ssub.s32 1, %s69
      %s71 = smul.u32 %s70, %s39
      %s72 = sadd.s32 %s69, %s71
      %s73 = ssub.s32 %s31, %s43
      %s74 = ssub.s32 %s68, %s72
      %s75 = sor.u32 %s73, %s74
      %p76 = scmp.eq.s32.totalorder %s75, 0
      %s78 = sadd.s32 %s77, 1
      %s79 = scalar_select %p76, %s77, %s78
      %p82 = pneg %p76
      %p83 = scmp.eq.s32.totalorder %s24, 5
      %p84 = por %p82, %p83
      %p85 = scmp.ne.s32.totalorder %s77, %s80
      %p86 = scmp.eq.s32.totalorder %s24, 0
      %p87 = por %p85, %p86
      %p88 = scmp.ne.s32.totalorder %s77, %s80
      %p89 = scmp.eq.s32.totalorder %s29, 5
      %p90 = por %p88, %p89
      %p91 = scmp.ne.s32.totalorder %s80, %s81
      %p92 = scmp.eq.s32.totalorder %s29, 0
      %p93 = por %p91, %p92
      %p94 = scmp.ne.s32.totalorder %s80, %s81
      %p95 = scmp.eq.s32.totalorder %s30, 5
      %p96 = por %p94, %p95
      %p98 = scmp.ne.s32.totalorder %s81, %s97
      %p99 = scmp.eq.s32.totalorder %s30, 0
      %p100 = por %p98, %p99
      %s101 = ssub.s32 %s31, %s43
      %p102 = scmp.eq.s32.totalorder %s101, 0
      %s104 = sadd.s32 %s103, 1
      %s105 = scalar_select %p102, %s103, %s104
      %p108 = pneg %p102
      %p109 = scmp.eq.s32.totalorder %s24, 5
      %p110 = por %p108, %p109
      %p111 = scmp.ne.s32.totalorder %s103, %s106
      %p112 = scmp.eq.s32.totalorder %s24, 0
      %p113 = por %p111, %p112
      %p114 = scmp.ne.s32.totalorder %s103, %s106
      %p115 = scmp.eq.s32.totalorder %s29, 5
      %p116 = por %p114, %p115
      %p117 = scmp.ne.s32.totalorder %s106, %s107
      %p118 = scmp.eq.s32.totalorder %s29, 0
      %p119 = por %p117, %p118
      %p120 = scmp.ne.s32.totalorder %s106, %s107
      %p121 = scmp.eq.s32.totalorder %s30, 5
      %p122 = por %p120, %p121
      %p124 = scmp.ne.s32.totalorder %s107, %s123
      %p125 = scmp.eq.s32.totalorder %s30, 0
      %p126 = por %p124, %p125
      %s127 = ssub.s32 %s31, %s43
      %p128 = scmp.eq.s32.totalorder %s127, 0
      %s130 = sadd.s32 %s129, 1
      %s131 = scalar_select %p128, %s129, %s130
      %p134 = pneg %p128
      %p135 = scmp.eq.s32.totalorder %s24, 5
      %p136 = por %p134, %p135
      %p137 = scmp.ne.s32.totalorder %s129, %s132
      %p138 = scmp.eq.s32.totalorder %s24, 0
      %p139 = por %p137, %p138
      %p140 = scmp.ne.s32.totalorder %s129, %s132
      %p141 = scmp.eq.s32.totalorder %s29, 5
      %p142 = por %p140, %p141
      %p143 = scmp.ne.s32.totalorder %s132, %s133
      %p144 = scmp.eq.s32.totalorder %s29, 0
      %p145 = por %p143, %p144
      %p146 = scmp.ne.s32.totalorder %s132, %s133
      %p147 = scmp.eq.s32.totalorder %s30, 5
      %p148 = por %p146, %p147
      %p150 = scmp.ne.s32.totalorder %s133, %s149
      %p151 = scmp.eq.s32.totalorder %s30, 0
      %p152 = por %p150, %p151
      %s153 = smul.u32 %s31, 2
      %s154 = ssub.s32 1, %s153
      %s155 = smul.u32 %s154, %s32
      %s156 = sadd.s32 %s153, %s155
      %s157 = smul.u32 %s43, 2
      %s158 = ssub.s32 1, %s157
      %s159 = smul.u32 %s158, %s39
      %s160 = sadd.s32 %s157, %s159
      %s161 = ssub.s32 %s31, %s43
      %s162 = ssub.s32 %s156, %s160
      %s163 = sor.u32 %s161, %s162
      %p164 = scmp.eq.s32.totalorder %s163, 0
      %s166 = sadd.s32 %s165, 1
      %s167 = scalar_select %p164, %s165, %s166
      %p170 = pneg %p164
      %p171 = scmp.eq.s32.totalorder %s24, 5
      %p172 = por %p170, %p171
      %p173 = scmp.ne.s32.totalorder %s165, %s168
      %p174 = scmp.eq.s32.totalorder %s24, 0
      %p175 = por %p173, %p174
      %p176 = scmp.ne.s32.totalorder %s165, %s168
      %p177 = scmp.eq.s32.totalorder %s29, 5
      %p178 = por %p176, %p177
      %p179 = scmp.ne.s32.totalorder %s168, %s169
      %p180 = scmp.eq.s32.totalorder %s29, 0
      %p181 = por %p179, %p180
      %p182 = scmp.ne.s32.totalorder %s168, %s169
      %p183 = scmp.eq.s32.totalorder %s30, 5
      %p184 = por %p182, %p183
      %p186 = scmp.ne.s32.totalorder %s169, %s185
      %p187 = scmp.eq.s32.totalorder %s30, 0
      %p188 = por %p186, %p187
      %s189 = ssub.s32 %s31, %s43
      %p190 = scmp.eq.s32.totalorder %s189, 0
      %s192 = sadd.s32 %s191, 1
      %s193 = scalar_select %p190, %s191, %s192
      %p196 = pneg %p190
      %p197 = scmp.eq.s32.totalorder %s24, 5
      %p198 = por %p196, %p197
      %p199 = scmp.ne.s32.totalorder %s191, %s194
      %p200 = scmp.eq.s32.totalorder %s24, 0
      %p201 = por %p199, %p200
      %p202 = scmp.ne.s32.totalorder %s191, %s194
      %p203 = scmp.eq.s32.totalorder %s29, 5
      %p204 = por %p202, %p203
      %p205 = scmp.ne.s32.totalorder %s194, %s195
      %p206 = scmp.eq.s32.totalorder %s29, 0
      %p207 = por %p205, %p206
      %p208 = scmp.ne.s32.totalorder %s194, %s195
      %p209 = scmp.eq.s32.totalorder %s30, 5
      %p210 = por %p208, %p209
      %p212 = scmp.ne.s32.totalorder %s195, %s211
      %p213 = scmp.eq.s32.totalorder %s30, 0
      %p214 = por %p212, %p213
      %p215 = scmp.le.s32.totalorder 1, %s24
      %p216 = scmp.lt.s32.totalorder %s24, 7
      %p217 = pnand %p215, %p216
      %p218 = pneg %p217
      // Predicated region
      $region9: #{tpu_custom_call.1} parent=5 // pred_check
        _
      $region10: #{tpu_custom_call.1} parent=5 // pred_check_branch
        %220 = sbr.rel (%p217) target = $region12
      $region11: #{tpu_custom_call.1} parent=5 // pred_region
        %s221 = ssub.s32 %s24, 1
        // Predicated region
        $region13: #{tpu_custom_call.1} parent=11 // pred_check
          %p222 = pneg %p57
        $region14: #{tpu_custom_call.1} parent=11 // pred_check_branch
          %224 = sbr.rel (%p222) target = $region16
        $region15: #{tpu_custom_call.1} parent=11 // pred_region
          _
        $region16: #{tpu_custom_call.1} parent=11 // pred_fallthru
          _
      $region12: #{tpu_custom_call.1} parent=5 // pred_fallthru
        _
      %p225 = scmp.lt.s32.totalorder %s24, 6
      // Predicated region
      $region17: #{tpu_custom_call.1} parent=5 // pred_check
        %p226 = pneg %p225
      $region18: #{tpu_custom_call.1} parent=5 // pred_check_branch
        %228 = sbr.rel (%p226) target = $region20
      $region19: #{tpu_custom_call.1} parent=5 // pred_region
        // Predicated region
        $region21: #{tpu_custom_call.1} parent=19 // pred_check
          %p229 = pneg %p87
        $region22: #{tpu_custom_call.1} parent=19 // pred_check_branch
          %231 = sbr.rel (%p229) target = $region24
        $region23: #{tpu_custom_call.1} parent=19 // pred_region
          #allocation12 [shape = 'u32[6]{0}', space=smem, size = 0x18, scoped, tag = 'DMA stride descriptor']
          %s232 = sand.u32 %s77, 1
          %s233 = scalar_lea.sflag [#allocation4], %s232
          %s234 = sand.u32 %s77, 1
          %s235 = smul.addr %s234, 48
          %s236 = scalar_lea.vmem [#allocation3], %s235
          %s237 = smul.u32 %s31, 2
          %s238 = ssub.s32 1, %s237
          %s239 = smul.u32 %s238, %s32
          %s240 = sadd.s32 %s237, %s239
          %s241 = smul.u32 4, %s240
          %243 = vsyncadd %s233, 0
          %s244 = smul.addr %s31, 36
          %s245 = sadd.s32 %s241, %s244
          %s246 = smul.addr %s245, 4
          %s247 = scalar_lea.hbm %s1, %s246
          %s249 = sshll.u32 1, 14
          %s250 = sxor.u32 4294967295, %s249
          %s252 = sld [smem:[#allocation0]]
          %s253 = sadd.s32 2, %s252
          %s255 = sshll.u32 7, 26
          %s256 = sxor.u32 4294967295, %s255
          %s257 = sand.u32 0, %s256
          %s258 = sshll.u32 %s253, 26
          %s259 = sor.u32 %s257, %s258
          %s260 = sshll.u32 %s247, 4
          %s261 = int_to_ptr.hbm [resolvable:$true] %s260
          %s262 = sshll.u32 %s236, 4
          %s263 = int_to_ptr.vmem [resolvable:$true] %s262
          %269 = sst [smem:[#allocation12]] 768
          %s270 = scalar_lea.smem [#allocation12], 1
          %271 = sst [smem:[%s270]] 256
          %s272 = scalar_lea.smem [#allocation12], 2
          %273 = sst [smem:[%s272]] 4
          %s274 = scalar_lea.smem [#allocation12], 3
          %275 = sst [smem:[%s274]] 64
          %s276 = scalar_lea.smem [#allocation12], 4
          %277 = sst [smem:[%s276]] 64
          %s278 = scalar_lea.smem [#allocation12], 5
          %279 = sst [smem:[%s278]] 4
          %281 = dma.general %s261, 768, %s263, %s233, [#allocation11], [#allocation12], %s259, 0
        $region24: #{tpu_custom_call.1} parent=19 // pred_fallthru
          _
        // Predicated region
        $region25: #{tpu_custom_call.1} parent=19 // pred_check
          %p282 = pneg %p113
        $region26: #{tpu_custom_call.1} parent=19 // pred_check_branch
          %284 = sbr.rel (%p282) target = $region28
        $region27: #{tpu_custom_call.1} parent=19 // pred_region
          %s285 = sand.u32 %s103, 1
          %s286 = scalar_lea.sflag [#allocation7], %s285
          %s287 = sand.u32 %s103, 1
          %s288 = smul.addr %s287, 48
          %s289 = scalar_lea.vmem [#allocation6], %s288
          %291 = vsyncadd %s286, 0
          %s292 = smul.addr %s31, 12
          %s293 = smul.addr %s292, 4
          %s294 = scalar_lea.hbm %s2, %s293
          %s295 = sshll.u32 %s294, 4
          %s296 = int_to_ptr.hbm [resolvable:$true] %s295
          %s297 = sshll.u32 %s289, 4
          %s298 = int_to_ptr.vmem [resolvable:$true] %s297
          %303 = dma.hbm_to_vmem [thread:$0]  %s296, 768, %s298, %s286, 64, 64, 4
        $region28: #{tpu_custom_call.1} parent=19 // pred_fallthru
          _
        // Predicated region
        $region29: #{tpu_custom_call.1} parent=19 // pred_check
          %p304 = pneg %p139
        $region30: #{tpu_custom_call.1} parent=19 // pred_check_branch
          %306 = sbr.rel (%p304) target = $region32
        $region31: #{tpu_custom_call.1} parent=19 // pred_region
          %p307 = scmp.lt.s32.totalorder %s31, 1
          %s308 = scalar_select %p307, %s31, 1
          %s309 = scalar_lea.vmem %s3, %s308
        $region32: #{tpu_custom_call.1} parent=19 // pred_fallthru
          _
      $region20: #{tpu_custom_call.1} parent=5 // pred_fallthru
        _
      %p310 = scmp.le.s32.totalorder 1, %s24
      %p311 = scmp.lt.s32.totalorder %s24, 7
      %p312 = pnand %p310, %p311
      %p313 = pneg %p312
      // Predicated region
      $region33: #{tpu_custom_call.1} parent=5 // pred_check
        _
      $region34: #{tpu_custom_call.1} parent=5 // pred_check_branch
        %315 = sbr.rel (%p312) target = $region36
      $region35: #{tpu_custom_call.1} parent=5 // pred_region
        %s316 = ssub.s32 %s24, 1
        %s317 = sand.u32 %s80, 1
        %s318 = scalar_lea.sflag [#allocation4], %s317
        %s319 = sand.u32 %s80, 1
        %s320 = smul.addr %s319, 48
        %s321 = scalar_lea.vmem [#allocation3], %s320
        // Predicated region
        $region37: #{tpu_custom_call.1} parent=35 // pred_check
          %p322 = pneg %p93
        $region38: #{tpu_custom_call.1} parent=35 // pred_check_branch
          %324 = sbr.rel (%p322) target = $region40
        $region39: #{tpu_custom_call.1} parent=35 // pred_region
          %326 = dma.done %s318, 768
        $region40: #{tpu_custom_call.1} parent=35 // pred_fallthru
          _
        %s327 = sand.u32 %s106, 1
        %s328 = scalar_lea.sflag [#allocation7], %s327
        %s329 = sand.u32 %s106, 1
        %s330 = smul.addr %s329, 48
        %s331 = scalar_lea.vmem [#allocation6], %s330
        // Predicated region
        $region41: #{tpu_custom_call.1} parent=35 // pred_check
          %p332 = pneg %p119
        $region42: #{tpu_custom_call.1} parent=35 // pred_check_branch
          %334 = sbr.rel (%p332) target = $region44
        $region43: #{tpu_custom_call.1} parent=35 // pred_region
          %336 = dma.done %s328, 768
        $region44: #{tpu_custom_call.1} parent=35 // pred_fallthru
          _
        %p337 = pneg %p57
        %p338 = pneg %p54
        %s339 = sand.u32 %s80, 1
        %s340 = scalar_lea.sflag [#allocation4], %s339
        %s341 = sand.u32 %s80, 1
        %s342 = smul.addr %s341, 48
        %s343 = scalar_lea.vmem [#allocation3], %s342
        %p344 = pneg %p93
        %p345 = pneg %p90
        %s346 = sand.u32 %s106, 1
        %s347 = scalar_lea.sflag [#allocation7], %s346
        %s348 = sand.u32 %s106, 1
        %s349 = smul.addr %s348, 48
        %s350 = scalar_lea.vmem [#allocation6], %s349
        %p351 = pneg %p119
        %p352 = pneg %p116
        %p353 = scmp.lt.s32.totalorder %s33, 1
        %s354 = scalar_select %p353, %s33, 1
        %s355 = scalar_lea.vmem %s3, %s354
        %p356 = pneg %p145
        %p357 = pneg %p142
        %p358 = pneg %p181
        %p359 = pneg %p178
        %s360 = sand.u32 %s168, 1
        %s361 = scalar_lea.sflag [#allocation5], %s360
        %s362 = sand.u32 %s168, 1
        %s363 = smul.addr %s362, 32
        %s364 = scalar_lea.vmem [#allocation8], %s363
        %p365 = pneg %p207
        %p366 = pneg %p204
        %s367 = sand.u32 %s194, 1
        %s368 = scalar_lea.sflag [#allocation10], %s367
        %s369 = sand.u32 %s194, 1
        %s370 = smul.addr %s369, 8
        %s371 = scalar_lea.vmem [#allocation9], %s370
        %s372 = smul.u32 %s33, 2
        %s373 = ssub.s32 1, %s372
        %s374 = smul.u32 %s373, %s34
        %s375 = sadd.s32 %s372, %s374
        %s376 = smul.u32 4, %s375
        %p377 = scmp.lt.s32.totalorder %s33, 1
        %s378 = scalar_select %p377, %s33, 1
        %s379 = scalar_lea.vmem %s3, %s378
        %s380 = smul.u32 %s33, 2
        %s381 = ssub.s32 1, %s380
        %s382 = smul.u32 %s381, %s34
        %s383 = sadd.s32 %s380, %s382
        %s384 = smul.u32 4, %s383
        %p386 = scmp.eq.s32.totalorder %s34, 0
        // Predicated region
        $region45: #{tpu_custom_call.1} parent=35 // pred_check
          %p387 = pneg %p386
        $region46: #{tpu_custom_call.1} parent=35 // pred_check_branch
          %389 = sbr.rel (%p387) target = $region48
        $region47: #{tpu_custom_call.1} parent=35 // pred_region
          %vm390 = vcmask 261120
          %391 = vst.msk [vmem:[#allocation2] sm:$0xff] %vm390, 0.0
        $region48: #{tpu_custom_call.1} parent=35 // pred_fallthru
          _
        %v392 = vld [vmem:[%s0] sm:$0xff]
        %v393 = vld [vmem:[%s379] sm:$0x1]
        %v394 = vld [vmem:[%s331] sm:$0xf]
        %v395 = vld [vmem:[%s331 + $0x4] sm:$0xf]
        %v396 = vld [vmem:[%s331 + $0x8] sm:$0xf]
        %v397 = vld [vmem:[%s331 + $0xc] sm:$0xf]
        %s398 = scalar_lea.vmem %s331, 16 [#allocation6]
        %v399 = vld [vmem:[%s398] sm:$0xf]
        %v400 = vld [vmem:[%s398 + $0x4] sm:$0xf]
        %v401 = vld [vmem:[%s398 + $0x8] sm:$0xf]
        %v402 = vld [vmem:[%s398 + $0xc] sm:$0xf]
        %s403 = scalar_lea.vmem %s331, 32 [#allocation6]
        %v404 = vld [vmem:[%s403] sm:$0xf]
        %v405 = vld [vmem:[%s403 + $0x4] sm:$0xf]
        %v406 = vld [vmem:[%s403 + $0x8] sm:$0xf]
        %v407 = vld [vmem:[%s403 + $0xc] sm:$0xf]
        %s408 = smul.u32 %s33, 2
        %s409 = ssub.s32 1, %s408
        %s410 = smul.u32 %s33, 3
        %s411 = smul.u32 %s33, 11
        %v412 = vld [vmem:[#allocation2] sm:$0xff]
        %s413 = smul.u32 %s34, 4
        %s414 = smul.u32 %s409, %s413
        %s415 = sadd.s32 %s411, %s414
        %v416 = vpack.c.bf16 %v412, %v412
        %v421 = vunpack.c.l.b16 %v394
        %v422 = vunpack.c.l.b16 %v395
        %v423 = vunpack.c.l.b16 %v396
        %v424 = vunpack.c.l.b16 %v397
        %v425 = vpack.c.b16 %v422, %v421
        %v426 = vpack.c.b16 %v424, %v423
        %vm429 = vcmask 261120
        %v431 = vsel %vm429, %v416, 0
        %433 = vmatpush.bf16.msra.mxu0 0
        %434 = vmatpush.bf16.msra.mxu0 0
        %435 = vmatpush.bf16.msra.mxu0 0
        %436 = vmatpush.bf16.msra.mxu0 0
        %437 = vmatpush.bf16.msra.mxu0 0
        %438 = vmatpush.bf16.msra.mxu0 0
        %439 = vmatpush.bf16.msra.mxu0 %v426
        %440 = vmatpush.bf16.msra.mxu0 %v425
        %441 = vmatmul.bf16.gmra.mxu0 %v431
        %v442 = vpop.f32.mrf.mxu0
        %v443 = vadd.f32 0.0, %v442
        %v444 = vpop.f32.mrf.mxu0
        %445 = vdwg.mxu0
        %v450 = vunpack.c.l.b16 %v399
        %v451 = vunpack.c.l.b16 %v400
        %v452 = vunpack.c.l.b16 %v401
        %v453 = vunpack.c.l.b16 %v402
        %v454 = vpack.c.b16 %v451, %v450
        %v455 = vpack.c.b16 %v453, %v452
        %458 = vmatpush.bf16.msra.mxu0 0
        %459 = vmatpush.bf16.msra.mxu0 0
        %460 = vmatpush.bf16.msra.mxu0 0
        %461 = vmatpush.bf16.msra.mxu0 0
        %462 = vmatpush.bf16.msra.mxu0 0
        %463 = vmatpush.bf16.msra.mxu0 0
        %464 = vmatpush.bf16.msra.mxu0 %v455
        %465 = vmatpush.bf16.msra.mxu0 %v454
        %466 = vmatmul.bf16.gmra.mxu0 %v431
        %v467 = vpop.f32.mrf.mxu0
        %v468 = vadd.f32 0.0, %v467
        %v469 = vpop.f32.mrf.mxu0
        %470 = vdwg.mxu0
        %s471 = smul.addr %s410, 4
        %s472 = scalar_lea.vmem %s321, %s471 [#allocation3]
        %v473 = vld [vmem:[%s472] sm:$0xf]
        %s474 = sadd.s32 %s410, 4
        %s475 = smul.addr %s474, 4
        %s476 = scalar_lea.vmem %s321, %s475 [#allocation3]
        %v477 = vld [vmem:[%s476] sm:$0xf]
        %s478 = sadd.s32 %s410, 8
        %s479 = smul.addr %s478, 4
        %s480 = scalar_lea.vmem %s321, %s479 [#allocation3]
        %v481 = vld [vmem:[%s480] sm:$0xf]
        %v482 = vunpack.c.l.bf16 %v473
        %v483 = vadd.f32 %v482, %v443
        %v484 = vxor.u32 %v483, 2147483648
        %v485 = vmul.f32 %v484, 1.442695
        %v486 = vpow.pop %v485
        %v487 = vadd.f32 %v486, 1.0
        %v488 = vrcp.pop %v487
        %v489 = vmul.f32 %v487, %v488
        %v490 = vsub.f32 1.0, %v489
        %v491 = vmul.f32 %v488, %v490
        %v492 = vadd.f32 %v488, %v491
        %vm493 = vweird.f32 %v487
        %vm494 = vweird.f32 %v488
        %vm495 = vmor %vm493, %vm494
        %v496 = vsel %vm495, %v488, %v492
        %v497 = vand.u32 2147483647, %v487
        %vm498 = vcmp.eq.f32.partialorder %v497, 8.507059e+37
        %v499 = vand.u32 %v487, 2147483648
        %v500 = vor.u32 1.1754944e-38, %v499
        %v501 = vsel %vm498, %v500, %v496
        %v502 = vmul.f32 1.0, %v501
        %v503 = vunpack.c.l.bf16 %v477
        %v504 = vadd.f32 %v503, %v468
        %v505 = vxor.u32 %v504, 2147483648
        %v506 = vmul.f32 %v505, 1.442695
        %v507 = vpow.pop %v506
        %v508 = vadd.f32 %v507, 1.0
        %v509 = vrcp.pop %v508
        %v510 = vmul.f32 %v508, %v509
        %v511 = vsub.f32 1.0, %v510
        %v512 = vmul.f32 %v509, %v511
        %v513 = vadd.f32 %v509, %v512
        %vm514 = vweird.f32 %v508
        %vm515 = vweird.f32 %v509
        %vm516 = vmor %vm514, %vm515
        %v517 = vsel %vm516, %v509, %v513
        %v518 = vand.u32 2147483647, %v508
        %vm519 = vcmp.eq.f32.partialorder %v518, 8.507059e+37
        %v520 = vand.u32 %v508, 2147483648
        %v521 = vor.u32 1.1754944e-38, %v520
        %v522 = vsel %vm519, %v521, %v517
        %v523 = vmul.f32 1.0, %v522
        %v525 = vperm.slane %v393, 0
        %v531 = vunpack.c.l.b16 %v404
        %v532 = vunpack.c.l.b16 %v405
        %v533 = vunpack.c.l.b16 %v406
        %v534 = vunpack.c.l.b16 %v407
        %v535 = vpack.c.b16 %v532, %v531
        %v536 = vpack.c.b16 %v534, %v533
        %539 = vmatpush.bf16.msra.mxu0 0
        %540 = vmatpush.bf16.msra.mxu0 0
        %541 = vmatpush.bf16.msra.mxu0 0
        %542 = vmatpush.bf16.msra.mxu0 0
        %543 = vmatpush.bf16.msra.mxu0 0
        %544 = vmatpush.bf16.msra.mxu0 0
        %545 = vmatpush.bf16.msra.mxu0 %v536
        %546 = vmatpush.bf16.msra.mxu0 %v535
        %547 = vmatmul.bf16.gmra.mxu0 %v431
        %v548 = vpop.f32.mrf.mxu0
        %v549 = vadd.f32 %v525, %v548
        %v550 = vpop.f32.mrf.mxu0
        %551 = vdwg.mxu0
        %v552 = vmul.f32 %v502, %v549
        %v553 = vunpack.c.l.bf16 %v481
        %v554 = vadd.f32 %v553, %v552
        %v555 = vtanh.pop %v554
        %v556 = vsub.f32 1.0, %v523
        %v557 = vmul.f32 %v556, %v555
        %v558 = vmul.f32 %v523, %v412
        %v559 = vadd.f32 %v557, %v558
        %v560 = vstv %s415
        %vm561 = vcmp.lt.s32.totalorder %v560, %v392
        %v562 = vsel %vm561, 1, 0
        %563 = vset.pattern.permute.xlu0 0
        %564 = vperm.xlu0 %563, %v562
        %v565 = vpop.permute.xlu0 %564
        %vm566 = vcmp.eq.s32.totalorder %v565, 1
        %v567 = vsel %vm566, %v559, %v412
        %v568 = vsel %vm566, %v559, 0.0
        %s569 = smul.u32 %s410, 8
        %s570 = scalar_lea.vmem %s364, %s569 [#allocation8]
        %571 = vst.msk [vmem:[%s570] sm:$0xff] %vm429, %v568
        %s572 = sadd.s32 %s410, %s409
        %s573 = sadd.s32 %s413, 1
        %s574 = smul.u32 %s409, %s573
        %s575 = sadd.s32 %s411, %s574
        %v576 = vpack.c.bf16 %v567, %v567
        %v578 = vsel %vm429, %v576, 0
        %580 = vmatpush.bf16.msra.mxu0 0
        %581 = vmatpush.bf16.msra.mxu0 0
        %582 = vmatpush.bf16.msra.mxu0 0
        %583 = vmatpush.bf16.msra.mxu0 0
        %584 = vmatpush.bf16.msra.mxu0 0
        %585 = vmatpush.bf16.msra.mxu0 0
        %586 = vmatpush.bf16.msra.mxu0 %v426
        %587 = vmatpush.bf16.msra.mxu0 %v425
        %588 = vmatmul.bf16.gmra.mxu0 %v578
        %v589 = vpop.f32.mrf.mxu0
        %v590 = vadd.f32 0.0, %v589
        %v591 = vpop.f32.mrf.mxu0
        %592 = vdwg.mxu0
        %593 = vmatpush.bf16.msra.mxu0 0
        %594 = vmatpush.bf16.msra.mxu0 0
        %595 = vmatpush.bf16.msra.mxu0 0
        %596 = vmatpush.bf16.msra.mxu0 0
        %597 = vmatpush.bf16.msra.mxu0 0
        %598 = vmatpush.bf16.msra.mxu0 0
        %599 = vmatpush.bf16.msra.mxu0 %v455
        %600 = vmatpush.bf16.msra.mxu0 %v454
        %601 = vmatmul.bf16.gmra.mxu0 %v578
        %v602 = vpop.f32.mrf.mxu0
        %v603 = vadd.f32 0.0, %v602
        %v604 = vpop.f32.mrf.mxu0
        %605 = vdwg.mxu0
        %s606 = smul.addr %s572, 4
        %s607 = scalar_lea.vmem %s321, %s606 [#allocation3]
        %v608 = vld [vmem:[%s607] sm:$0xf]
        %s609 = sadd.s32 %s572, 4
        %s610 = smul.addr %s609, 4
        %s611 = scalar_lea.vmem %s321, %s610 [#allocation3]
        %v612 = vld [vmem:[%s611] sm:$0xf]
        %s613 = sadd.s32 %s572, 8
        %s614 = smul.addr %s613, 4
        %s615 = scalar_lea.vmem %s321, %s614 [#allocation3]
        %v616 = vld [vmem:[%s615] sm:$0xf]
        %v617 = vunpack.c.l.bf16 %v608
        %v618 = vadd.f32 %v617, %v590
        %v619 = vxor.u32 %v618, 2147483648
        %v620 = vmul.f32 %v619, 1.442695
        %v621 = vpow.pop %v620
        %v622 = vadd.f32 %v621, 1.0
        %v623 = vrcp.pop %v622
        %v624 = vmul.f32 %v622, %v623
        %v625 = vsub.f32 1.0, %v624
        %v626 = vmul.f32 %v623, %v625
        %v627 = vadd.f32 %v623, %v626
        %vm628 = vweird.f32 %v622
        %vm629 = vweird.f32 %v623
        %vm630 = vmor %vm628, %vm629
        %v631 = vsel %vm630, %v623, %v627
        %v632 = vand.u32 2147483647, %v622
        %vm633 = vcmp.eq.f32.partialorder %v632, 8.507059e+37
        %v634 = vand.u32 %v622, 2147483648
        %v635 = vor.u32 1.1754944e-38, %v634
        %v636 = vsel %vm633, %v635, %v631
        %v637 = vmul.f32 1.0, %v636
        %v638 = vunpack.c.l.bf16 %v612
        %v639 = vadd.f32 %v638, %v603
        %v640 = vxor.u32 %v639, 2147483648
        %v641 = vmul.f32 %v640, 1.442695
        %v642 = vpow.pop %v641
        %v643 = vadd.f32 %v642, 1.0
        %v644 = vrcp.pop %v643
        %v645 = vmul.f32 %v643, %v644
        %v646 = vsub.f32 1.0, %v645
        %v647 = vmul.f32 %v644, %v646
        %v648 = vadd.f32 %v644, %v647
        %vm649 = vweird.f32 %v643
        %vm650 = vweird.f32 %v644
        %vm651 = vmor %vm649, %vm650
        %v652 = vsel %vm651, %v644, %v648
        %v653 = vand.u32 2147483647, %v643
        %vm654 = vcmp.eq.f32.partialorder %v653, 8.507059e+37
        %v655 = vand.u32 %v643, 2147483648
        %v656 = vor.u32 1.1754944e-38, %v655
        %v657 = vsel %vm654, %v656, %v652
        %v658 = vmul.f32 1.0, %v657
        %659 = vmatpush.bf16.msra.mxu0 0
        %660 = vmatpush.bf16.msra.mxu0 0
        %661 = vmatpush.bf16.msra.mxu0 0
        %662 = vmatpush.bf16.msra.mxu0 0
        %663 = vmatpush.bf16.msra.mxu0 0
        %664 = vmatpush.bf16.msra.mxu0 0
        %665 = vmatpush.bf16.msra.mxu0 %v536
        %666 = vmatpush.bf16.msra.mxu0 %v535
        %667 = vmatmul.bf16.gmra.mxu0 %v578
        %v668 = vpop.f32.mrf.mxu0
        %v669 = vadd.f32 %v525, %v668
        %v670 = vpop.f32.mrf.mxu0
        %671 = vdwg.mxu0
        %v672 = vmul.f32 %v637, %v669
        %v673 = vunpack.c.l.bf16 %v616
        %v674 = vadd.f32 %v673, %v672
        %v675 = vtanh.pop %v674
        %v676 = vsub.f32 1.0, %v658
        %v677 = vmul.f32 %v676, %v675
        %v678 = vmul.f32 %v658, %v567
        %v679 = vadd.f32 %v677, %v678
        %v680 = vstv %s575
        %vm681 = vcmp.lt.s32.totalorder %v680, %v392
        %v682 = vsel %vm681, 1, 0
        %683 = vset.pattern.permute.xlu0 0
        %684 = vperm.xlu0 %683, %v682
        %v685 = vpop.permute.xlu0 %684
        %vm686 = vcmp.eq.s32.totalorder %v685, 1
        %v687 = vsel %vm686, %v679, %v567
        %v688 = vsel %vm686, %v679, 0.0
        %s689 = smul.u32 %s572, 8
        %s690 = scalar_lea.vmem %s364, %s689 [#allocation8]
        %691 = vst.msk [vmem:[%s690] sm:$0xff] %vm429, %v688
        %s692 = smul.u32 %s409, 2
        %s693 = sadd.s32 %s410, %s692
        %s694 = sadd.s32 %s413, 2
        %s695 = smul.u32 %s409, %s694
        %s696 = sadd.s32 %s411, %s695
        %v697 = vpack.c.bf16 %v687, %v687
        %v699 = vsel %vm429, %v697, 0
        %701 = vmatpush.bf16.msra.mxu0 0
        %702 = vmatpush.bf16.msra.mxu0 0
        %703 = vmatpush.bf16.msra.mxu0 0
        %704 = vmatpush.bf16.msra.mxu0 0
        %705 = vmatpush.bf16.msra.mxu0 0
        %706 = vmatpush.bf16.msra.mxu0 0
        %707 = vmatpush.bf16.msra.mxu0 %v426
        %708 = vmatpush.bf16.msra.mxu0 %v425
        %709 = vmatmul.bf16.gmra.mxu0 %v699
        %v710 = vpop.f32.mrf.mxu0
        %v711 = vadd.f32 0.0, %v710
        %v712 = vpop.f32.mrf.mxu0
        %713 = vdwg.mxu0
        %714 = vmatpush.bf16.msra.mxu0 0
        %715 = vmatpush.bf16.msra.mxu0 0
        %716 = vmatpush.bf16.msra.mxu0 0
        %717 = vmatpush.bf16.msra.mxu0 0
        %718 = vmatpush.bf16.msra.mxu0 0
        %719 = vmatpush.bf16.msra.mxu0 0
        %720 = vmatpush.bf16.msra.mxu0 %v455
        %721 = vmatpush.bf16.msra.mxu0 %v454
        %722 = vmatmul.bf16.gmra.mxu0 %v699
        %v723 = vpop.f32.mrf.mxu0
        %v724 = vadd.f32 0.0, %v723
        %v725 = vpop.f32.mrf.mxu0
        %726 = vdwg.mxu0
        %s727 = smul.addr %s693, 4
        %s728 = scalar_lea.vmem %s321, %s727 [#allocation3]
        %v729 = vld [vmem:[%s728] sm:$0xf]
        %s730 = sadd.s32 %s693, 4
        %s731 = smul.addr %s730, 4
        %s732 = scalar_lea.vmem %s321, %s731 [#allocation3]
        %v733 = vld [vmem:[%s732] sm:$0xf]
        %s734 = sadd.s32 %s693, 8
        %s735 = smul.addr %s734, 4
        %s736 = scalar_lea.vmem %s321, %s735 [#allocation3]
        %v737 = vld [vmem:[%s736] sm:$0xf]
        %v738 = vunpack.c.l.bf16 %v729
        %v739 = vadd.f32 %v738, %v711
        %v740 = vxor.u32 %v739, 2147483648
        %v741 = vmul.f32 %v740, 1.442695
        %v742 = vpow.pop %v741
        %v743 = vadd.f32 %v742, 1.0
        %v744 = vrcp.pop %v743
        %v745 = vmul.f32 %v743, %v744
        %v746 = vsub.f32 1.0, %v745
        %v747 = vmul.f32 %v744, %v746
        %v748 = vadd.f32 %v744, %v747
        %vm749 = vweird.f32 %v743
        %vm750 = vweird.f32 %v744
        %vm751 = vmor %vm749, %vm750
        %v752 = vsel %vm751, %v744, %v748
        %v753 = vand.u32 2147483647, %v743
        %vm754 = vcmp.eq.f32.partialorder %v753, 8.507059e+37
        %v755 = vand.u32 %v743, 2147483648
        %v756 = vor.u32 1.1754944e-38, %v755
        %v757 = vsel %vm754, %v756, %v752
        %v758 = vmul.f32 1.0, %v757
        %v759 = vunpack.c.l.bf16 %v733
        %v760 = vadd.f32 %v759, %v724
        %v761 = vxor.u32 %v760, 2147483648
        %v762 = vmul.f32 %v761, 1.442695
        %v763 = vpow.pop %v762
        %v764 = vadd.f32 %v763, 1.0
        %v765 = vrcp.pop %v764
        %v766 = vmul.f32 %v764, %v765
        %v767 = vsub.f32 1.0, %v766
        %v768 = vmul.f32 %v765, %v767
        %v769 = vadd.f32 %v765, %v768
        %vm770 = vweird.f32 %v764
        %vm771 = vweird.f32 %v765
        %vm772 = vmor %vm770, %vm771
        %v773 = vsel %vm772, %v765, %v769
        %v774 = vand.u32 2147483647, %v764
        %vm775 = vcmp.eq.f32.partialorder %v774, 8.507059e+37
        %v776 = vand.u32 %v764, 2147483648
        %v777 = vor.u32 1.1754944e-38, %v776
        %v778 = vsel %vm775, %v777, %v773
        %v779 = vmul.f32 1.0, %v778
        %780 = vmatpush.bf16.msra.mxu0 0
        %781 = vmatpush.bf16.msra.mxu0 0
        %782 = vmatpush.bf16.msra.mxu0 0
        %783 = vmatpush.bf16.msra.mxu0 0
        %784 = vmatpush.bf16.msra.mxu0 0
        %785 = vmatpush.bf16.msra.mxu0 0
        %786 = vmatpush.bf16.msra.mxu0 %v536
        %787 = vmatpush.bf16.msra.mxu0 %v535
        %788 = vmatmul.bf16.gmra.mxu0 %v699
        %v789 = vpop.f32.mrf.mxu0
        %v790 = vadd.f32 %v525, %v789
        %v791 = vpop.f32.mrf.mxu0
        %792 = vdwg.mxu0
        %v793 = vmul.f32 %v758, %v790
        %v794 = vunpack.c.l.bf16 %v737
        %v795 = vadd.f32 %v794, %v793
        %v796 = vtanh.pop %v795
        %v797 = vsub.f32 1.0, %v779
        %v798 = vmul.f32 %v797, %v796
        %v799 = vmul.f32 %v779, %v687
        %v800 = vadd.f32 %v798, %v799
        %v801 = vstv %s696
        %vm802 = vcmp.lt.s32.totalorder %v801, %v392
        %v803 = vsel %vm802, 1, 0
        %804 = vset.pattern.permute.xlu0 0
        %805 = vperm.xlu0 %804, %v803
        %v806 = vpop.permute.xlu0 %805
        %vm807 = vcmp.eq.s32.totalorder %v806, 1
        %v808 = vsel %vm807, %v800, %v687
        %v809 = vsel %vm807, %v800, 0.0
        %s810 = smul.u32 %s693, 8
        %s811 = scalar_lea.vmem %s364, %s810 [#allocation8]
        %812 = vst.msk [vmem:[%s811] sm:$0xff] %vm429, %v809
        %s813 = smul.u32 %s409, 3
        %s814 = sadd.s32 %s410, %s813
        %s815 = sadd.s32 %s413, 3
        %s816 = smul.u32 %s409, %s815
        %s817 = sadd.s32 %s411, %s816
        %v818 = vpack.c.bf16 %v808, %v808
        %v820 = vsel %vm429, %v818, 0
        %822 = vmatpush.bf16.msra.mxu0 0
        %823 = vmatpush.bf16.msra.mxu0 0
        %824 = vmatpush.bf16.msra.mxu0 0
        %825 = vmatpush.bf16.msra.mxu0 0
        %826 = vmatpush.bf16.msra.mxu0 0
        %827 = vmatpush.bf16.msra.mxu0 0
        %828 = vmatpush.bf16.msra.mxu0 %v426
        %829 = vmatpush.bf16.msra.mxu0 %v425
        %830 = vmatmul.bf16.gmra.mxu0 %v820
        %v831 = vpop.f32.mrf.mxu0
        %v832 = vadd.f32 0.0, %v831
        %v833 = vpop.f32.mrf.mxu0
        %834 = vdwg.mxu0
        %835 = vmatpush.bf16.msra.mxu0 0
        %836 = vmatpush.bf16.msra.mxu0 0
        %837 = vmatpush.bf16.msra.mxu0 0
        %838 = vmatpush.bf16.msra.mxu0 0
        %839 = vmatpush.bf16.msra.mxu0 0
        %840 = vmatpush.bf16.msra.mxu0 0
        %841 = vmatpush.bf16.msra.mxu0 %v455
        %842 = vmatpush.bf16.msra.mxu0 %v454
        %843 = vmatmul.bf16.gmra.mxu0 %v820
        %v844 = vpop.f32.mrf.mxu0
        %v845 = vadd.f32 0.0, %v844
        %v846 = vpop.f32.mrf.mxu0
        %847 = vdwg.mxu0
        %s848 = smul.addr %s814, 4
        %s849 = scalar_lea.vmem %s321, %s848 [#allocation3]
        %v850 = vld [vmem:[%s849] sm:$0xf]
        %s851 = sadd.s32 %s814, 4
        %s852 = smul.addr %s851, 4
        %s853 = scalar_lea.vmem %s321, %s852 [#allocation3]
        %v854 = vld [vmem:[%s853] sm:$0xf]
        %s855 = sadd.s32 %s814, 8
        %s856 = smul.addr %s855, 4
        %s857 = scalar_lea.vmem %s321, %s856 [#allocation3]
        %v858 = vld [vmem:[%s857] sm:$0xf]
        %v859 = vunpack.c.l.bf16 %v850
        %v860 = vadd.f32 %v859, %v832
        %v861 = vxor.u32 %v860, 2147483648
        %v862 = vmul.f32 %v861, 1.442695
        %v863 = vpow.pop %v862
        %v864 = vadd.f32 %v863, 1.0
        %v865 = vrcp.pop %v864
        %v866 = vmul.f32 %v864, %v865
        %v867 = vsub.f32 1.0, %v866
        %v868 = vmul.f32 %v865, %v867
        %v869 = vadd.f32 %v865, %v868
        %vm870 = vweird.f32 %v864
        %vm871 = vweird.f32 %v865
        %vm872 = vmor %vm870, %vm871
        %v873 = vsel %vm872, %v865, %v869
        %v874 = vand.u32 2147483647, %v864
        %vm875 = vcmp.eq.f32.partialorder %v874, 8.507059e+37
        %v876 = vand.u32 %v864, 2147483648
        %v877 = vor.u32 1.1754944e-38, %v876
        %v878 = vsel %vm875, %v877, %v873
        %v879 = vmul.f32 1.0, %v878
        %v880 = vunpack.c.l.bf16 %v854
        %v881 = vadd.f32 %v880, %v845
        %v882 = vxor.u32 %v881, 2147483648
        %v883 = vmul.f32 %v882, 1.442695
        %v884 = vpow.pop %v883
        %v885 = vadd.f32 %v884, 1.0
        %v886 = vrcp.pop %v885
        %v887 = vmul.f32 %v885, %v886
        %v888 = vsub.f32 1.0, %v887
        %v889 = vmul.f32 %v886, %v888
        %v890 = vadd.f32 %v886, %v889
        %vm891 = vweird.f32 %v885
        %vm892 = vweird.f32 %v886
        %vm893 = vmor %vm891, %vm892
        %v894 = vsel %vm893, %v886, %v890
        %v895 = vand.u32 2147483647, %v885
        %vm896 = vcmp.eq.f32.partialorder %v895, 8.507059e+37
        %v897 = vand.u32 %v885, 2147483648
        %v898 = vor.u32 1.1754944e-38, %v897
        %v899 = vsel %vm896, %v898, %v894
        %v900 = vmul.f32 1.0, %v899
        %901 = vmatpush.bf16.msra.mxu0 0
        %902 = vmatpush.bf16.msra.mxu0 0
        %903 = vmatpush.bf16.msra.mxu0 0
        %904 = vmatpush.bf16.msra.mxu0 0
        %905 = vmatpush.bf16.msra.mxu0 0
        %906 = vmatpush.bf16.msra.mxu0 0
        %907 = vmatpush.bf16.msra.mxu0 %v536
        %908 = vmatpush.bf16.msra.mxu0 %v535
        %909 = vmatmul.bf16.gmra.mxu0 %v820
        %v910 = vpop.f32.mrf.mxu0
        %v911 = vadd.f32 %v525, %v910
        %v912 = vpop.f32.mrf.mxu0
        %913 = vdwg.mxu0
        %v914 = vmul.f32 %v879, %v911
        %v915 = vunpack.c.l.bf16 %v858
        %v916 = vadd.f32 %v915, %v914
        %v917 = vtanh.pop %v916
        %v918 = vsub.f32 1.0, %v900
        %v919 = vmul.f32 %v918, %v917
        %v920 = vmul.f32 %v900, %v808
        %v921 = vadd.f32 %v919, %v920
        %v922 = vstv %s817
        %vm923 = vcmp.lt.s32.totalorder %v922, %v392
        %v924 = vsel %vm923, 1, 0
        %925 = vset.pattern.permute.xlu0 0
        %926 = vperm.xlu0 %925, %v924
        %v927 = vpop.permute.xlu0 %926
        %vm928 = vcmp.eq.s32.totalorder %v927, 1
        %v929 = vsel %vm928, %v921, %v808
        %v930 = vsel %vm928, %v921, 0.0
        %s931 = smul.u32 %s814, 8
        %s932 = scalar_lea.vmem %s364, %s931 [#allocation8]
        %933 = vst.msk [vmem:[%s932] sm:$0xff] %vm429, %v930
        %934 = vst.msk [vmem:[#allocation2] sm:$0xff] %vm429, %v929
        %p935 = scmp.eq.s32.totalorder %s34, 2
        // Predicated region
        $region49: #{tpu_custom_call.1} parent=35 // pred_check
          %p936 = pneg %p935
        $region50: #{tpu_custom_call.1} parent=35 // pred_check_branch
          %938 = sbr.rel (%p936) target = $region52
        $region51: #{tpu_custom_call.1} parent=35 // pred_region
          %v939 = vld [vmem:[#allocation2] sm:$0xff]
          %940 = vst.msk [vmem:[%s371] sm:$0xff] %vm429, %v939
        $region52: #{tpu_custom_call.1} parent=35 // pred_fallthru
          _
        %s941 = sand.u32 %s168, 1
        %s942 = scalar_lea.sflag [#allocation5], %s941
        %s943 = sand.u32 %s168, 1
        %s944 = smul.addr %s943, 32
        %s945 = scalar_lea.vmem [#allocation8], %s944
        %s946 = sand.u32 %s194, 1
        %s947 = scalar_lea.sflag [#allocation10], %s946
        %s948 = sand.u32 %s194, 1
        %s949 = smul.addr %s948, 8
        %s950 = scalar_lea.vmem [#allocation9], %s949
        // Predicated region
        $region53: #{tpu_custom_call.1} parent=35 // pred_check
          %p951 = pneg %p178
        $region54: #{tpu_custom_call.1} parent=35 // pred_check_branch
          %953 = sbr.rel (%p951) target = $region56
        $region55: #{tpu_custom_call.1} parent=35 // pred_region
          %s954 = smul.u32 %s33, 2
          %s955 = ssub.s32 1, %s954
          %s956 = smul.u32 %s955, %s34
          %s957 = sadd.s32 %s954, %s956
          %s958 = smul.u32 4, %s957
          %960 = vsyncadd %s942, 0
          %s961 = smul.addr %s33, 12
          %s962 = sadd.s32 %s958, %s961
          %s963 = smul.addr %s962, 8
          %s964 = scalar_lea.hbm %s4, %s963
          %s965 = sshll.u32 %s945, 4
          %s966 = int_to_ptr.vmem [resolvable:$true] %s965
          %s967 = sshll.u32 %s964, 4
          %s968 = int_to_ptr.hbm [resolvable:$true] %s967
          %973 = dma.vmem_to_hbm [thread:$0]  %s966, 512, %s968, %s942, 128, 128, 8
        $region56: #{tpu_custom_call.1} parent=35 // pred_fallthru
          _
        // Predicated region
        $region57: #{tpu_custom_call.1} parent=35 // pred_check
          %p974 = pneg %p204
        $region58: #{tpu_custom_call.1} parent=35 // pred_check_branch
          %976 = sbr.rel (%p974) target = $region60
        $region59: #{tpu_custom_call.1} parent=35 // pred_region
          %978 = vsyncadd %s947, 0
          %s979 = smul.addr %s33, 8
          %s980 = scalar_lea.hbm %s5, %s979
          %s982 = sshll.u32 %s950, 4
          %s983 = int_to_ptr.vmem [resolvable:$true] %s982
          %s984 = sshll.u32 %s980, 4
          %s985 = int_to_ptr.hbm [resolvable:$true] %s984
          %987 = dma.vmem_to_hbm [thread:$0]  %s983, 128, %s985, %s947
        $region60: #{tpu_custom_call.1} parent=35 // pred_fallthru
          _
      $region36: #{tpu_custom_call.1} parent=5 // pred_fallthru
        _
      %p988 = scmp.le.s32.totalorder 2, %s24
      // Predicated region
      $region61: #{tpu_custom_call.1} parent=5 // pred_check
        %p989 = pneg %p988
      $region62: #{tpu_custom_call.1} parent=5 // pred_check_branch
        %991 = sbr.rel (%p989) target = $region64
      $region63: #{tpu_custom_call.1} parent=5 // pred_region
        %s992 = ssub.s32 %s24, 2
        // Predicated region
        $region65: #{tpu_custom_call.1} parent=63 // pred_check
          %p993 = pneg %p184
        $region66: #{tpu_custom_call.1} parent=63 // pred_check_branch
          %995 = sbr.rel (%p993) target = $region68
        $region67: #{tpu_custom_call.1} parent=63 // pred_region
          %s996 = sand.u32 %s169, 1
          %s997 = scalar_lea.sflag [#allocation5], %s996
          %s998 = sand.u32 %s169, 1
          %s999 = smul.addr %s998, 32
          %s1000 = scalar_lea.vmem [#allocation8], %s999
          %1002 = dma.done %s997, 512
        $region68: #{tpu_custom_call.1} parent=63 // pred_fallthru
          _
        // Predicated region
        $region69: #{tpu_custom_call.1} parent=63 // pred_check
          %p1003 = pneg %p210
        $region70: #{tpu_custom_call.1} parent=63 // pred_check_branch
          %1005 = sbr.rel (%p1003) target = $region72
        $region71: #{tpu_custom_call.1} parent=63 // pred_region
          %s1006 = sand.u32 %s195, 1
          %s1007 = scalar_lea.sflag [#allocation10], %s1006
          %s1008 = sand.u32 %s195, 1
          %s1009 = smul.addr %s1008, 8
          %s1010 = scalar_lea.vmem [#allocation9], %s1009
          %1012 = dma.done %s1007, 128
        $region72: #{tpu_custom_call.1} parent=63 // pred_fallthru
          _
      $region64: #{tpu_custom_call.1} parent=5 // pred_fallthru
        _
    $region6: #{tpu_custom_call.1} parent=1 // loop_footer
      %s28 = sadd.s32 1, %s24
    $region7: #{tpu_custom_call.1} parent=1 // loop_footer_branch
      %23 = sbr.rel target = $region3
    $region8: #{tpu_custom_call.1} parent=1 // loop_exit
      _
    %1013 = vsyncpa [#allocation4], 1
    %s1014 = scalar_lea.sflag [#allocation4], 1
    %1015 = vsyncpa %s1014, 1
    %1016 = vsyncpa [#allocation7], 1
    %s1017 = scalar_lea.sflag [#allocation7], 1
    %1018 = vsyncpa %s1017, 1
    %1019 = vsyncpa [#allocation5], 1
    %s1020 = scalar_lea.sflag [#allocation5], 1
    %1021 = vsyncpa %s1020, 1
    %1022 = vsyncpa [#allocation10], 1
    %s1023 = scalar_lea.sflag [#allocation10], 1
    %1024 = vsyncpa %s1023, 1

</llo_original>
